<compile_context>
chip_gen: v7x
topology: tpu7x:2x2x1
jax: 0.10.0
libtpu: 0.0.40
codegen_flags: <defaults>
</compile_context>

<pallas_src>
import math

import jax
import jax.numpy as jnp
from jax.experimental import pallas as pl

# ----------------------------- model config (small, synthetic) -----------------
VOCAB_SIZE = 100
TYPE_VOCAB = 2
MAX_POS = 32
HIDDEN = 32          # configs.feat_dim
NUM_HEADS = 4
HEAD_DIM = HIDDEN // NUM_HEADS
INTERMEDIATE = 64
NUM_LAYERS = 2
LN_EPS = 1e-12

BATCH = 2
SEQ = 8

VEC_W = 128          # lane-padded width of the per-layer vector slab

# vector-slab row indices (per layer)
R_BQKV, R_BAO, R_LN1G, R_LN1B, R_BI, R_BO, R_LN2G, R_LN2B = range(8)


# ----------------------------- in-kernel helpers (pure f32 math) ---------------
def _layernorm(x, g, b):
    mu = jnp.mean(x, axis=-1, keepdims=True)
    xc = x - mu
    var = jnp.mean(xc * xc, axis=-1, keepdims=True)
    return xc * jax.lax.rsqrt(var + LN_EPS) * g + b


def _gelu(y):
    # TODO(synk): HF "gelu" is erf-based; using the tanh approximation (gelu_new)
    # for guaranteed Mosaic/EUP lowering.
    return 0.5 * y * (1.0 + jnp.tanh(0.7978845608028654 * (y + 0.044715 * y * y * y)))


# ----------------------------- fused encoder kernel ----------------------------
def _encoder_kernel(emb_ref, mask_ref, gvec_ref, vecs_ref, w_in_ref, w_out_ref,
                    pw_ref, last_ref, pooled_ref):
    B, _, S = mask_ref.shape
    BS, H = emb_ref.shape
    nH, dh = NUM_HEADS, HEAD_DIM
    I = INTERMEDIATE
    L = w_in_ref.shape[0]
    scale = 1.0 / math.sqrt(dh)

    gvec = gvec_ref[...]                       # [3, H] f32
    emb_g, emb_b, pool_b = gvec[0:1, :], gvec[1:2, :], gvec[2:3, :]

    # Embedding LayerNorm (embedding sum is computed in plain-JAX glue).
    x = _layernorm(emb_ref[...], emb_g, emb_b)           # (BS, H) f32
    mask3 = mask_ref[...]                                 # (B, 1, S) additive key mask

    for l in range(L):                                    # static unroll over layers
        w1 = w_in_ref[l]                                  # (H, 3H | H | I) bf16
        w2 = w_out_ref[l]                                 # (I, H) bf16
        v = vecs_ref[l]                                   # (8, 128) f32 bias/LN slab

        # ---- fused QKV projection: single MXU pass over x -------------------
        x_b = x.astype(jnp.bfloat16)
        qkv = (jnp.dot(x_b, w1[:, 0:3 * H], preferred_element_type=jnp.float32)
               + v[R_BQKV:R_BQKV + 1, 0:3 * H])           # (BS, 3H) f32
        qkv_b = qkv.astype(jnp.bfloat16)

        # ---- attention: batched over B, short static loop over heads --------
        attn = jnp.zeros((BS, H), jnp.float32)
        for h in range(nH):
            c0 = h * dh
            q_h = qkv_b[:, c0:c0 + dh].reshape(B, S, dh)
            k_h = qkv_b[:, H + c0:H + c0 + dh].reshape(B, S, dh)
            v_h = qkv_b[:, 2 * H + c0:2 * H + c0 + dh].reshape(B, S, dh)

            s = (jnp.einsum('bqd,bkd->bqk', q_h, k_h,
                            preferred_element_type=jnp.float32) * scale + mask3)
            s = s - jnp.max(s, axis=-1, keepdims=True)
            p = jnp.exp(s)
            p = p * pl.reciprocal(jnp.sum(p, axis=-1, keepdims=True), approx=True)
            ctx_h = jnp.einsum('bqk,bkd->bqd', p.astype(jnp.bfloat16), v_h,
                               preferred_element_type=jnp.float32)    # (B, S, dh)

            # fused per-head slice of the output projection (no concat needed):
            #   ctx @ W_o  ==  sum_h ctx_h @ W_o[h*dh:(h+1)*dh, :]
            attn = attn + jnp.dot(ctx_h.reshape(BS, dh).astype(jnp.bfloat16),
                                  w1[c0:c0 + dh, 3 * H:4 * H],
                                  preferred_element_type=jnp.float32)

        # ---- attention bias + residual + LayerNorm (fused) -------------------
        attn = attn + v[R_BAO:R_BAO + 1, 0:H]
        x = _layernorm(attn + x, v[R_LN1G:R_LN1G + 1, 0:H], v[R_LN1B:R_LN1B + 1, 0:H])

        # ---- FFN: GELU intermediate, then out proj + residual + LN (fused) ---
        inter = _gelu(jnp.dot(x.astype(jnp.bfloat16), w1[:, 4 * H:4 * H + I],
                              preferred_element_type=jnp.float32)
                      + v[R_BI:R_BI + 1, 0:I])
        ffn = (jnp.dot(inter.astype(jnp.bfloat16), w2,
                       preferred_element_type=jnp.float32)
               + v[R_BO:R_BO + 1, 0:H])
        x = _layernorm(ffn + x, v[R_LN2G:R_LN2G + 1, 0:H], v[R_LN2B:R_LN2B + 1, 0:H])

    last_ref[...] = x.astype(last_ref.dtype)

    # ---- pooler: CLS rows only -> one tiny matmul + tanh, one dense store ----
    cls = jnp.concatenate([x[b * S:b * S + 1, :] for b in range(B)], axis=0)  # (B, H)
    pooled = jnp.tanh(jnp.dot(cls.astype(jnp.bfloat16), pw_ref[...],
                              preferred_element_type=jnp.float32) + pool_b)
    pooled_ref[...] = pooled.astype(pooled_ref.dtype)


# ----------------------------- parameter init ----------------------------------
def init_params(key):
    keys = iter(jax.random.split(key, 64))

    def w(shape):
        return jax.random.normal(next(keys), shape, jnp.float32) * 0.02

    L, H, I = NUM_LAYERS, HIDDEN, INTERMEDIATE
    params = {
        "word_emb": w((VOCAB_SIZE, H)),
        "pos_emb": w((MAX_POS, H)),
        "type_emb": w((TYPE_VOCAB, H)),
        "emb_ln_g": jnp.ones((1, H), jnp.float32),
        "emb_ln_b": jnp.zeros((1, H), jnp.float32),
        # stacked per-layer weights [L, ...]; Q/K/V fused along output dim.
        "wqkv": w((L, H, 3 * H)),
        "bqkv": jnp.zeros((L, 1, 3 * H), jnp.float32),
        "wao": w((L, H, H)),
        "bao": jnp.zeros((L, 1, H), jnp.float32),
        "ln1_g": jnp.ones((L, 1, H), jnp.float32),
        "ln1_b": jnp.zeros((L, 1, H), jnp.float32),
        "wi": w((L, H, I)),
        "bi": jnp.zeros((L, 1, I), jnp.float32),
        "wo": w((L, I, H)),
        "bo": jnp.zeros((L, 1, H), jnp.float32),
        "ln2_g": jnp.ones((L, 1, H), jnp.float32),
        "ln2_b": jnp.zeros((L, 1, H), jnp.float32),
        "pooler_w": w((H, H)),
        "pooler_b": jnp.zeros((1, H), jnp.float32),
        # Present in the PyTorch __init__ but unused in forward:
        "fc_w": w((H, 1)), "fc_b": jnp.zeros((1,), jnp.float32),
        "fc_query_w": w((H, 1)), "fc_query_b": jnp.zeros((1,), jnp.float32),
    }
    return params


def pack_params(p):
    """Pack natural params into the few slabs the kernel consumes (done once)."""
    L, H, I = NUM_LAYERS, HIDDEN, INTERMEDIATE

    # bf16 weight slabs (MXU operands only).
    w_in = jnp.concatenate([p["wqkv"], p["wao"], p["wi"]], axis=2).astype(jnp.bfloat16)
    w_out = p["wo"].astype(jnp.bfloat16)                       # [L, I, H]
    pw = p["pooler_w"].astype(jnp.bfloat16)                    # [H, H]

    # per-layer bias / LN vectors, lane-padded to 128, stacked on 8 sublanes.
    def row(vec, width):
        v = vec.reshape(L, width)
        return jnp.pad(v, ((0, 0), (0, VEC_W - width)))

    vecs = jnp.stack([row(p["bqkv"], 3 * H), row(p["bao"], H),
                      row(p["ln1_g"], H), row(p["ln1_b"], H),
                      row(p["bi"], I), row(p["bo"], H),
                      row(p["ln2_g"], H), row(p["ln2_b"], H)], axis=1)   # [L, 8, 128]

    gvec = jnp.concatenate([p["emb_ln_g"], p["emb_ln_b"], p["pooler_b"]], axis=0)  # [3, H]

    return {
        "word_emb": p["word_emb"], "pos_emb": p["pos_emb"], "type_emb": p["type_emb"],
        "w_in": w_in, "w_out": w_out, "pw": pw, "vecs": vecs, "gvec": gvec,
    }


# ----------------------------- BERT forward (wrapper) ---------------------------
@jax.jit
def bert_encoder_forward(packed, text, text_mask, text_seg,
                         bert_clause_b=None, bert_clause_sep_b=None,
                         bert_clause_len_b=None, doc_len=None):
    """Mirrors BertEncoder.forward: returns (last_hidden_state, pooled_output).
    Extra clause/doc args are accepted and unused, exactly as in PyTorch."""
    B, S = text.shape
    pos_ids = jnp.arange(S, dtype=jnp.int32)

    # Embedding gathers are plain-JAX glue; LayerNorm runs inside the kernel.
    emb = (packed["word_emb"][text]
           + packed["pos_emb"][pos_ids][None, :, :]
           + packed["type_emb"][text_seg]).reshape(B * S, HIDDEN)

    # Additive attention mask over keys: (1 - mask) * -10000, shaped [B, 1, S].
    mask_add = ((1.0 - text_mask.astype(jnp.float32)) * -10000.0)[:, None, :]

    last2d, pooled = pl.pallas_call(
        _encoder_kernel,
        out_shape=(jax.ShapeDtypeStruct((B * S, HIDDEN), jnp.float32),
                   jax.ShapeDtypeStruct((B, HIDDEN), jnp.float32)),
    )(emb, mask_add, packed["gvec"], packed["vecs"],
      packed["w_in"], packed["w_out"], packed["pw"])

    last_hidden_state = last2d.reshape(B, S, HIDDEN)
    return last_hidden_state, pooled


# ----------------------------- demo --------------------------------------------
if __name__ == "__main__":
    root = jax.random.PRNGKey(0)
    k_param, k_ids, k_seg = jax.random.split(root, 3)

    params = init_params(k_param)
    packed = pack_params(params)

    text = jax.random.randint(k_ids, (BATCH, SEQ), 0, VOCAB_SIZE, dtype=jnp.int32)
    # mask: second example has its last 3 tokens padded
    text_mask = jnp.ones((BATCH, SEQ), dtype=jnp.int32)
    text_mask = text_mask.at[1, SEQ - 3:].set(0)
    text_seg = jax.random.randint(k_seg, (BATCH, SEQ), 0, TYPE_VOCAB, dtype=jnp.int32)

    # Unused (as in the PyTorch forward) clause bookkeeping inputs:
    bert_clause_b = jnp.zeros((BATCH, 2), dtype=jnp.int32)
    bert_clause_sep_b = jnp.zeros((BATCH, 2), dtype=jnp.int32)
    bert_clause_len_b = jnp.ones((BATCH, 2), dtype=jnp.int32)
    doc_len = jnp.array([2, 2], dtype=jnp.int32)

    last_hidden, pooled = bert_encoder_forward(
        packed, text, text_mask, text_seg,
        bert_clause_b, bert_clause_sep_b, bert_clause_len_b, doc_len)

    jax.block_until_ready(last_hidden)
    jax.block_until_ready(pooled)
    assert last_hidden.shape == (BATCH, SEQ, HIDDEN)
    assert pooled.shape == (BATCH, HIDDEN)
    assert bool(jnp.all(jnp.isfinite(last_hidden))) and bool(jnp.all(jnp.isfinite(pooled)))
    print("KERNEL_OK")
</pallas_src>

<mosaic_0001>
module attributes {stable_mosaic.version = 11 : i64} {
  func.func @_encoder_kernel(%arg0: memref<16x32xf32, #tpu.memory_space<vmem>>, %arg1: memref<2x1x8xf32, #tpu.memory_space<vmem>>, %arg2: memref<3x32xf32, #tpu.memory_space<vmem>>, %arg3: memref<2x8x128xf32, #tpu.memory_space<vmem>>, %arg4: memref<2x32x192xbf16, #tpu.memory_space<vmem>>, %arg5: memref<2x64x32xbf16, #tpu.memory_space<vmem>>, %arg6: memref<32x32xbf16, #tpu.memory_space<vmem>>, %arg7: memref<16x32xf32, #tpu.memory_space<vmem>>, %arg8: memref<2x32xf32, #tpu.memory_space<vmem>>) attributes {dimension_semantics = [], scalar_prefetch = 0 : i64, scratch_operands = 0 : i64, tpu.core_type = #tpu.core_type<tc>} {
    %c0 = arith.constant 0 : index
    %c0_0 = arith.constant 0 : index
    %0 = vector.load %arg2[%c0, %c0_0] : memref<3x32xf32, #tpu.memory_space<vmem>>, vector<3x32xf32>
    %1 = vector.extract_strided_slice %0 {offsets = [0, 0], sizes = [1, 32], strides = [1, 1]} : vector<3x32xf32> to vector<1x32xf32>
    %2 = vector.extract_strided_slice %0 {offsets = [1, 0], sizes = [1, 32], strides = [1, 1]} : vector<3x32xf32> to vector<1x32xf32>
    %3 = vector.extract_strided_slice %0 {offsets = [2, 0], sizes = [1, 32], strides = [1, 1]} : vector<3x32xf32> to vector<1x32xf32>
    %c0_1 = arith.constant 0 : index
    %c0_2 = arith.constant 0 : index
    %4 = vector.load %arg0[%c0_1, %c0_2] : memref<16x32xf32, #tpu.memory_space<vmem>>, vector<16x32xf32>
    %cst = arith.constant dense<0.000000e+00> : vector<16xf32>
    %5 = vector.multi_reduction <add>, %4, %cst [1] : vector<16x32xf32> to vector<16xf32>
    %6 = vector.shape_cast %5 : vector<16xf32> to vector<16x1xf32>
    %cst_3 = arith.constant 3.200000e+01 : f32
    %7 = vector.broadcast %cst_3 : f32 to vector<16x1xf32>
    %8 = arith.divf %6, %7 : vector<16x1xf32>
    %9 = vector.broadcast %8 : vector<16x1xf32> to vector<16x32xf32>
    %10 = arith.subf %4, %9 : vector<16x32xf32>
    %11 = arith.mulf %10, %10 : vector<16x32xf32>
    %cst_4 = arith.constant dense<0.000000e+00> : vector<16xf32>
    %12 = vector.multi_reduction <add>, %11, %cst_4 [1] : vector<16x32xf32> to vector<16xf32>
    %13 = vector.shape_cast %12 : vector<16xf32> to vector<16x1xf32>
    %cst_5 = arith.constant 3.200000e+01 : f32
    %14 = vector.broadcast %cst_5 : f32 to vector<16x1xf32>
    %15 = arith.divf %13, %14 : vector<16x1xf32>
    %cst_6 = arith.constant 9.99999996E-13 : f32
    %16 = vector.broadcast %cst_6 : f32 to vector<16x1xf32>
    %17 = arith.addf %15, %16 : vector<16x1xf32>
    %18 = math.rsqrt %17 : vector<16x1xf32>
    %19 = vector.broadcast %18 : vector<16x1xf32> to vector<16x32xf32>
    %20 = arith.mulf %10, %19 : vector<16x32xf32>
    %21 = vector.broadcast %1 : vector<1x32xf32> to vector<16x32xf32>
    %22 = arith.mulf %20, %21 : vector<16x32xf32>
    %23 = vector.broadcast %2 : vector<1x32xf32> to vector<16x32xf32>
    %24 = arith.addf %22, %23 : vector<16x32xf32>
    %c0_7 = arith.constant 0 : index
    %c0_8 = arith.constant 0 : index
    %c0_9 = arith.constant 0 : index
    %25 = vector.load %arg1[%c0_7, %c0_8, %c0_9] : memref<2x1x8xf32, #tpu.memory_space<vmem>>, vector<2x1x8xf32>
    %c0_10 = arith.constant 0 : index
    %c0_11 = arith.constant 0 : index
    %c0_12 = arith.constant 0 : index
    %26 = vector.load %arg4[%c0_10, %c0_11, %c0_12] : memref<2x32x192xbf16, #tpu.memory_space<vmem>>, vector<1x32x192xbf16>
    %27 = vector.shape_cast %26 : vector<1x32x192xbf16> to vector<32x192xbf16>
    %c0_13 = arith.constant 0 : index
    %c0_14 = arith.constant 0 : index
    %c0_15 = arith.constant 0 : index
    %28 = vector.load %arg5[%c0_13, %c0_14, %c0_15] : memref<2x64x32xbf16, #tpu.memory_space<vmem>>, vector<1x64x32xbf16>
    %29 = vector.shape_cast %28 : vector<1x64x32xbf16> to vector<64x32xbf16>
    %c0_16 = arith.constant 0 : index
    %c0_17 = arith.constant 0 : index
    %c0_18 = arith.constant 0 : index
    %30 = vector.load %arg3[%c0_16, %c0_17, %c0_18] : memref<2x8x128xf32, #tpu.memory_space<vmem>>, vector<1x8x128xf32>
    %31 = vector.shape_cast %30 : vector<1x8x128xf32> to vector<8x128xf32>
    %32 = arith.truncf %24 : vector<16x32xf32> to vector<16x32xbf16>
    %33 = vector.extract_strided_slice %27 {offsets = [0, 0], sizes = [32, 96], strides = [1, 1]} : vector<32x192xbf16> to vector<32x96xbf16>
    %cst_19 = arith.constant dense<0.000000e+00> : vector<16x96xf32>
    %34 = tpu.matmul %32, %33, %cst_19 {dimension_numbers = #tpu.dot_dimension_numbers<[1], [0], [0], [1], [0, 0, 1, 1], [], []>} : vector<16x32xbf16>, vector<32x96xbf16>, vector<16x96xf32> -> vector<16x96xf32>
    %35 = vector.extract_strided_slice %31 {offsets = [0, 0], sizes = [1, 96], strides = [1, 1]} : vector<8x128xf32> to vector<1x96xf32>
    %36 = vector.broadcast %35 : vector<1x96xf32> to vector<16x96xf32>
    %37 = arith.addf %34, %36 : vector<16x96xf32>
    %38 = arith.truncf %37 : vector<16x96xf32> to vector<16x96xbf16>
    %cst_20 = arith.constant 0.000000e+00 : f32
    %39 = vector.broadcast %cst_20 : f32 to vector<16x32xf32>
    %40 = vector.extract_strided_slice %38 {offsets = [0, 0], sizes = [16, 8], strides = [1, 1]} : vector<16x96xbf16> to vector<16x8xbf16>
    %41 = vector.shape_cast %40 : vector<16x8xbf16> to vector<2x8x8xbf16>
    %42 = vector.extract_strided_slice %38 {offsets = [0, 32], sizes = [16, 8], strides = [1, 1]} : vector<16x96xbf16> to vector<16x8xbf16>
    %43 = vector.shape_cast %42 : vector<16x8xbf16> to vector<2x8x8xbf16>
    %44 = vector.extract_strided_slice %38 {offsets = [0, 64], sizes = [16, 8], strides = [1, 1]} : vector<16x96xbf16> to vector<16x8xbf16>
    %45 = vector.shape_cast %44 : vector<16x8xbf16> to vector<2x8x8xbf16>
    "tpu.trace_start"() <{level = 10 : i32, message = "bqd,bkd->bqk"}> : () -> ()
    %cst_21 = arith.constant dense<0.000000e+00> : vector<2x8x8xf32>
    %46 = tpu.matmul %41, %43, %cst_21 {dimension_numbers = #tpu.dot_dimension_numbers<[2], [2], [1], [1], [0, 0, 0, 1, 1, 1], [0], [0]>} : vector<2x8x8xbf16>, vector<2x8x8xbf16>, vector<2x8x8xf32> -> vector<2x8x8xf32>
    "tpu.trace_stop"() : () -> ()
    %cst_22 = arith.constant 0.353553385 : f32
    %47 = vector.broadcast %cst_22 : f32 to vector<2x8x8xf32>
    %48 = arith.mulf %46, %47 : vector<2x8x8xf32>
    %49 = vector.broadcast %25 : vector<2x1x8xf32> to vector<2x8x8xf32>
    %50 = arith.addf %48, %49 : vector<2x8x8xf32>
    %cst_23 = arith.constant dense<0xFF800000> : vector<2x8xf32>
    %51 = vector.multi_reduction <maximumf>, %50, %cst_23 [2] : vector<2x8x8xf32> to vector<2x8xf32>
    %52 = vector.shape_cast %51 : vector<2x8xf32> to vector<2x8x1xf32>
    %53 = vector.broadcast %52 : vector<2x8x1xf32> to vector<2x8x8xf32>
    %54 = arith.subf %50, %53 : vector<2x8x8xf32>
    %55 = math.exp %54 : vector<2x8x8xf32>
    %cst_24 = arith.constant dense<0.000000e+00> : vector<2x8xf32>
    %56 = vector.multi_reduction <add>, %55, %cst_24 [2] : vector<2x8x8xf32> to vector<2x8xf32>
    %57 = vector.shape_cast %56 : vector<2x8xf32> to vector<2x8x1xf32>
    %58 = tpu.reciprocal %57 {approx = true} : vector<2x8x1xf32> -> vector<2x8x1xf32>
    %59 = vector.broadcast %58 : vector<2x8x1xf32> to vector<2x8x8xf32>
    %60 = arith.mulf %55, %59 : vector<2x8x8xf32>
    %61 = arith.truncf %60 : vector<2x8x8xf32> to vector<2x8x8xbf16>
    "tpu.trace_start"() <{level = 10 : i32, message = "bqk,bkd->bqd"}> : () -> ()
    %cst_25 = arith.constant dense<0.000000e+00> : vector<2x8x8xf32>
    %62 = tpu.matmul %61, %45, %cst_25 {dimension_numbers = #tpu.dot_dimension_numbers<[2], [1], [1], [2], [0, 0, 0, 1, 1, 2], [0], [0]>} : vector<2x8x8xbf16>, vector<2x8x8xbf16>, vector<2x8x8xf32> -> vector<2x8x8xf32>
    "tpu.trace_stop"() : () -> ()
    %63 = vector.shape_cast %62 : vector<2x8x8xf32> to vector<16x8xf32>
    %64 = arith.truncf %63 : vector<16x8xf32> to vector<16x8xbf16>
    %65 = vector.extract_strided_slice %27 {offsets = [0, 96], sizes = [8, 32], strides = [1, 1]} : vector<32x192xbf16> to vector<8x32xbf16>
    %cst_26 = arith.constant dense<0.000000e+00> : vector<16x32xf32>
    %66 = tpu.matmul %64, %65, %cst_26 {dimension_numbers = #tpu.dot_dimension_numbers<[1], [0], [0], [1], [0, 0, 1, 1], [], []>} : vector<16x8xbf16>, vector<8x32xbf16>, vector<16x32xf32> -> vector<16x32xf32>
    %67 = arith.addf %39, %66 : vector<16x32xf32>
    %68 = vector.extract_strided_slice %38 {offsets = [0, 8], sizes = [16, 8], strides = [1, 1]} : vector<16x96xbf16> to vector<16x8xbf16>
    %69 = vector.shape_cast %68 : vector<16x8xbf16> to vector<2x8x8xbf16>
    %70 = vector.extract_strided_slice %38 {offsets = [0, 40], sizes = [16, 8], strides = [1, 1]} : vector<16x96xbf16> to vector<16x8xbf16>
    %71 = vector.shape_cast %70 : vector<16x8xbf16> to vector<2x8x8xbf16>
    %72 = vector.extract_strided_slice %38 {offsets = [0, 72], sizes = [16, 8], strides = [1, 1]} : vector<16x96xbf16> to vector<16x8xbf16>
    %73 = vector.shape_cast %72 : vector<16x8xbf16> to vector<2x8x8xbf16>
    "tpu.trace_start"() <{level = 10 : i32, message = "bqd,bkd->bqk"}> : () -> ()
    %cst_27 = arith.constant dense<0.000000e+00> : vector<2x8x8xf32>
    %74 = tpu.matmul %69, %71, %cst_27 {dimension_numbers = #tpu.dot_dimension_numbers<[2], [2], [1], [1], [0, 0, 0, 1, 1, 1], [0], [0]>} : vector<2x8x8xbf16>, vector<2x8x8xbf16>, vector<2x8x8xf32> -> vector<2x8x8xf32>
    "tpu.trace_stop"() : () -> ()
    %cst_28 = arith.constant 0.353553385 : f32
    %75 = vector.broadcast %cst_28 : f32 to vector<2x8x8xf32>
    %76 = arith.mulf %74, %75 : vector<2x8x8xf32>
    %77 = vector.broadcast %25 : vector<2x1x8xf32> to vector<2x8x8xf32>
    %78 = arith.addf %76, %77 : vector<2x8x8xf32>
    %cst_29 = arith.constant dense<0xFF800000> : vector<2x8xf32>
    %79 = vector.multi_reduction <maximumf>, %78, %cst_29 [2] : vector<2x8x8xf32> to vector<2x8xf32>
    %80 = vector.shape_cast %79 : vector<2x8xf32> to vector<2x8x1xf32>
    %81 = vector.broadcast %80 : vector<2x8x1xf32> to vector<2x8x8xf32>
    %82 = arith.subf %78, %81 : vector<2x8x8xf32>
    %83 = math.exp %82 : vector<2x8x8xf32>
    %cst_30 = arith.constant dense<0.000000e+00> : vector<2x8xf32>
    %84 = vector.multi_reduction <add>, %83, %cst_30 [2] : vector<2x8x8xf32> to vector<2x8xf32>
    %85 = vector.shape_cast %84 : vector<2x8xf32> to vector<2x8x1xf32>
    %86 = tpu.reciprocal %85 {approx = true} : vector<2x8x1xf32> -> vector<2x8x1xf32>
    %87 = vector.broadcast %86 : vector<2x8x1xf32> to vector<2x8x8xf32>
    %88 = arith.mulf %83, %87 : vector<2x8x8xf32>
    %89 = arith.truncf %88 : vector<2x8x8xf32> to vector<2x8x8xbf16>
    "tpu.trace_start"() <{level = 10 : i32, message = "bqk,bkd->bqd"}> : () -> ()
    %cst_31 = arith.constant dense<0.000000e+00> : vector<2x8x8xf32>
    %90 = tpu.matmul %89, %73, %cst_31 {dimension_numbers = #tpu.dot_dimension_numbers<[2], [1], [1], [2], [0, 0, 0, 1, 1, 2], [0], [0]>} : vector<2x8x8xbf16>, vector<2x8x8xbf16>, vector<2x8x8xf32> -> vector<2x8x8xf32>
    "tpu.trace_stop"() : () -> ()
    %91 = vector.shape_cast %90 : vector<2x8x8xf32> to vector<16x8xf32>
    %92 = arith.truncf %91 : vector<16x8xf32> to vector<16x8xbf16>
    %93 = vector.extract_strided_slice %27 {offsets = [8, 96], sizes = [8, 32], strides = [1, 1]} : vector<32x192xbf16> to vector<8x32xbf16>
    %cst_32 = arith.constant dense<0.000000e+00> : vector<16x32xf32>
    %94 = tpu.matmul %92, %93, %cst_32 {dimension_numbers = #tpu.dot_dimension_numbers<[1], [0], [0], [1], [0, 0, 1, 1], [], []>} : vector<16x8xbf16>, vector<8x32xbf16>, vector<16x32xf32> -> vector<16x32xf32>
    %95 = arith.addf %67, %94 : vector<16x32xf32>
    %96 = vector.extract_strided_slice %38 {offsets = [0, 16], sizes = [16, 8], strides = [1, 1]} : vector<16x96xbf16> to vector<16x8xbf16>
    %97 = vector.shape_cast %96 : vector<16x8xbf16> to vector<2x8x8xbf16>
    %98 = vector.extract_strided_slice %38 {offsets = [0, 48], sizes = [16, 8], strides = [1, 1]} : vector<16x96xbf16> to vector<16x8xbf16>
    %99 = vector.shape_cast %98 : vector<16x8xbf16> to vector<2x8x8xbf16>
    %100 = vector.extract_strided_slice %38 {offsets = [0, 80], sizes = [16, 8], strides = [1, 1]} : vector<16x96xbf16> to vector<16x8xbf16>
    %101 = vector.shape_cast %100 : vector<16x8xbf16> to vector<2x8x8xbf16>
    "tpu.trace_start"() <{level = 10 : i32, message = "bqd,bkd->bqk"}> : () -> ()
    %cst_33 = arith.constant dense<0.000000e+00> : vector<2x8x8xf32>
    %102 = tpu.matmul %97, %99, %cst_33 {dimension_numbers = #tpu.dot_dimension_numbers<[2], [2], [1], [1], [0, 0, 0, 1, 1, 1], [0], [0]>} : vector<2x8x8xbf16>, vector<2x8x8xbf16>, vector<2x8x8xf32> -> vector<2x8x8xf32>
    "tpu.trace_stop"() : () -> ()
    %cst_34 = arith.constant 0.353553385 : f32
    %103 = vector.broadcast %cst_34 : f32 to vector<2x8x8xf32>
    %104 = arith.mulf %102, %103 : vector<2x8x8xf32>
    %105 = vector.broadcast %25 : vector<2x1x8xf32> to vector<2x8x8xf32>
    %106 = arith.addf %104, %105 : vector<2x8x8xf32>
    %cst_35 = arith.constant dense<0xFF800000> : vector<2x8xf32>
    %107 = vector.multi_reduction <maximumf>, %106, %cst_35 [2] : vector<2x8x8xf32> to vector<2x8xf32>
    %108 = vector.shape_cast %107 : vector<2x8xf32> to vector<2x8x1xf32>
    %109 = vector.broadcast %108 : vector<2x8x1xf32> to vector<2x8x8xf32>
    %110 = arith.subf %106, %109 : vector<2x8x8xf32>
    %111 = math.exp %110 : vector<2x8x8xf32>
    %cst_36 = arith.constant dense<0.000000e+00> : vector<2x8xf32>
    %112 = vector.multi_reduction <add>, %111, %cst_36 [2] : vector<2x8x8xf32> to vector<2x8xf32>
    %113 = vector.shape_cast %112 : vector<2x8xf32> to vector<2x8x1xf32>
    %114 = tpu.reciprocal %113 {approx = true} : vector<2x8x1xf32> -> vector<2x8x1xf32>
    %115 = vector.broadcast %114 : vector<2x8x1xf32> to vector<2x8x8xf32>
    %116 = arith.mulf %111, %115 : vector<2x8x8xf32>
    %117 = arith.truncf %116 : vector<2x8x8xf32> to vector<2x8x8xbf16>
    "tpu.trace_start"() <{level = 10 : i32, message = "bqk,bkd->bqd"}> : () -> ()
    %cst_37 = arith.constant dense<0.000000e+00> : vector<2x8x8xf32>
    %118 = tpu.matmul %117, %101, %cst_37 {dimension_numbers = #tpu.dot_dimension_numbers<[2], [1], [1], [2], [0, 0, 0, 1, 1, 2], [0], [0]>} : vector<2x8x8xbf16>, vector<2x8x8xbf16>, vector<2x8x8xf32> -> vector<2x8x8xf32>
    "tpu.trace_stop"() : () -> ()
    %119 = vector.shape_cast %118 : vector<2x8x8xf32> to vector<16x8xf32>
    %120 = arith.truncf %119 : vector<16x8xf32> to vector<16x8xbf16>
    %121 = vector.extract_strided_slice %27 {offsets = [16, 96], sizes = [8, 32], strides = [1, 1]} : vector<32x192xbf16> to vector<8x32xbf16>
    %cst_38 = arith.constant dense<0.000000e+00> : vector<16x32xf32>
    %122 = tpu.matmul %120, %121, %cst_38 {dimension_numbers = #tpu.dot_dimension_numbers<[1], [0], [0], [1], [0, 0, 1, 1], [], []>} : vector<16x8xbf16>, vector<8x32xbf16>, vector<16x32xf32> -> vector<16x32xf32>
    %123 = arith.addf %95, %122 : vector<16x32xf32>
    %124 = vector.extract_strided_slice %38 {offsets = [0, 24], sizes = [16, 8], strides = [1, 1]} : vector<16x96xbf16> to vector<16x8xbf16>
    %125 = vector.shape_cast %124 : vector<16x8xbf16> to vector<2x8x8xbf16>
    %126 = vector.extract_strided_slice %38 {offsets = [0, 56], sizes = [16, 8], strides = [1, 1]} : vector<16x96xbf16> to vector<16x8xbf16>
    %127 = vector.shape_cast %126 : vector<16x8xbf16> to vector<2x8x8xbf16>
    %128 = vector.extract_strided_slice %38 {offsets = [0, 88], sizes = [16, 8], strides = [1, 1]} : vector<16x96xbf16> to vector<16x8xbf16>
    %129 = vector.shape_cast %128 : vector<16x8xbf16> to vector<2x8x8xbf16>
    "tpu.trace_start"() <{level = 10 : i32, message = "bqd,bkd->bqk"}> : () -> ()
    %cst_39 = arith.constant dense<0.000000e+00> : vector<2x8x8xf32>
    %130 = tpu.matmul %125, %127, %cst_39 {dimension_numbers = #tpu.dot_dimension_numbers<[2], [2], [1], [1], [0, 0, 0, 1, 1, 1], [0], [0]>} : vector<2x8x8xbf16>, vector<2x8x8xbf16>, vector<2x8x8xf32> -> vector<2x8x8xf32>
    "tpu.trace_stop"() : () -> ()
    %cst_40 = arith.constant 0.353553385 : f32
    %131 = vector.broadcast %cst_40 : f32 to vector<2x8x8xf32>
    %132 = arith.mulf %130, %131 : vector<2x8x8xf32>
    %133 = vector.broadcast %25 : vector<2x1x8xf32> to vector<2x8x8xf32>
    %134 = arith.addf %132, %133 : vector<2x8x8xf32>
    %cst_41 = arith.constant dense<0xFF800000> : vector<2x8xf32>
    %135 = vector.multi_reduction <maximumf>, %134, %cst_41 [2] : vector<2x8x8xf32> to vector<2x8xf32>
    %136 = vector.shape_cast %135 : vector<2x8xf32> to vector<2x8x1xf32>
    %137 = vector.broadcast %136 : vector<2x8x1xf32> to vector<2x8x8xf32>
    %138 = arith.subf %134, %137 : vector<2x8x8xf32>
    %139 = math.exp %138 : vector<2x8x8xf32>
    %cst_42 = arith.constant dense<0.000000e+00> : vector<2x8xf32>
    %140 = vector.multi_reduction <add>, %139, %cst_42 [2] : vector<2x8x8xf32> to vector<2x8xf32>
    %141 = vector.shape_cast %140 : vector<2x8xf32> to vector<2x8x1xf32>
    %142 = tpu.reciprocal %141 {approx = true} : vector<2x8x1xf32> -> vector<2x8x1xf32>
    %143 = vector.broadcast %142 : vector<2x8x1xf32> to vector<2x8x8xf32>
    %144 = arith.mulf %139, %143 : vector<2x8x8xf32>
    %145 = arith.truncf %144 : vector<2x8x8xf32> to vector<2x8x8xbf16>
    "tpu.trace_start"() <{level = 10 : i32, message = "bqk,bkd->bqd"}> : () -> ()
    %cst_43 = arith.constant dense<0.000000e+00> : vector<2x8x8xf32>
    %146 = tpu.matmul %145, %129, %cst_43 {dimension_numbers = #tpu.dot_dimension_numbers<[2], [1], [1], [2], [0, 0, 0, 1, 1, 2], [0], [0]>} : vector<2x8x8xbf16>, vector<2x8x8xbf16>, vector<2x8x8xf32> -> vector<2x8x8xf32>
    "tpu.trace_stop"() : () -> ()
    %147 = vector.shape_cast %146 : vector<2x8x8xf32> to vector<16x8xf32>
    %148 = arith.truncf %147 : vector<16x8xf32> to vector<16x8xbf16>
    %149 = vector.extract_strided_slice %27 {offsets = [24, 96], sizes = [8, 32], strides = [1, 1]} : vector<32x192xbf16> to vector<8x32xbf16>
    %cst_44 = arith.constant dense<0.000000e+00> : vector<16x32xf32>
    %150 = tpu.matmul %148, %149, %cst_44 {dimension_numbers = #tpu.dot_dimension_numbers<[1], [0], [0], [1], [0, 0, 1, 1], [], []>} : vector<16x8xbf16>, vector<8x32xbf16>, vector<16x32xf32> -> vector<16x32xf32>
    %151 = arith.addf %123, %150 : vector<16x32xf32>
    %152 = vector.extract_strided_slice %31 {offsets = [1, 0], sizes = [1, 32], strides = [1, 1]} : vector<8x128xf32> to vector<1x32xf32>
    %153 = vector.broadcast %152 : vector<1x32xf32> to vector<16x32xf32>
    %154 = arith.addf %151, %153 : vector<16x32xf32>
    %155 = arith.addf %154, %24 : vector<16x32xf32>
    %156 = vector.extract_strided_slice %31 {offsets = [2, 0], sizes = [1, 32], strides = [1, 1]} : vector<8x128xf32> to vector<1x32xf32>
    %157 = vector.extract_strided_slice %31 {offsets = [3, 0], sizes = [1, 32], strides = [1, 1]} : vector<8x128xf32> to vector<1x32xf32>
    %cst_45 = arith.constant dense<0.000000e+00> : vector<16xf32>
    %158 = vector.multi_reduction <add>, %155, %cst_45 [1] : vector<16x32xf32> to vector<16xf32>
    %159 = vector.shape_cast %158 : vector<16xf32> to vector<16x1xf32>
    %cst_46 = arith.constant 3.200000e+01 : f32
    %160 = vector.broadcast %cst_46 : f32 to vector<16x1xf32>
    %161 = arith.divf %159, %160 : vector<16x1xf32>
    %162 = vector.broadcast %161 : vector<16x1xf32> to vector<16x32xf32>
    %163 = arith.subf %155, %162 : vector<16x32xf32>
    %164 = arith.mulf %163, %163 : vector<16x32xf32>
    %cst_47 = arith.constant dense<0.000000e+00> : vector<16xf32>
    %165 = vector.multi_reduction <add>, %164, %cst_47 [1] : vector<16x32xf32> to vector<16xf32>
    %166 = vector.shape_cast %165 : vector<16xf32> to vector<16x1xf32>
    %cst_48 = arith.constant 3.200000e+01 : f32
    %167 = vector.broadcast %cst_48 : f32 to vector<16x1xf32>
    %168 = arith.divf %166, %167 : vector<16x1xf32>
    %cst_49 = arith.constant 9.99999996E-13 : f32
    %169 = vector.broadcast %cst_49 : f32 to vector<16x1xf32>
    %170 = arith.addf %168, %169 : vector<16x1xf32>
    %171 = math.rsqrt %170 : vector<16x1xf32>
    %172 = vector.broadcast %171 : vector<16x1xf32> to vector<16x32xf32>
    %173 = arith.mulf %163, %172 : vector<16x32xf32>
    %174 = vector.broadcast %156 : vector<1x32xf32> to vector<16x32xf32>
    %175 = arith.mulf %173, %174 : vector<16x32xf32>
    %176 = vector.broadcast %157 : vector<1x32xf32> to vector<16x32xf32>
    %177 = arith.addf %175, %176 : vector<16x32xf32>
    %178 = arith.truncf %177 : vector<16x32xf32> to vector<16x32xbf16>
    %179 = vector.extract_strided_slice %27 {offsets = [0, 128], sizes = [32, 64], strides = [1, 1]} : vector<32x192xbf16> to vector<32x64xbf16>
    %cst_50 = arith.constant dense<0.000000e+00> : vector<16x64xf32>
    %180 = tpu.matmul %178, %179, %cst_50 {dimension_numbers = #tpu.dot_dimension_numbers<[1], [0], [0], [1], [0, 0, 1, 1], [], []>} : vector<16x32xbf16>, vector<32x64xbf16>, vector<16x64xf32> -> vector<16x64xf32>
    %181 = vector.extract_strided_slice %31 {offsets = [4, 0], sizes = [1, 64], strides = [1, 1]} : vector<8x128xf32> to vector<1x64xf32>
    %182 = vector.broadcast %181 : vector<1x64xf32> to vector<16x64xf32>
    %183 = arith.addf %180, %182 : vector<16x64xf32>
    %cst_51 = arith.constant 5.000000e-01 : f32
    %184 = vector.broadcast %cst_51 : f32 to vector<16x64xf32>
    %185 = arith.mulf %184, %183 : vector<16x64xf32>
    %cst_52 = arith.constant 4.471500e-02 : f32
    %186 = vector.broadcast %cst_52 : f32 to vector<16x64xf32>
    %187 = arith.mulf %186, %183 : vector<16x64xf32>
    %188 = arith.mulf %187, %183 : vector<16x64xf32>
    %189 = arith.mulf %188, %183 : vector<16x64xf32>
    %190 = arith.addf %183, %189 : vector<16x64xf32>
    %cst_53 = arith.constant 0.797884583 : f32
    %191 = vector.broadcast %cst_53 : f32 to vector<16x64xf32>
    %192 = arith.mulf %191, %190 : vector<16x64xf32>
    %193 = math.tanh %192 : vector<16x64xf32>
    %cst_54 = arith.constant 1.000000e+00 : f32
    %194 = vector.broadcast %cst_54 : f32 to vector<16x64xf32>
    %195 = arith.addf %194, %193 : vector<16x64xf32>
    %196 = arith.mulf %185, %195 : vector<16x64xf32>
    %197 = arith.truncf %196 : vector<16x64xf32> to vector<16x64xbf16>
    %cst_55 = arith.constant dense<0.000000e+00> : vector<16x32xf32>
    %198 = tpu.matmul %197, %29, %cst_55 {dimension_numbers = #tpu.dot_dimension_numbers<[1], [0], [0], [1], [0, 0, 1, 1], [], []>} : vector<16x64xbf16>, vector<64x32xbf16>, vector<16x32xf32> -> vector<16x32xf32>
    %199 = vector.extract_strided_slice %31 {offsets = [5, 0], sizes = [1, 32], strides = [1, 1]} : vector<8x128xf32> to vector<1x32xf32>
    %200 = vector.broadcast %199 : vector<1x32xf32> to vector<16x32xf32>
    %201 = arith.addf %198, %200 : vector<16x32xf32>
    %202 = arith.addf %201, %177 : vector<16x32xf32>
    %203 = vector.extract_strided_slice %31 {offsets = [6, 0], sizes = [1, 32], strides = [1, 1]} : vector<8x128xf32> to vector<1x32xf32>
    %204 = vector.extract_strided_slice %31 {offsets = [7, 0], sizes = [1, 32], strides = [1, 1]} : vector<8x128xf32> to vector<1x32xf32>
    %cst_56 = arith.constant dense<0.000000e+00> : vector<16xf32>
    %205 = vector.multi_reduction <add>, %202, %cst_56 [1] : vector<16x32xf32> to vector<16xf32>
    %206 = vector.shape_cast %205 : vector<16xf32> to vector<16x1xf32>
    %cst_57 = arith.constant 3.200000e+01 : f32
    %207 = vector.broadcast %cst_57 : f32 to vector<16x1xf32>
    %208 = arith.divf %206, %207 : vector<16x1xf32>
    %209 = vector.broadcast %208 : vector<16x1xf32> to vector<16x32xf32>
    %210 = arith.subf %202, %209 : vector<16x32xf32>
    %211 = arith.mulf %210, %210 : vector<16x32xf32>
    %cst_58 = arith.constant dense<0.000000e+00> : vector<16xf32>
    %212 = vector.multi_reduction <add>, %211, %cst_58 [1] : vector<16x32xf32> to vector<16xf32>
    %213 = vector.shape_cast %212 : vector<16xf32> to vector<16x1xf32>
    %cst_59 = arith.constant 3.200000e+01 : f32
    %214 = vector.broadcast %cst_59 : f32 to vector<16x1xf32>
    %215 = arith.divf %213, %214 : vector<16x1xf32>
    %cst_60 = arith.constant 9.99999996E-13 : f32
    %216 = vector.broadcast %cst_60 : f32 to vector<16x1xf32>
    %217 = arith.addf %215, %216 : vector<16x1xf32>
    %218 = math.rsqrt %217 : vector<16x1xf32>
    %219 = vector.broadcast %218 : vector<16x1xf32> to vector<16x32xf32>
    %220 = arith.mulf %210, %219 : vector<16x32xf32>
    %221 = vector.broadcast %203 : vector<1x32xf32> to vector<16x32xf32>
    %222 = arith.mulf %220, %221 : vector<16x32xf32>
    %223 = vector.broadcast %204 : vector<1x32xf32> to vector<16x32xf32>
    %224 = arith.addf %222, %223 : vector<16x32xf32>
    %c1 = arith.constant 1 : index
    %c0_61 = arith.constant 0 : index
    %c0_62 = arith.constant 0 : index
    %225 = vector.load %arg4[%c1, %c0_61, %c0_62] : memref<2x32x192xbf16, #tpu.memory_space<vmem>>, vector<1x32x192xbf16>
    %226 = vector.shape_cast %225 : vector<1x32x192xbf16> to vector<32x192xbf16>
    %c1_63 = arith.constant 1 : index
    %c0_64 = arith.constant 0 : index
    %c0_65 = arith.constant 0 : index
    %227 = vector.load %arg5[%c1_63, %c0_64, %c0_65] : memref<2x64x32xbf16, #tpu.memory_space<vmem>>, vector<1x64x32xbf16>
    %228 = vector.shape_cast %227 : vector<1x64x32xbf16> to vector<64x32xbf16>
    %c1_66 = arith.constant 1 : index
    %c0_67 = arith.constant 0 : index
    %c0_68 = arith.constant 0 : index
    %229 = vector.load %arg3[%c1_66, %c0_67, %c0_68] : memref<2x8x128xf32, #tpu.memory_space<vmem>>, vector<1x8x128xf32>
    %230 = vector.shape_cast %229 : vector<1x8x128xf32> to vector<8x128xf32>
    %231 = arith.truncf %224 : vector<16x32xf32> to vector<16x32xbf16>
    %232 = vector.extract_strided_slice %226 {offsets = [0, 0], sizes = [32, 96], strides = [1, 1]} : vector<32x192xbf16> to vector<32x96xbf16>
    %cst_69 = arith.constant dense<0.000000e+00> : vector<16x96xf32>
    %233 = tpu.matmul %231, %232, %cst_69 {dimension_numbers = #tpu.dot_dimension_numbers<[1], [0], [0], [1], [0, 0, 1, 1], [], []>} : vector<16x32xbf16>, vector<32x96xbf16>, vector<16x96xf32> -> vector<16x96xf32>
    %234 = vector.extract_strided_slice %230 {offsets = [0, 0], sizes = [1, 96], strides = [1, 1]} : vector<8x128xf32> to vector<1x96xf32>
    %235 = vector.broadcast %234 : vector<1x96xf32> to vector<16x96xf32>
    %236 = arith.addf %233, %235 : vector<16x96xf32>
    %237 = arith.truncf %236 : vector<16x96xf32> to vector<16x96xbf16>
    %cst_70 = arith.constant 0.000000e+00 : f32
    %238 = vector.broadcast %cst_70 : f32 to vector<16x32xf32>
    %239 = vector.extract_strided_slice %237 {offsets = [0, 0], sizes = [16, 8], strides = [1, 1]} : vector<16x96xbf16> to vector<16x8xbf16>
    %240 = vector.shape_cast %239 : vector<16x8xbf16> to vector<2x8x8xbf16>
    %241 = vector.extract_strided_slice %237 {offsets = [0, 32], sizes = [16, 8], strides = [1, 1]} : vector<16x96xbf16> to vector<16x8xbf16>
    %242 = vector.shape_cast %241 : vector<16x8xbf16> to vector<2x8x8xbf16>
    %243 = vector.extract_strided_slice %237 {offsets = [0, 64], sizes = [16, 8], strides = [1, 1]} : vector<16x96xbf16> to vector<16x8xbf16>
    %244 = vector.shape_cast %243 : vector<16x8xbf16> to vector<2x8x8xbf16>
    "tpu.trace_start"() <{level = 10 : i32, message = "bqd,bkd->bqk"}> : () -> ()
    %cst_71 = arith.constant dense<0.000000e+00> : vector<2x8x8xf32>
    %245 = tpu.matmul %240, %242, %cst_71 {dimension_numbers = #tpu.dot_dimension_numbers<[2], [2], [1], [1], [0, 0, 0, 1, 1, 1], [0], [0]>} : vector<2x8x8xbf16>, vector<2x8x8xbf16>, vector<2x8x8xf32> -> vector<2x8x8xf32>
    "tpu.trace_stop"() : () -> ()
    %cst_72 = arith.constant 0.353553385 : f32
    %246 = vector.broadcast %cst_72 : f32 to vector<2x8x8xf32>
    %247 = arith.mulf %245, %246 : vector<2x8x8xf32>
    %248 = vector.broadcast %25 : vector<2x1x8xf32> to vector<2x8x8xf32>
    %249 = arith.addf %247, %248 : vector<2x8x8xf32>
    %cst_73 = arith.constant dense<0xFF800000> : vector<2x8xf32>
    %250 = vector.multi_reduction <maximumf>, %249, %cst_73 [2] : vector<2x8x8xf32> to vector<2x8xf32>
    %251 = vector.shape_cast %250 : vector<2x8xf32> to vector<2x8x1xf32>
    %252 = vector.broadcast %251 : vector<2x8x1xf32> to vector<2x8x8xf32>
    %253 = arith.subf %249, %252 : vector<2x8x8xf32>
    %254 = math.exp %253 : vector<2x8x8xf32>
    %cst_74 = arith.constant dense<0.000000e+00> : vector<2x8xf32>
    %255 = vector.multi_reduction <add>, %254, %cst_74 [2] : vector<2x8x8xf32> to vector<2x8xf32>
    %256 = vector.shape_cast %255 : vector<2x8xf32> to vector<2x8x1xf32>
    %257 = tpu.reciprocal %256 {approx = true} : vector<2x8x1xf32> -> vector<2x8x1xf32>
    %258 = vector.broadcast %257 : vector<2x8x1xf32> to vector<2x8x8xf32>
    %259 = arith.mulf %254, %258 : vector<2x8x8xf32>
    %260 = arith.truncf %259 : vector<2x8x8xf32> to vector<2x8x8xbf16>
    "tpu.trace_start"() <{level = 10 : i32, message = "bqk,bkd->bqd"}> : () -> ()
    %cst_75 = arith.constant dense<0.000000e+00> : vector<2x8x8xf32>
    %261 = tpu.matmul %260, %244, %cst_75 {dimension_numbers = #tpu.dot_dimension_numbers<[2], [1], [1], [2], [0, 0, 0, 1, 1, 2], [0], [0]>} : vector<2x8x8xbf16>, vector<2x8x8xbf16>, vector<2x8x8xf32> -> vector<2x8x8xf32>
    "tpu.trace_stop"() : () -> ()
    %262 = vector.shape_cast %261 : vector<2x8x8xf32> to vector<16x8xf32>
    %263 = arith.truncf %262 : vector<16x8xf32> to vector<16x8xbf16>
    %264 = vector.extract_strided_slice %226 {offsets = [0, 96], sizes = [8, 32], strides = [1, 1]} : vector<32x192xbf16> to vector<8x32xbf16>
    %cst_76 = arith.constant dense<0.000000e+00> : vector<16x32xf32>
    %265 = tpu.matmul %263, %264, %cst_76 {dimension_numbers = #tpu.dot_dimension_numbers<[1], [0], [0], [1], [0, 0, 1, 1], [], []>} : vector<16x8xbf16>, vector<8x32xbf16>, vector<16x32xf32> -> vector<16x32xf32>
    %266 = arith.addf %238, %265 : vector<16x32xf32>
    %267 = vector.extract_strided_slice %237 {offsets = [0, 8], sizes = [16, 8], strides = [1, 1]} : vector<16x96xbf16> to vector<16x8xbf16>
    %268 = vector.shape_cast %267 : vector<16x8xbf16> to vector<2x8x8xbf16>
    %269 = vector.extract_strided_slice %237 {offsets = [0, 40], sizes = [16, 8], strides = [1, 1]} : vector<16x96xbf16> to vector<16x8xbf16>
    %270 = vector.shape_cast %269 : vector<16x8xbf16> to vector<2x8x8xbf16>
    %271 = vector.extract_strided_slice %237 {offsets = [0, 72], sizes = [16, 8], strides = [1, 1]} : vector<16x96xbf16> to vector<16x8xbf16>
    %272 = vector.shape_cast %271 : vector<16x8xbf16> to vector<2x8x8xbf16>
    "tpu.trace_start"() <{level = 10 : i32, message = "bqd,bkd->bqk"}> : () -> ()
    %cst_77 = arith.constant dense<0.000000e+00> : vector<2x8x8xf32>
    %273 = tpu.matmul %268, %270, %cst_77 {dimension_numbers = #tpu.dot_dimension_numbers<[2], [2], [1], [1], [0, 0, 0, 1, 1, 1], [0], [0]>} : vector<2x8x8xbf16>, vector<2x8x8xbf16>, vector<2x8x8xf32> -> vector<2x8x8xf32>
    "tpu.trace_stop"() : () -> ()
    %cst_78 = arith.constant 0.353553385 : f32
    %274 = vector.broadcast %cst_78 : f32 to vector<2x8x8xf32>
    %275 = arith.mulf %273, %274 : vector<2x8x8xf32>
    %276 = vector.broadcast %25 : vector<2x1x8xf32> to vector<2x8x8xf32>
    %277 = arith.addf %275, %276 : vector<2x8x8xf32>
    %cst_79 = arith.constant dense<0xFF800000> : vector<2x8xf32>
    %278 = vector.multi_reduction <maximumf>, %277, %cst_79 [2] : vector<2x8x8xf32> to vector<2x8xf32>
    %279 = vector.shape_cast %278 : vector<2x8xf32> to vector<2x8x1xf32>
    %280 = vector.broadcast %279 : vector<2x8x1xf32> to vector<2x8x8xf32>
    %281 = arith.subf %277, %280 : vector<2x8x8xf32>
    %282 = math.exp %281 : vector<2x8x8xf32>
    %cst_80 = arith.constant dense<0.000000e+00> : vector<2x8xf32>
    %283 = vector.multi_reduction <add>, %282, %cst_80 [2] : vector<2x8x8xf32> to vector<2x8xf32>
    %284 = vector.shape_cast %283 : vector<2x8xf32> to vector<2x8x1xf32>
    %285 = tpu.reciprocal %284 {approx = true} : vector<2x8x1xf32> -> vector<2x8x1xf32>
    %286 = vector.broadcast %285 : vector<2x8x1xf32> to vector<2x8x8xf32>
    %287 = arith.mulf %282, %286 : vector<2x8x8xf32>
    %288 = arith.truncf %287 : vector<2x8x8xf32> to vector<2x8x8xbf16>
    "tpu.trace_start"() <{level = 10 : i32, message = "bqk,bkd->bqd"}> : () -> ()
    %cst_81 = arith.constant dense<0.000000e+00> : vector<2x8x8xf32>
    %289 = tpu.matmul %288, %272, %cst_81 {dimension_numbers = #tpu.dot_dimension_numbers<[2], [1], [1], [2], [0, 0, 0, 1, 1, 2], [0], [0]>} : vector<2x8x8xbf16>, vector<2x8x8xbf16>, vector<2x8x8xf32> -> vector<2x8x8xf32>
    "tpu.trace_stop"() : () -> ()
    %290 = vector.shape_cast %289 : vector<2x8x8xf32> to vector<16x8xf32>
    %291 = arith.truncf %290 : vector<16x8xf32> to vector<16x8xbf16>
    %292 = vector.extract_strided_slice %226 {offsets = [8, 96], sizes = [8, 32], strides = [1, 1]} : vector<32x192xbf16> to vector<8x32xbf16>
    %cst_82 = arith.constant dense<0.000000e+00> : vector<16x32xf32>
    %293 = tpu.matmul %291, %292, %cst_82 {dimension_numbers = #tpu.dot_dimension_numbers<[1], [0], [0], [1], [0, 0, 1, 1], [], []>} : vector<16x8xbf16>, vector<8x32xbf16>, vector<16x32xf32> -> vector<16x32xf32>
    %294 = arith.addf %266, %293 : vector<16x32xf32>
    %295 = vector.extract_strided_slice %237 {offsets = [0, 16], sizes = [16, 8], strides = [1, 1]} : vector<16x96xbf16> to vector<16x8xbf16>
    %296 = vector.shape_cast %295 : vector<16x8xbf16> to vector<2x8x8xbf16>
    %297 = vector.extract_strided_slice %237 {offsets = [0, 48], sizes = [16, 8], strides = [1, 1]} : vector<16x96xbf16> to vector<16x8xbf16>
    %298 = vector.shape_cast %297 : vector<16x8xbf16> to vector<2x8x8xbf16>
    %299 = vector.extract_strided_slice %237 {offsets = [0, 80], sizes = [16, 8], strides = [1, 1]} : vector<16x96xbf16> to vector<16x8xbf16>
    %300 = vector.shape_cast %299 : vector<16x8xbf16> to vector<2x8x8xbf16>
    "tpu.trace_start"() <{level = 10 : i32, message = "bqd,bkd->bqk"}> : () -> ()
    %cst_83 = arith.constant dense<0.000000e+00> : vector<2x8x8xf32>
    %301 = tpu.matmul %296, %298, %cst_83 {dimension_numbers = #tpu.dot_dimension_numbers<[2], [2], [1], [1], [0, 0, 0, 1, 1, 1], [0], [0]>} : vector<2x8x8xbf16>, vector<2x8x8xbf16>, vector<2x8x8xf32> -> vector<2x8x8xf32>
    "tpu.trace_stop"() : () -> ()
    %cst_84 = arith.constant 0.353553385 : f32
    %302 = vector.broadcast %cst_84 : f32 to vector<2x8x8xf32>
    %303 = arith.mulf %301, %302 : vector<2x8x8xf32>
    %304 = vector.broadcast %25 : vector<2x1x8xf32> to vector<2x8x8xf32>
    %305 = arith.addf %303, %304 : vector<2x8x8xf32>
    %cst_85 = arith.constant dense<0xFF800000> : vector<2x8xf32>
    %306 = vector.multi_reduction <maximumf>, %305, %cst_85 [2] : vector<2x8x8xf32> to vector<2x8xf32>
    %307 = vector.shape_cast %306 : vector<2x8xf32> to vector<2x8x1xf32>
    %308 = vector.broadcast %307 : vector<2x8x1xf32> to vector<2x8x8xf32>
    %309 = arith.subf %305, %308 : vector<2x8x8xf32>
    %310 = math.exp %309 : vector<2x8x8xf32>
    %cst_86 = arith.constant dense<0.000000e+00> : vector<2x8xf32>
    %311 = vector.multi_reduction <add>, %310, %cst_86 [2] : vector<2x8x8xf32> to vector<2x8xf32>
    %312 = vector.shape_cast %311 : vector<2x8xf32> to vector<2x8x1xf32>
    %313 = tpu.reciprocal %312 {approx = true} : vector<2x8x1xf32> -> vector<2x8x1xf32>
    %314 = vector.broadcast %313 : vector<2x8x1xf32> to vector<2x8x8xf32>
    %315 = arith.mulf %310, %314 : vector<2x8x8xf32>
    %316 = arith.truncf %315 : vector<2x8x8xf32> to vector<2x8x8xbf16>
    "tpu.trace_start"() <{level = 10 : i32, message = "bqk,bkd->bqd"}> : () -> ()
    %cst_87 = arith.constant dense<0.000000e+00> : vector<2x8x8xf32>
    %317 = tpu.matmul %316, %300, %cst_87 {dimension_numbers = #tpu.dot_dimension_numbers<[2], [1], [1], [2], [0, 0, 0, 1, 1, 2], [0], [0]>} : vector<2x8x8xbf16>, vector<2x8x8xbf16>, vector<2x8x8xf32> -> vector<2x8x8xf32>
    "tpu.trace_stop"() : () -> ()
    %318 = vector.shape_cast %317 : vector<2x8x8xf32> to vector<16x8xf32>
    %319 = arith.truncf %318 : vector<16x8xf32> to vector<16x8xbf16>
    %320 = vector.extract_strided_slice %226 {offsets = [16, 96], sizes = [8, 32], strides = [1, 1]} : vector<32x192xbf16> to vector<8x32xbf16>
    %cst_88 = arith.constant dense<0.000000e+00> : vector<16x32xf32>
    %321 = tpu.matmul %319, %320, %cst_88 {dimension_numbers = #tpu.dot_dimension_numbers<[1], [0], [0], [1], [0, 0, 1, 1], [], []>} : vector<16x8xbf16>, vector<8x32xbf16>, vector<16x32xf32> -> vector<16x32xf32>
    %322 = arith.addf %294, %321 : vector<16x32xf32>
    %323 = vector.extract_strided_slice %237 {offsets = [0, 24], sizes = [16, 8], strides = [1, 1]} : vector<16x96xbf16> to vector<16x8xbf16>
    %324 = vector.shape_cast %323 : vector<16x8xbf16> to vector<2x8x8xbf16>
    %325 = vector.extract_strided_slice %237 {offsets = [0, 56], sizes = [16, 8], strides = [1, 1]} : vector<16x96xbf16> to vector<16x8xbf16>
    %326 = vector.shape_cast %325 : vector<16x8xbf16> to vector<2x8x8xbf16>
    %327 = vector.extract_strided_slice %237 {offsets = [0, 88], sizes = [16, 8], strides = [1, 1]} : vector<16x96xbf16> to vector<16x8xbf16>
    %328 = vector.shape_cast %327 : vector<16x8xbf16> to vector<2x8x8xbf16>
    "tpu.trace_start"() <{level = 10 : i32, message = "bqd,bkd->bqk"}> : () -> ()
    %cst_89 = arith.constant dense<0.000000e+00> : vector<2x8x8xf32>
    %329 = tpu.matmul %324, %326, %cst_89 {dimension_numbers = #tpu.dot_dimension_numbers<[2], [2], [1], [1], [0, 0, 0, 1, 1, 1], [0], [0]>} : vector<2x8x8xbf16>, vector<2x8x8xbf16>, vector<2x8x8xf32> -> vector<2x8x8xf32>
    "tpu.trace_stop"() : () -> ()
    %cst_90 = arith.constant 0.353553385 : f32
    %330 = vector.broadcast %cst_90 : f32 to vector<2x8x8xf32>
    %331 = arith.mulf %329, %330 : vector<2x8x8xf32>
    %332 = vector.broadcast %25 : vector<2x1x8xf32> to vector<2x8x8xf32>
    %333 = arith.addf %331, %332 : vector<2x8x8xf32>
    %cst_91 = arith.constant dense<0xFF800000> : vector<2x8xf32>
    %334 = vector.multi_reduction <maximumf>, %333, %cst_91 [2] : vector<2x8x8xf32> to vector<2x8xf32>
    %335 = vector.shape_cast %334 : vector<2x8xf32> to vector<2x8x1xf32>
    %336 = vector.broadcast %335 : vector<2x8x1xf32> to vector<2x8x8xf32>
    %337 = arith.subf %333, %336 : vector<2x8x8xf32>
    %338 = math.exp %337 : vector<2x8x8xf32>
    %cst_92 = arith.constant dense<0.000000e+00> : vector<2x8xf32>
    %339 = vector.multi_reduction <add>, %338, %cst_92 [2] : vector<2x8x8xf32> to vector<2x8xf32>
    %340 = vector.shape_cast %339 : vector<2x8xf32> to vector<2x8x1xf32>
    %341 = tpu.reciprocal %340 {approx = true} : vector<2x8x1xf32> -> vector<2x8x1xf32>
    %342 = vector.broadcast %341 : vector<2x8x1xf32> to vector<2x8x8xf32>
    %343 = arith.mulf %338, %342 : vector<2x8x8xf32>
    %344 = arith.truncf %343 : vector<2x8x8xf32> to vector<2x8x8xbf16>
    "tpu.trace_start"() <{level = 10 : i32, message = "bqk,bkd->bqd"}> : () -> ()
    %cst_93 = arith.constant dense<0.000000e+00> : vector<2x8x8xf32>
    %345 = tpu.matmul %344, %328, %cst_93 {dimension_numbers = #tpu.dot_dimension_numbers<[2], [1], [1], [2], [0, 0, 0, 1, 1, 2], [0], [0]>} : vector<2x8x8xbf16>, vector<2x8x8xbf16>, vector<2x8x8xf32> -> vector<2x8x8xf32>
    "tpu.trace_stop"() : () -> ()
    %346 = vector.shape_cast %345 : vector<2x8x8xf32> to vector<16x8xf32>
    %347 = arith.truncf %346 : vector<16x8xf32> to vector<16x8xbf16>
    %348 = vector.extract_strided_slice %226 {offsets = [24, 96], sizes = [8, 32], strides = [1, 1]} : vector<32x192xbf16> to vector<8x32xbf16>
    %cst_94 = arith.constant dense<0.000000e+00> : vector<16x32xf32>
    %349 = tpu.matmul %347, %348, %cst_94 {dimension_numbers = #tpu.dot_dimension_numbers<[1], [0], [0], [1], [0, 0, 1, 1], [], []>} : vector<16x8xbf16>, vector<8x32xbf16>, vector<16x32xf32> -> vector<16x32xf32>
    %350 = arith.addf %322, %349 : vector<16x32xf32>
    %351 = vector.extract_strided_slice %230 {offsets = [1, 0], sizes = [1, 32], strides = [1, 1]} : vector<8x128xf32> to vector<1x32xf32>
    %352 = vector.broadcast %351 : vector<1x32xf32> to vector<16x32xf32>
    %353 = arith.addf %350, %352 : vector<16x32xf32>
    %354 = arith.addf %353, %224 : vector<16x32xf32>
    %355 = vector.extract_strided_slice %230 {offsets = [2, 0], sizes = [1, 32], strides = [1, 1]} : vector<8x128xf32> to vector<1x32xf32>
    %356 = vector.extract_strided_slice %230 {offsets = [3, 0], sizes = [1, 32], strides = [1, 1]} : vector<8x128xf32> to vector<1x32xf32>
    %cst_95 = arith.constant dense<0.000000e+00> : vector<16xf32>
    %357 = vector.multi_reduction <add>, %354, %cst_95 [1] : vector<16x32xf32> to vector<16xf32>
    %358 = vector.shape_cast %357 : vector<16xf32> to vector<16x1xf32>
    %cst_96 = arith.constant 3.200000e+01 : f32
    %359 = vector.broadcast %cst_96 : f32 to vector<16x1xf32>
    %360 = arith.divf %358, %359 : vector<16x1xf32>
    %361 = vector.broadcast %360 : vector<16x1xf32> to vector<16x32xf32>
    %362 = arith.subf %354, %361 : vector<16x32xf32>
    %363 = arith.mulf %362, %362 : vector<16x32xf32>
    %cst_97 = arith.constant dense<0.000000e+00> : vector<16xf32>
    %364 = vector.multi_reduction <add>, %363, %cst_97 [1] : vector<16x32xf32> to vector<16xf32>
    %365 = vector.shape_cast %364 : vector<16xf32> to vector<16x1xf32>
    %cst_98 = arith.constant 3.200000e+01 : f32
    %366 = vector.broadcast %cst_98 : f32 to vector<16x1xf32>
    %367 = arith.divf %365, %366 : vector<16x1xf32>
    %cst_99 = arith.constant 9.99999996E-13 : f32
    %368 = vector.broadcast %cst_99 : f32 to vector<16x1xf32>
    %369 = arith.addf %367, %368 : vector<16x1xf32>
    %370 = math.rsqrt %369 : vector<16x1xf32>
    %371 = vector.broadcast %370 : vector<16x1xf32> to vector<16x32xf32>
    %372 = arith.mulf %362, %371 : vector<16x32xf32>
    %373 = vector.broadcast %355 : vector<1x32xf32> to vector<16x32xf32>
    %374 = arith.mulf %372, %373 : vector<16x32xf32>
    %375 = vector.broadcast %356 : vector<1x32xf32> to vector<16x32xf32>
    %376 = arith.addf %374, %375 : vector<16x32xf32>
    %377 = arith.truncf %376 : vector<16x32xf32> to vector<16x32xbf16>
    %378 = vector.extract_strided_slice %226 {offsets = [0, 128], sizes = [32, 64], strides = [1, 1]} : vector<32x192xbf16> to vector<32x64xbf16>
    %cst_100 = arith.constant dense<0.000000e+00> : vector<16x64xf32>
    %379 = tpu.matmul %377, %378, %cst_100 {dimension_numbers = #tpu.dot_dimension_numbers<[1], [0], [0], [1], [0, 0, 1, 1], [], []>} : vector<16x32xbf16>, vector<32x64xbf16>, vector<16x64xf32> -> vector<16x64xf32>
    %380 = vector.extract_strided_slice %230 {offsets = [4, 0], sizes = [1, 64], strides = [1, 1]} : vector<8x128xf32> to vector<1x64xf32>
    %381 = vector.broadcast %380 : vector<1x64xf32> to vector<16x64xf32>
    %382 = arith.addf %379, %381 : vector<16x64xf32>
    %cst_101 = arith.constant 5.000000e-01 : f32
    %383 = vector.broadcast %cst_101 : f32 to vector<16x64xf32>
    %384 = arith.mulf %383, %382 : vector<16x64xf32>
    %cst_102 = arith.constant 4.471500e-02 : f32
    %385 = vector.broadcast %cst_102 : f32 to vector<16x64xf32>
    %386 = arith.mulf %385, %382 : vector<16x64xf32>
    %387 = arith.mulf %386, %382 : vector<16x64xf32>
    %388 = arith.mulf %387, %382 : vector<16x64xf32>
    %389 = arith.addf %382, %388 : vector<16x64xf32>
    %cst_103 = arith.constant 0.797884583 : f32
    %390 = vector.broadcast %cst_103 : f32 to vector<16x64xf32>
    %391 = arith.mulf %390, %389 : vector<16x64xf32>
    %392 = math.tanh %391 : vector<16x64xf32>
    %cst_104 = arith.constant 1.000000e+00 : f32
    %393 = vector.broadcast %cst_104 : f32 to vector<16x64xf32>
    %394 = arith.addf %393, %392 : vector<16x64xf32>
    %395 = arith.mulf %384, %394 : vector<16x64xf32>
    %396 = arith.truncf %395 : vector<16x64xf32> to vector<16x64xbf16>
    %cst_105 = arith.constant dense<0.000000e+00> : vector<16x32xf32>
    %397 = tpu.matmul %396, %228, %cst_105 {dimension_numbers = #tpu.dot_dimension_numbers<[1], [0], [0], [1], [0, 0, 1, 1], [], []>} : vector<16x64xbf16>, vector<64x32xbf16>, vector<16x32xf32> -> vector<16x32xf32>
    %398 = vector.extract_strided_slice %230 {offsets = [5, 0], sizes = [1, 32], strides = [1, 1]} : vector<8x128xf32> to vector<1x32xf32>
    %399 = vector.broadcast %398 : vector<1x32xf32> to vector<16x32xf32>
    %400 = arith.addf %397, %399 : vector<16x32xf32>
    %401 = arith.addf %400, %376 : vector<16x32xf32>
    %402 = vector.extract_strided_slice %230 {offsets = [6, 0], sizes = [1, 32], strides = [1, 1]} : vector<8x128xf32> to vector<1x32xf32>
    %403 = vector.extract_strided_slice %230 {offsets = [7, 0], sizes = [1, 32], strides = [1, 1]} : vector<8x128xf32> to vector<1x32xf32>
    %cst_106 = arith.constant dense<0.000000e+00> : vector<16xf32>
    %404 = vector.multi_reduction <add>, %401, %cst_106 [1] : vector<16x32xf32> to vector<16xf32>
    %405 = vector.shape_cast %404 : vector<16xf32> to vector<16x1xf32>
    %cst_107 = arith.constant 3.200000e+01 : f32
    %406 = vector.broadcast %cst_107 : f32 to vector<16x1xf32>
    %407 = arith.divf %405, %406 : vector<16x1xf32>
    %408 = vector.broadcast %407 : vector<16x1xf32> to vector<16x32xf32>
    %409 = arith.subf %401, %408 : vector<16x32xf32>
    %410 = arith.mulf %409, %409 : vector<16x32xf32>
    %cst_108 = arith.constant dense<0.000000e+00> : vector<16xf32>
    %411 = vector.multi_reduction <add>, %410, %cst_108 [1] : vector<16x32xf32> to vector<16xf32>
    %412 = vector.shape_cast %411 : vector<16xf32> to vector<16x1xf32>
    %cst_109 = arith.constant 3.200000e+01 : f32
    %413 = vector.broadcast %cst_109 : f32 to vector<16x1xf32>
    %414 = arith.divf %412, %413 : vector<16x1xf32>
    %cst_110 = arith.constant 9.99999996E-13 : f32
    %415 = vector.broadcast %cst_110 : f32 to vector<16x1xf32>
    %416 = arith.addf %414, %415 : vector<16x1xf32>
    %417 = math.rsqrt %416 : vector<16x1xf32>
    %418 = vector.broadcast %417 : vector<16x1xf32> to vector<16x32xf32>
    %419 = arith.mulf %409, %418 : vector<16x32xf32>
    %420 = vector.broadcast %402 : vector<1x32xf32> to vector<16x32xf32>
    %421 = arith.mulf %419, %420 : vector<16x32xf32>
    %422 = vector.broadcast %403 : vector<1x32xf32> to vector<16x32xf32>
    %423 = arith.addf %421, %422 : vector<16x32xf32>
    %c0_111 = arith.constant 0 : index
    %c0_112 = arith.constant 0 : index
    %424 = vector.load %arg7[%c0_111, %c0_112] : memref<16x32xf32, #tpu.memory_space<vmem>>, vector<16x32xf32>
    tpu.vector_store %arg7[%c0_111, %c0_112], %423 {strides = array<i32>} : memref<16x32xf32, #tpu.memory_space<vmem>>, vector<16x32xf32>,
    %425 = vector.extract_strided_slice %423 {offsets = [0, 0], sizes = [1, 32], strides = [1, 1]} : vector<16x32xf32> to vector<1x32xf32>
    %426 = vector.extract_strided_slice %423 {offsets = [8, 0], sizes = [1, 32], strides = [1, 1]} : vector<16x32xf32> to vector<1x32xf32>
    %427 = tpu.concatenate %425, %426 in 0 : vector<1x32xf32>, vector<1x32xf32> -> vector<2x32xf32>
    %428 = arith.truncf %427 : vector<2x32xf32> to vector<2x32xbf16>
    %c0_113 = arith.constant 0 : index
    %c0_114 = arith.constant 0 : index
    %429 = vector.load %arg6[%c0_113, %c0_114] : memref<32x32xbf16, #tpu.memory_space<vmem>>, vector<32x32xbf16>
    %cst_115 = arith.constant dense<0.000000e+00> : vector<2x32xf32>
    %430 = tpu.matmul %428, %429, %cst_115 {dimension_numbers = #tpu.dot_dimension_numbers<[1], [0], [0], [1], [0, 0, 1, 1], [], []>} : vector<2x32xbf16>, vector<32x32xbf16>, vector<2x32xf32> -> vector<2x32xf32>
    %431 = vector.broadcast %3 : vector<1x32xf32> to vector<2x32xf32>
    %432 = arith.addf %430, %431 : vector<2x32xf32>
    %433 = math.tanh %432 : vector<2x32xf32>
    %c0_116 = arith.constant 0 : index
    %c0_117 = arith.constant 0 : index
    %434 = vector.load %arg8[%c0_116, %c0_117] : memref<2x32xf32, #tpu.memory_space<vmem>>, vector<2x32xf32>
    tpu.vector_store %arg8[%c0_116, %c0_117], %433 {strides = array<i32>} : memref<2x32xf32, #tpu.memory_space<vmem>>, vector<2x32xf32>,
    return
  }
}

</mosaic_0001>

<llo_original>
// kernel: bert_encoder_forward.1
$region0: #{bert_encoder_forward.1}
  #allocation0 [shape = 'u32[]', space=smem, size = 0x4, offset = 0x4, fixed_abs, tag = 'smem constant byte address 0x4 - core index']
  #allocation1 [shape = 'u32[144,128]{1,0:T(1,128)}', space=vmem, size = 0x12000, scoped, tag = 'internal scratch']
  %s0 = inlined_call_operand.vmem [shape: f32[16,32], index: 0, kind: input, shape index: {}]
  %s1 = inlined_call_operand.vmem [shape: f32[2,1,8], index: 1, kind: input, shape index: {}]
  %s2 = inlined_call_operand.vmem [shape: f32[3,32], index: 2, kind: input, shape index: {}]
  %s3 = inlined_call_operand.vmem [shape: f32[2,8,128], index: 3, kind: input, shape index: {}]
  %s4 = inlined_call_operand.vmem [shape: bf16[2,32,192], index: 4, kind: input, shape index: {}]
  %s5 = inlined_call_operand.vmem [shape: bf16[2,64,32], index: 5, kind: input, shape index: {}]
  %s6 = inlined_call_operand.vmem [shape: bf16[32,32], index: 6, kind: input, shape index: {}]
  %s7 = inlined_call_operand.hbm [shape: f32[16,32], index: 7, kind: output, shape index: {0}]
  %s8 = inlined_call_operand.hbm [shape: f32[2,32], index: 8, kind: output, shape index: {1}]
  %9 = xla_tuple %s7, %s8
  %s10 = sld [smem:[#allocation0]]
  $region46: #{bert_encoder_forward.1} parent=0
    _
  %s12 = ssub.s32 1, %s10
  %s13 = scalar_select 0, %s12, %s10
  $region1: #{bert_encoder_forward.1} parent=0
    #allocation2 [shape = 'u8[8192]{0}', space=vmem, size = 0x2000, scoped, tag = 'output window, operand 0, single buffered']
    #allocation3 [shape = 's32[1]{0}', space=sflag, size = 0x4, scoped, tag = 'scoped memory for bert_encoder_forward.1']
    #allocation4 [shape = 'u8[1024]{0}', space=vmem, size = 0x400, scoped, tag = 'output window, operand 1, single buffered']
    #allocation5 [shape = 's32[1]{0}', space=sflag, size = 0x4, scoped, tag = 'scoped memory for bert_encoder_forward.1']
    %14 = vsyncpa [#allocation3], 0
    %15 = vsyncpa [#allocation5], 0
    // Predicated region
    $region2: #{bert_encoder_forward.1} parent=1 // pred_check
      _
    $region3: #{bert_encoder_forward.1} parent=1 // pred_check_branch
      %17 = sbr.rel (0) target = $region5
    $region4: #{bert_encoder_forward.1} parent=1 // pred_region
      _
    $region5: #{bert_encoder_forward.1} parent=1 // pred_fallthru
      _
    // Predicated region
    $region6: #{bert_encoder_forward.1} parent=1 // pred_check
      _
    $region7: #{bert_encoder_forward.1} parent=1 // pred_check_branch
      %19 = sbr.rel (0) target = $region9
    $region8: #{bert_encoder_forward.1} parent=1 // pred_region
      _
    $region9: #{bert_encoder_forward.1} parent=1 // pred_fallthru
      _
    // Predicated region
    $region10: #{bert_encoder_forward.1} parent=1 // pred_check
      _
    $region11: #{bert_encoder_forward.1} parent=1 // pred_check_branch
      %21 = sbr.rel (0) target = $region13
    $region12: #{bert_encoder_forward.1} parent=1 // pred_region
      _
    $region13: #{bert_encoder_forward.1} parent=1 // pred_fallthru
      _
    // Predicated region
    $region14: #{bert_encoder_forward.1} parent=1 // pred_check
      _
    $region15: #{bert_encoder_forward.1} parent=1 // pred_check_branch
      %23 = sbr.rel (0) target = $region17
    $region16: #{bert_encoder_forward.1} parent=1 // pred_region
      _
    $region17: #{bert_encoder_forward.1} parent=1 // pred_fallthru
      _
    // Predicated region
    $region18: #{bert_encoder_forward.1} parent=1 // pred_check
      _
    $region19: #{bert_encoder_forward.1} parent=1 // pred_check_branch
      %25 = sbr.rel (0) target = $region21
    $region20: #{bert_encoder_forward.1} parent=1 // pred_region
      _
    $region21: #{bert_encoder_forward.1} parent=1 // pred_fallthru
      _
    // Predicated region
    $region22: #{bert_encoder_forward.1} parent=1 // pred_check
      _
    $region23: #{bert_encoder_forward.1} parent=1 // pred_check_branch
      %27 = sbr.rel (0) target = $region25
    $region24: #{bert_encoder_forward.1} parent=1 // pred_region
      _
    $region25: #{bert_encoder_forward.1} parent=1 // pred_fallthru
      _
    // Predicated region
    $region26: #{bert_encoder_forward.1} parent=1 // pred_check
      _
    $region27: #{bert_encoder_forward.1} parent=1 // pred_check_branch
      %29 = sbr.rel (0) target = $region29
    $region28: #{bert_encoder_forward.1} parent=1 // pred_region
      _
    $region29: #{bert_encoder_forward.1} parent=1 // pred_fallthru
      _
    %v31 = vld [vmem:[%s2] sm:$0x7]
    %v32 = vld [vmem:[%s0] sm:$0xff]
    %v33 = vld [vmem:[%s0 + $0x8] sm:$0xff]
    %vm34 = vcmask 261120
    %v35 = vsel %vm34, %v32, 0.0
    %36 = vadd.xlane.f32.xlu0 %v35
    %v37 = vpop.xlane.xlu0 %36
    %v38 = vsel %vm34, %v33, 0.0
    %39 = vadd.xlane.f32.xlu0 %v38
    %v40 = vpop.xlane.xlu0 %39
    %v41 = vrcp.pop 32.0
    %v42 = vmul.f32 %v37, %v41
    %v43 = vmul.f32 %v40, %v41
    %v44 = vsub.f32 %v32, %v42
    %v45 = vsub.f32 %v33, %v43
    %v46 = vmul.f32 %v44, %v44
    %v47 = vmul.f32 %v45, %v45
    %v48 = vsel %vm34, %v46, 0.0
    %49 = vadd.xlane.f32.xlu0 %v48
    %v50 = vpop.xlane.xlu0 %49
    %v51 = vsel %vm34, %v47, 0.0
    %52 = vadd.xlane.f32.xlu0 %v51
    %v53 = vpop.xlane.xlu0 %52
    %v54 = vmul.f32 %v50, %v41
    %v55 = vmul.f32 %v53, %v41
    %v56 = vadd.f32 %v54, 1e-12
    %v57 = vadd.f32 %v55, 1e-12
    %v58 = vrsqrt.pop %v56
    %v59 = vrsqrt.pop %v57
    %v60 = vmul.f32 %v44, %v58
    %v61 = vmul.f32 %v45, %v59
    %v62 = vlaneseq
    %v63 = vshrl.u32 %v62, 7
    %v64 = vsub.s32 0, %v63
    %v65 = vrot.slane %v31, %v64
    %v66 = vmul.f32 %v60, %v65
    %v67 = vmul.f32 %v61, %v65
    %v68 = vlaneseq
    %v69 = vshrl.u32 %v68, 7
    %v70 = vsub.s32 1, %v69
    %v71 = vrot.slane %v31, %v70
    %v72 = vadd.f32 %v66, %v71
    %v73 = vadd.f32 %v67, %v71
    %v74 = vld [vmem:[%s1] sm:$0x1]
    %v75 = vld [vmem:[%s1 + $0x1] sm:$0x1]
    %v76 = vld [vmem:[%s4] sm:$0xff]
    %v77 = vld [vmem:[%s4 + $0x8] sm:$0xff]
    %v78 = vld [vmem:[%s4 + $0x10] sm:$0xff]
    %v79 = vld [vmem:[%s4 + $0x18] sm:$0xff]
    %v80 = vld [vmem:[%s5] sm:$0xf]
    %v81 = vld [vmem:[%s5 + $0x4] sm:$0xf]
    %v82 = vld [vmem:[%s5 + $0x8] sm:$0xf]
    %v83 = vld [vmem:[%s5 + $0xc] sm:$0xf]
    %v84 = vld [vmem:[%s5 + $0x10] sm:$0xf]
    %v85 = vld [vmem:[%s5 + $0x14] sm:$0xf]
    %v86 = vld [vmem:[%s5 + $0x18] sm:$0xf]
    %v87 = vld [vmem:[%s5 + $0x1c] sm:$0xf]
    %v88 = vld [vmem:[%s3] sm:$0xff]
    %v89 = vpack.c.bf16 %v73, %v72
    %v90 = vlaneseq
    %v91 = vshrl.u32 %v90, 7
    %v92 = vsub.s32 0, %v91
    %v93 = vrot.slane %v88, %v92
    %v98 = vunpack.c.l.b16 %v76
    %v99 = vunpack.c.l.b16 %v77
    %v100 = vunpack.c.l.b16 %v78
    %v101 = vunpack.c.l.b16 %v79
    %v102 = vpack.c.b16 %v99, %v98
    %v103 = vpack.c.b16 %v101, %v100
    %v107 = vsel %vm34, %v89, 0
    %109 = vmatprep.subr.bf16.mxu0 0
    %110 = vmatpush1.bf16.msra.mxu0 %v102
    %111 = vmatprep.subr.bf16.mxu0 0
    %112 = vmatpush1.bf16.msra.mxu0 %v103
    %113 = vmatprep.subr.bf16.mxu0 0
    %114 = vmatpush1.bf16.msra.mxu0 0
    %115 = vmatprep.subr.bf16.mxu0 0
    %116 = vmatpush1.bf16.msra.mxu0 0
    %117 = vmatprep.subr.bf16.mxu0 0
    %118 = vmatpush1.bf16.msra.mxu0 0
    %119 = vmatprep.subr.bf16.mxu0 0
    %120 = vmatpush1.bf16.msra.mxu0 0
    %121 = vmatprep.subr.bf16.mxu0 0
    %122 = vmatpush1.bf16.msra.mxu0 0
    %123 = vmatprep.subr.bf16.mxu0 0
    %124 = vmatpush1.bf16.msra.mxu0 0
    %125 = vmatprep.subr.bf16.mxu0 0
    %126 = vmatpush1.bf16.msra.mxu0 0
    %127 = vmatprep.subr.bf16.mxu0 0
    %128 = vmatpush1.bf16.msra.mxu0 0
    %129 = vmatprep.subr.bf16.mxu0 0
    %130 = vmatpush1.bf16.msra.mxu0 0
    %131 = vmatprep.subr.bf16.mxu0 0
    %132 = vmatpush1.bf16.msra.mxu0 0
    %133 = vmatprep.subr.bf16.mxu0 0
    %134 = vmatpush1.bf16.msra.mxu0 0
    %135 = vmatprep.subr.bf16.mxu0 0
    %136 = vmatpush1.bf16.msra.mxu0 0
    %137 = vmatprep.subr.bf16.mxu0 0
    %138 = vmatpush1.bf16.msra.mxu0 0
    %139 = vmatprep.subr.bf16.mxu0 0
    %140 = vmatpush1.bf16.msra.mxu0 0
    %141 = vmatprep.mubr.bf16.mxu0 0
    %142 = vmatmul.mubr.bf16.gmra.mrb[0].mxu0 %v107
    %v143 = vpop.f32.mrb[0].mxu0
    %v144 = vadd.f32 %v93, %v143
    %v145 = vpop.f32.mrb[0].mxu0
    %v146 = vpop.f32.mrb[0].mxu0
    %v147 = vadd.f32 %v93, %v146
    %v148 = vpop.f32.mrb[0].mxu0
    %149 = vdwg.mxu0
    %v150 = vpack.c.bf16 %v147, %v144
    %v152 = vunpack.c.l.b16 %v150
    %v153 = vunpack.c.h.b16 %v150
    %v154 = vpack.c.b16 %v152, %v152
    %v155 = vpack.c.b16 %v153, %v153
    %156 = vrot.lane.b32.xlu0 %v154, 96
    %v157 = vpop.permute.xlu0 %156
    %vm158 = vcmask 64512
    %v160 = vsel %vm158, %v154, 0
    %v163 = vsel %vm158, %v157, 0
    %165 = vmatprep.subr.bf16.mxu0 0
    %166 = vmatpush1.bf16.xpose.msra.mxu0 %v163
    %167 = vmatprep.subr.bf16.mxu0 0
    %168 = vmatpush1.bf16.xpose.msra.mxu0 0
    %169 = vmatprep.subr.bf16.mxu0 0
    %170 = vmatpush1.bf16.xpose.msra.mxu0 0
    %171 = vmatprep.subr.bf16.mxu0 0
    %172 = vmatpush1.bf16.xpose.msra.mxu0 0
    %173 = vmatprep.subr.bf16.mxu0 0
    %174 = vmatpush1.bf16.xpose.msra.mxu0 0
    %175 = vmatprep.subr.bf16.mxu0 0
    %176 = vmatpush1.bf16.xpose.msra.mxu0 0
    %177 = vmatprep.subr.bf16.mxu0 0
    %178 = vmatpush1.bf16.xpose.msra.mxu0 0
    %179 = vmatprep.subr.bf16.mxu0 0
    %180 = vmatpush1.bf16.xpose.msra.mxu0 0
    %181 = vmatprep.subr.bf16.mxu0 0
    %182 = vmatpush1.bf16.xpose.msra.mxu0 0
    %183 = vmatprep.subr.bf16.mxu0 0
    %184 = vmatpush1.bf16.xpose.msra.mxu0 0
    %185 = vmatprep.subr.bf16.mxu0 0
    %186 = vmatpush1.bf16.xpose.msra.mxu0 0
    %187 = vmatprep.subr.bf16.mxu0 0
    %188 = vmatpush1.bf16.xpose.msra.mxu0 0
    %189 = vmatprep.subr.bf16.mxu0 0
    %190 = vmatpush1.bf16.xpose.msra.mxu0 0
    %191 = vmatprep.subr.bf16.mxu0 0
    %192 = vmatpush1.bf16.xpose.msra.mxu0 0
    %193 = vmatprep.subr.bf16.mxu0 0
    %194 = vmatpush1.bf16.xpose.msra.mxu0 0
    %195 = vmatprep.subr.bf16.mxu0 0
    %196 = vmatpush1.bf16.xpose.msra.mxu0 0
    %197 = vmatprep.mubr.bf16.mxu0 0
    %198 = vmatmul.mubr.bf16.gmra.mrb[0].mxu0 %v160
    %v199 = vpop.f32.mrb[0].mxu0
    %v200 = vadd.f32 0.0, %v199
    %v201 = vpop.f32.mrb[0].mxu0
    %v202 = vpop.f32.mrb[0].mxu0
    %v203 = vpop.f32.mrb[0].mxu0
    %204 = vdwg.mxu0
    %205 = vrot.lane.b32.xlu0 %v155, 96
    %v206 = vpop.permute.xlu0 %205
    %v208 = vsel %vm158, %v155, 0
    %v211 = vsel %vm158, %v206, 0
    %213 = vmatprep.subr.bf16.mxu0 0
    %214 = vmatpush1.bf16.xpose.msra.mxu0 %v211
    %215 = vmatprep.subr.bf16.mxu0 0
    %216 = vmatpush1.bf16.xpose.msra.mxu0 0
    %217 = vmatprep.subr.bf16.mxu0 0
    %218 = vmatpush1.bf16.xpose.msra.mxu0 0
    %219 = vmatprep.subr.bf16.mxu0 0
    %220 = vmatpush1.bf16.xpose.msra.mxu0 0
    %221 = vmatprep.subr.bf16.mxu0 0
    %222 = vmatpush1.bf16.xpose.msra.mxu0 0
    %223 = vmatprep.subr.bf16.mxu0 0
    %224 = vmatpush1.bf16.xpose.msra.mxu0 0
    %225 = vmatprep.subr.bf16.mxu0 0
    %226 = vmatpush1.bf16.xpose.msra.mxu0 0
    %227 = vmatprep.subr.bf16.mxu0 0
    %228 = vmatpush1.bf16.xpose.msra.mxu0 0
    %229 = vmatprep.subr.bf16.mxu0 0
    %230 = vmatpush1.bf16.xpose.msra.mxu0 0
    %231 = vmatprep.subr.bf16.mxu0 0
    %232 = vmatpush1.bf16.xpose.msra.mxu0 0
    %233 = vmatprep.subr.bf16.mxu0 0
    %234 = vmatpush1.bf16.xpose.msra.mxu0 0
    %235 = vmatprep.subr.bf16.mxu0 0
    %236 = vmatpush1.bf16.xpose.msra.mxu0 0
    %237 = vmatprep.subr.bf16.mxu0 0
    %238 = vmatpush1.bf16.xpose.msra.mxu0 0
    %239 = vmatprep.subr.bf16.mxu0 0
    %240 = vmatpush1.bf16.xpose.msra.mxu0 0
    %241 = vmatprep.subr.bf16.mxu0 0
    %242 = vmatpush1.bf16.xpose.msra.mxu0 0
    %243 = vmatprep.subr.bf16.mxu0 0
    %244 = vmatpush1.bf16.xpose.msra.mxu0 0
    %245 = vmatprep.mubr.bf16.mxu0 0
    %246 = vmatmul.mubr.bf16.gmra.mrb[0].mxu0 %v208
    %v247 = vpop.f32.mrb[0].mxu0
    %v248 = vadd.f32 0.0, %v247
    %v249 = vpop.f32.mrb[0].mxu0
    %v250 = vpop.f32.mrb[0].mxu0
    %v251 = vpop.f32.mrb[0].mxu0
    %252 = vdwg.mxu0
    %v253 = vmul.f32 %v200, 0.35355338
    %v254 = vmul.f32 %v248, 0.35355338
    %v257 = vlaneseq
    %v258 = vshrl.u32 %v257, 7
    %v259 = vsub.s32 0, %v258
    %v260 = vrot.slane %v74, %v259
    %v261 = vlaneseq
    %v262 = vshrl.u32 %v261, 7
    %v263 = vsub.s32 0, %v262
    %v264 = vrot.slane %v75, %v263
    %v267 = vadd.f32 %v253, %v260
    %v268 = vadd.f32 %v254, %v264
    %v269 = vsel %vm158, %v267, -inf
    %270 = vmax.xlane.f32.xlu0 %v269
    %v271 = vpop.xlane.xlu0 %270
    %v272 = vsel %vm158, %v268, -inf
    %273 = vmax.xlane.f32.xlu0 %v272
    %v274 = vpop.xlane.xlu0 %273
    %v275 = vsub.f32 %v267, %v271
    %v276 = vsub.f32 %v268, %v274
    %v277 = vmul.f32 %v275, 1.442695
    %v278 = vpow.pop %v277
    %v279 = vmul.f32 %v276, 1.442695
    %v280 = vpow.pop %v279
    %v281 = vsel %vm158, %v278, 0.0
    %282 = vadd.xlane.f32.xlu0 %v281
    %v283 = vpop.xlane.xlu0 %282
    %v284 = vsel %vm158, %v280, 0.0
    %285 = vadd.xlane.f32.xlu0 %v284
    %v286 = vpop.xlane.xlu0 %285
    %v287 = vrcp.pop %v283
    %v288 = vrcp.pop %v286
    %v289 = vmul.f32 %v278, %v287
    %v290 = vmul.f32 %v280, %v288
    %v291 = vpack.c.bf16 %v289, %v289
    %v292 = vpack.c.bf16 %v290, %v290
    %293 = vrot.lane.b32.xlu0 %v154, 64
    %v294 = vpop.permute.xlu0 %293
    %v296 = vsel %vm158, %v291, 0
    %vm298 = vcmask 1043456
    %v300 = vsel %vm298, %v294, 0
    %302 = vmatprep.subr.bf16.mxu0 0
    %303 = vmatpush1.bf16.msra.mxu0 %v300
    %304 = vmatprep.subr.bf16.mxu0 0
    %305 = vmatpush1.bf16.msra.mxu0 0
    %306 = vmatprep.subr.bf16.mxu0 0
    %307 = vmatpush1.bf16.msra.mxu0 0
    %308 = vmatprep.subr.bf16.mxu0 0
    %309 = vmatpush1.bf16.msra.mxu0 0
    %310 = vmatprep.subr.bf16.mxu0 0
    %311 = vmatpush1.bf16.msra.mxu0 0
    %312 = vmatprep.subr.bf16.mxu0 0
    %313 = vmatpush1.bf16.msra.mxu0 0
    %314 = vmatprep.subr.bf16.mxu0 0
    %315 = vmatpush1.bf16.msra.mxu0 0
    %316 = vmatprep.subr.bf16.mxu0 0
    %317 = vmatpush1.bf16.msra.mxu0 0
    %318 = vmatprep.subr.bf16.mxu0 0
    %319 = vmatpush1.bf16.msra.mxu0 0
    %320 = vmatprep.subr.bf16.mxu0 0
    %321 = vmatpush1.bf16.msra.mxu0 0
    %322 = vmatprep.subr.bf16.mxu0 0
    %323 = vmatpush1.bf16.msra.mxu0 0
    %324 = vmatprep.subr.bf16.mxu0 0
    %325 = vmatpush1.bf16.msra.mxu0 0
    %326 = vmatprep.subr.bf16.mxu0 0
    %327 = vmatpush1.bf16.msra.mxu0 0
    %328 = vmatprep.subr.bf16.mxu0 0
    %329 = vmatpush1.bf16.msra.mxu0 0
    %330 = vmatprep.subr.bf16.mxu0 0
    %331 = vmatpush1.bf16.msra.mxu0 0
    %332 = vmatprep.subr.bf16.mxu0 0
    %333 = vmatpush1.bf16.msra.mxu0 0
    %334 = vmatprep.mubr.bf16.mxu0 0
    %335 = vmatmul.mubr.bf16.gmra.mrb[0].mxu0 %v296
    %v336 = vpop.f32.mrb[0].mxu0
    %v337 = vadd.f32 0.0, %v336
    %v338 = vpop.f32.mrb[0].mxu0
    %v339 = vpop.f32.mrb[0].mxu0
    %v340 = vpop.f32.mrb[0].mxu0
    %341 = vdwg.mxu0
    %342 = vrot.lane.b32.xlu0 %v155, 64
    %v343 = vpop.permute.xlu0 %342
    %v345 = vsel %vm158, %v292, 0
    %v348 = vsel %vm298, %v343, 0
    %350 = vmatprep.subr.bf16.mxu0 0
    %351 = vmatpush1.bf16.msra.mxu0 %v348
    %352 = vmatprep.subr.bf16.mxu0 0
    %353 = vmatpush1.bf16.msra.mxu0 0
    %354 = vmatprep.subr.bf16.mxu0 0
    %355 = vmatpush1.bf16.msra.mxu0 0
    %356 = vmatprep.subr.bf16.mxu0 0
    %357 = vmatpush1.bf16.msra.mxu0 0
    %358 = vmatprep.subr.bf16.mxu0 0
    %359 = vmatpush1.bf16.msra.mxu0 0
    %360 = vmatprep.subr.bf16.mxu0 0
    %361 = vmatpush1.bf16.msra.mxu0 0
    %362 = vmatprep.subr.bf16.mxu0 0
    %363 = vmatpush1.bf16.msra.mxu0 0
    %364 = vmatprep.subr.bf16.mxu0 0
    %365 = vmatpush1.bf16.msra.mxu0 0
    %366 = vmatprep.subr.bf16.mxu0 0
    %367 = vmatpush1.bf16.msra.mxu0 0
    %368 = vmatprep.subr.bf16.mxu0 0
    %369 = vmatpush1.bf16.msra.mxu0 0
    %370 = vmatprep.subr.bf16.mxu0 0
    %371 = vmatpush1.bf16.msra.mxu0 0
    %372 = vmatprep.subr.bf16.mxu0 0
    %373 = vmatpush1.bf16.msra.mxu0 0
    %374 = vmatprep.subr.bf16.mxu0 0
    %375 = vmatpush1.bf16.msra.mxu0 0
    %376 = vmatprep.subr.bf16.mxu0 0
    %377 = vmatpush1.bf16.msra.mxu0 0
    %378 = vmatprep.subr.bf16.mxu0 0
    %379 = vmatpush1.bf16.msra.mxu0 0
    %380 = vmatprep.subr.bf16.mxu0 0
    %381 = vmatpush1.bf16.msra.mxu0 0
    %382 = vmatprep.mubr.bf16.mxu0 0
    %383 = vmatmul.mubr.bf16.gmra.mrb[0].mxu0 %v345
    %v384 = vpop.f32.mrb[0].mxu0
    %v385 = vadd.f32 0.0, %v384
    %v386 = vpop.f32.mrb[0].mxu0
    %v387 = vpop.f32.mrb[0].mxu0
    %v388 = vpop.f32.mrb[0].mxu0
    %389 = vdwg.mxu0
    %v390 = vpack.c.bf16 %v385, %v337
    %391 = vrot.lane.b32.xlu0 %v154, 120
    %v392 = vpop.permute.xlu0 %391
    %393 = vrot.lane.b32.xlu0 %v154, 88
    %v394 = vpop.permute.xlu0 %393
    %v396 = vsel %vm158, %v392, 0
    %v399 = vsel %vm158, %v394, 0
    %401 = vmatprep.subr.bf16.mxu0 0
    %402 = vmatpush1.bf16.xpose.msra.mxu0 %v399
    %403 = vmatprep.subr.bf16.mxu0 0
    %404 = vmatpush1.bf16.xpose.msra.mxu0 0
    %405 = vmatprep.subr.bf16.mxu0 0
    %406 = vmatpush1.bf16.xpose.msra.mxu0 0
    %407 = vmatprep.subr.bf16.mxu0 0
    %408 = vmatpush1.bf16.xpose.msra.mxu0 0
    %409 = vmatprep.subr.bf16.mxu0 0
    %410 = vmatpush1.bf16.xpose.msra.mxu0 0
    %411 = vmatprep.subr.bf16.mxu0 0
    %412 = vmatpush1.bf16.xpose.msra.mxu0 0
    %413 = vmatprep.subr.bf16.mxu0 0
    %414 = vmatpush1.bf16.xpose.msra.mxu0 0
    %415 = vmatprep.subr.bf16.mxu0 0
    %416 = vmatpush1.bf16.xpose.msra.mxu0 0
    %417 = vmatprep.subr.bf16.mxu0 0
    %418 = vmatpush1.bf16.xpose.msra.mxu0 0
    %419 = vmatprep.subr.bf16.mxu0 0
    %420 = vmatpush1.bf16.xpose.msra.mxu0 0
    %421 = vmatprep.subr.bf16.mxu0 0
    %422 = vmatpush1.bf16.xpose.msra.mxu0 0
    %423 = vmatprep.subr.bf16.mxu0 0
    %424 = vmatpush1.bf16.xpose.msra.mxu0 0
    %425 = vmatprep.subr.bf16.mxu0 0
    %426 = vmatpush1.bf16.xpose.msra.mxu0 0
    %427 = vmatprep.subr.bf16.mxu0 0
    %428 = vmatpush1.bf16.xpose.msra.mxu0 0
    %429 = vmatprep.subr.bf16.mxu0 0
    %430 = vmatpush1.bf16.xpose.msra.mxu0 0
    %431 = vmatprep.subr.bf16.mxu0 0
    %432 = vmatpush1.bf16.xpose.msra.mxu0 0
    %433 = vmatprep.mubr.bf16.mxu0 0
    %434 = vmatmul.mubr.bf16.gmra.mrb[0].mxu0 %v396
    %v435 = vpop.f32.mrb[0].mxu0
    %v436 = vadd.f32 0.0, %v435
    %v437 = vpop.f32.mrb[0].mxu0
    %v438 = vpop.f32.mrb[0].mxu0
    %v439 = vpop.f32.mrb[0].mxu0
    %440 = vdwg.mxu0
    %441 = vrot.lane.b32.xlu0 %v155, 120
    %v442 = vpop.permute.xlu0 %441
    %443 = vrot.lane.b32.xlu0 %v155, 88
    %v444 = vpop.permute.xlu0 %443
    %v446 = vsel %vm158, %v442, 0
    %v449 = vsel %vm158, %v444, 0
    %451 = vmatprep.subr.bf16.mxu0 0
    %452 = vmatpush1.bf16.xpose.msra.mxu0 %v449
    %453 = vmatprep.subr.bf16.mxu0 0
    %454 = vmatpush1.bf16.xpose.msra.mxu0 0
    %455 = vmatprep.subr.bf16.mxu0 0
    %456 = vmatpush1.bf16.xpose.msra.mxu0 0
    %457 = vmatprep.subr.bf16.mxu0 0
    %458 = vmatpush1.bf16.xpose.msra.mxu0 0
    %459 = vmatprep.subr.bf16.mxu0 0
    %460 = vmatpush1.bf16.xpose.msra.mxu0 0
    %461 = vmatprep.subr.bf16.mxu0 0
    %462 = vmatpush1.bf16.xpose.msra.mxu0 0
    %463 = vmatprep.subr.bf16.mxu0 0
    %464 = vmatpush1.bf16.xpose.msra.mxu0 0
    %465 = vmatprep.subr.bf16.mxu0 0
    %466 = vmatpush1.bf16.xpose.msra.mxu0 0
    %467 = vmatprep.subr.bf16.mxu0 0
    %468 = vmatpush1.bf16.xpose.msra.mxu0 0
    %469 = vmatprep.subr.bf16.mxu0 0
    %470 = vmatpush1.bf16.xpose.msra.mxu0 0
    %471 = vmatprep.subr.bf16.mxu0 0
    %472 = vmatpush1.bf16.xpose.msra.mxu0 0
    %473 = vmatprep.subr.bf16.mxu0 0
    %474 = vmatpush1.bf16.xpose.msra.mxu0 0
    %475 = vmatprep.subr.bf16.mxu0 0
    %476 = vmatpush1.bf16.xpose.msra.mxu0 0
    %477 = vmatprep.subr.bf16.mxu0 0
    %478 = vmatpush1.bf16.xpose.msra.mxu0 0
    %479 = vmatprep.subr.bf16.mxu0 0
    %480 = vmatpush1.bf16.xpose.msra.mxu0 0
    %481 = vmatprep.subr.bf16.mxu0 0
    %482 = vmatpush1.bf16.xpose.msra.mxu0 0
    %483 = vmatprep.mubr.bf16.mxu0 0
    %484 = vmatmul.mubr.bf16.gmra.mrb[0].mxu0 %v446
    %v485 = vpop.f32.mrb[0].mxu0
    %v486 = vadd.f32 0.0, %v485
    %v487 = vpop.f32.mrb[0].mxu0
    %v488 = vpop.f32.mrb[0].mxu0
    %v489 = vpop.f32.mrb[0].mxu0
    %490 = vdwg.mxu0
    %v491 = vmul.f32 %v436, 0.35355338
    %v492 = vmul.f32 %v486, 0.35355338
    %v493 = vadd.f32 %v491, %v260
    %v494 = vadd.f32 %v492, %v264
    %v495 = vsel %vm158, %v493, -inf
    %496 = vmax.xlane.f32.xlu0 %v495
    %v497 = vpop.xlane.xlu0 %496
    %v498 = vsel %vm158, %v494, -inf
    %499 = vmax.xlane.f32.xlu0 %v498
    %v500 = vpop.xlane.xlu0 %499
    %v501 = vsub.f32 %v493, %v497
    %v502 = vsub.f32 %v494, %v500
    %v503 = vmul.f32 %v501, 1.442695
    %v504 = vpow.pop %v503
    %v505 = vmul.f32 %v502, 1.442695
    %v506 = vpow.pop %v505
    %v507 = vsel %vm158, %v504, 0.0
    %508 = vadd.xlane.f32.xlu0 %v507
    %v509 = vpop.xlane.xlu0 %508
    %v510 = vsel %vm158, %v506, 0.0
    %511 = vadd.xlane.f32.xlu0 %v510
    %v512 = vpop.xlane.xlu0 %511
    %v513 = vrcp.pop %v509
    %v514 = vrcp.pop %v512
    %v515 = vmul.f32 %v504, %v513
    %v516 = vmul.f32 %v506, %v514
    %v517 = vpack.c.bf16 %v515, %v515
    %v518 = vpack.c.bf16 %v516, %v516
    %519 = vrot.lane.b32.xlu0 %v154, 56
    %v520 = vpop.permute.xlu0 %519
    %v522 = vsel %vm158, %v517, 0
    %v525 = vsel %vm298, %v520, 0
    %527 = vmatprep.subr.bf16.mxu0 0
    %528 = vmatpush1.bf16.msra.mxu0 %v525
    %529 = vmatprep.subr.bf16.mxu0 0
    %530 = vmatpush1.bf16.msra.mxu0 0
    %531 = vmatprep.subr.bf16.mxu0 0
    %532 = vmatpush1.bf16.msra.mxu0 0
    %533 = vmatprep.subr.bf16.mxu0 0
    %534 = vmatpush1.bf16.msra.mxu0 0
    %535 = vmatprep.subr.bf16.mxu0 0
    %536 = vmatpush1.bf16.msra.mxu0 0
    %537 = vmatprep.subr.bf16.mxu0 0
    %538 = vmatpush1.bf16.msra.mxu0 0
    %539 = vmatprep.subr.bf16.mxu0 0
    %540 = vmatpush1.bf16.msra.mxu0 0
    %541 = vmatprep.subr.bf16.mxu0 0
    %542 = vmatpush1.bf16.msra.mxu0 0
    %543 = vmatprep.subr.bf16.mxu0 0
    %544 = vmatpush1.bf16.msra.mxu0 0
    %545 = vmatprep.subr.bf16.mxu0 0
    %546 = vmatpush1.bf16.msra.mxu0 0
    %547 = vmatprep.subr.bf16.mxu0 0
    %548 = vmatpush1.bf16.msra.mxu0 0
    %549 = vmatprep.subr.bf16.mxu0 0
    %550 = vmatpush1.bf16.msra.mxu0 0
    %551 = vmatprep.subr.bf16.mxu0 0
    %552 = vmatpush1.bf16.msra.mxu0 0
    %553 = vmatprep.subr.bf16.mxu0 0
    %554 = vmatpush1.bf16.msra.mxu0 0
    %555 = vmatprep.subr.bf16.mxu0 0
    %556 = vmatpush1.bf16.msra.mxu0 0
    %557 = vmatprep.subr.bf16.mxu0 0
    %558 = vmatpush1.bf16.msra.mxu0 0
    %559 = vmatprep.mubr.bf16.mxu0 0
    %560 = vmatmul.mubr.bf16.gmra.mrb[0].mxu0 %v522
    %v561 = vpop.f32.mrb[0].mxu0
    %v562 = vadd.f32 0.0, %v561
    %v563 = vpop.f32.mrb[0].mxu0
    %v564 = vpop.f32.mrb[0].mxu0
    %v565 = vpop.f32.mrb[0].mxu0
    %566 = vdwg.mxu0
    %567 = vrot.lane.b32.xlu0 %v155, 56
    %v568 = vpop.permute.xlu0 %567
    %v570 = vsel %vm158, %v518, 0
    %v573 = vsel %vm298, %v568, 0
    %575 = vmatprep.subr.bf16.mxu0 0
    %576 = vmatpush1.bf16.msra.mxu0 %v573
    %577 = vmatprep.subr.bf16.mxu0 0
    %578 = vmatpush1.bf16.msra.mxu0 0
    %579 = vmatprep.subr.bf16.mxu0 0
    %580 = vmatpush1.bf16.msra.mxu0 0
    %581 = vmatprep.subr.bf16.mxu0 0
    %582 = vmatpush1.bf16.msra.mxu0 0
    %583 = vmatprep.subr.bf16.mxu0 0
    %584 = vmatpush1.bf16.msra.mxu0 0
    %585 = vmatprep.subr.bf16.mxu0 0
    %586 = vmatpush1.bf16.msra.mxu0 0
    %587 = vmatprep.subr.bf16.mxu0 0
    %588 = vmatpush1.bf16.msra.mxu0 0
    %589 = vmatprep.subr.bf16.mxu0 0
    %590 = vmatpush1.bf16.msra.mxu0 0
    %591 = vmatprep.subr.bf16.mxu0 0
    %592 = vmatpush1.bf16.msra.mxu0 0
    %593 = vmatprep.subr.bf16.mxu0 0
    %594 = vmatpush1.bf16.msra.mxu0 0
    %595 = vmatprep.subr.bf16.mxu0 0
    %596 = vmatpush1.bf16.msra.mxu0 0
    %597 = vmatprep.subr.bf16.mxu0 0
    %598 = vmatpush1.bf16.msra.mxu0 0
    %599 = vmatprep.subr.bf16.mxu0 0
    %600 = vmatpush1.bf16.msra.mxu0 0
    %601 = vmatprep.subr.bf16.mxu0 0
    %602 = vmatpush1.bf16.msra.mxu0 0
    %603 = vmatprep.subr.bf16.mxu0 0
    %604 = vmatpush1.bf16.msra.mxu0 0
    %605 = vmatprep.subr.bf16.mxu0 0
    %606 = vmatpush1.bf16.msra.mxu0 0
    %607 = vmatprep.mubr.bf16.mxu0 0
    %608 = vmatmul.mubr.bf16.gmra.mrb[0].mxu0 %v570
    %v609 = vpop.f32.mrb[0].mxu0
    %v610 = vadd.f32 0.0, %v609
    %v611 = vpop.f32.mrb[0].mxu0
    %v612 = vpop.f32.mrb[0].mxu0
    %v613 = vpop.f32.mrb[0].mxu0
    %614 = vdwg.mxu0
    %v615 = vpack.c.bf16 %v610, %v562
    %v616 = vpack.c.b16 %v99, %v99
    %617 = vrot.lane.b32.xlu0 %v616, 32
    %v618 = vpop.permute.xlu0 %617
    %v620 = vsel %vm158, %v615, 0
    %v623 = vsel %vm298, %v618, 0
    %625 = vmatprep.subr.bf16.mxu0 0
    %626 = vmatpush1.bf16.msra.mxu0 %v623
    %627 = vmatprep.subr.bf16.mxu0 0
    %628 = vmatpush1.bf16.msra.mxu0 0
    %629 = vmatprep.subr.bf16.mxu0 0
    %630 = vmatpush1.bf16.msra.mxu0 0
    %631 = vmatprep.subr.bf16.mxu0 0
    %632 = vmatpush1.bf16.msra.mxu0 0
    %633 = vmatprep.subr.bf16.mxu0 0
    %634 = vmatpush1.bf16.msra.mxu0 0
    %635 = vmatprep.subr.bf16.mxu0 0
    %636 = vmatpush1.bf16.msra.mxu0 0
    %637 = vmatprep.subr.bf16.mxu0 0
    %638 = vmatpush1.bf16.msra.mxu0 0
    %639 = vmatprep.subr.bf16.mxu0 0
    %640 = vmatpush1.bf16.msra.mxu0 0
    %641 = vmatprep.subr.bf16.mxu0 0
    %642 = vmatpush1.bf16.msra.mxu0 0
    %643 = vmatprep.subr.bf16.mxu0 0
    %644 = vmatpush1.bf16.msra.mxu0 0
    %645 = vmatprep.subr.bf16.mxu0 0
    %646 = vmatpush1.bf16.msra.mxu0 0
    %647 = vmatprep.subr.bf16.mxu0 0
    %648 = vmatpush1.bf16.msra.mxu0 0
    %649 = vmatprep.subr.bf16.mxu0 0
    %650 = vmatpush1.bf16.msra.mxu0 0
    %651 = vmatprep.subr.bf16.mxu0 0
    %652 = vmatpush1.bf16.msra.mxu0 0
    %653 = vmatprep.subr.bf16.mxu0 0
    %654 = vmatpush1.bf16.msra.mxu0 0
    %655 = vmatprep.subr.bf16.mxu0 0
    %656 = vmatpush1.bf16.msra.mxu0 0
    %657 = vmatprep.mubr.bf16.mxu0 0
    %658 = vmatmul.mubr.bf16.gmra.mrb[0].mxu0 %v620
    %v659 = vpop.f32.mrb[0].mxu0
    %v660 = vadd.f32 0.0, %v659
    %v661 = vpop.f32.mrb[0].mxu0
    %v662 = vpop.f32.mrb[0].mxu0
    %v663 = vadd.f32 0.0, %v662
    %v664 = vpop.f32.mrb[0].mxu0
    %665 = vdwg.mxu0
    %v666 = vpack.c.b16 %v98, %v98
    %667 = vrot.lane.b32.xlu0 %v666, 32
    %v668 = vpop.permute.xlu0 %667
    %v670 = vsel %vm158, %v390, 0
    %v673 = vsel %vm298, %v668, 0
    %675 = vmatprep.subr.bf16.mxu0 0
    %676 = vmatpush1.bf16.msra.mxu0 %v673
    %677 = vmatprep.subr.bf16.mxu0 0
    %678 = vmatpush1.bf16.msra.mxu0 0
    %679 = vmatprep.subr.bf16.mxu0 0
    %680 = vmatpush1.bf16.msra.mxu0 0
    %681 = vmatprep.subr.bf16.mxu0 0
    %682 = vmatpush1.bf16.msra.mxu0 0
    %683 = vmatprep.subr.bf16.mxu0 0
    %684 = vmatpush1.bf16.msra.mxu0 0
    %685 = vmatprep.subr.bf16.mxu0 0
    %686 = vmatpush1.bf16.msra.mxu0 0
    %687 = vmatprep.subr.bf16.mxu0 0
    %688 = vmatpush1.bf16.msra.mxu0 0
    %689 = vmatprep.subr.bf16.mxu0 0
    %690 = vmatpush1.bf16.msra.mxu0 0
    %691 = vmatprep.subr.bf16.mxu0 0
    %692 = vmatpush1.bf16.msra.mxu0 0
    %693 = vmatprep.subr.bf16.mxu0 0
    %694 = vmatpush1.bf16.msra.mxu0 0
    %695 = vmatprep.subr.bf16.mxu0 0
    %696 = vmatpush1.bf16.msra.mxu0 0
    %697 = vmatprep.subr.bf16.mxu0 0
    %698 = vmatpush1.bf16.msra.mxu0 0
    %699 = vmatprep.subr.bf16.mxu0 0
    %700 = vmatpush1.bf16.msra.mxu0 0
    %701 = vmatprep.subr.bf16.mxu0 0
    %702 = vmatpush1.bf16.msra.mxu0 0
    %703 = vmatprep.subr.bf16.mxu0 0
    %704 = vmatpush1.bf16.msra.mxu0 0
    %705 = vmatprep.subr.bf16.mxu0 0
    %706 = vmatpush1.bf16.msra.mxu0 0
    %707 = vmatprep.mubr.bf16.mxu0 0
    %708 = vmatmul.mubr.bf16.gmra.mrb[0].mxu0 %v670
    %v709 = vpop.f32.mrb[0].mxu0
    %v710 = vadd.f32 %v660, %v709
    %v711 = vpop.f32.mrb[0].mxu0
    %v712 = vpop.f32.mrb[0].mxu0
    %v713 = vadd.f32 %v663, %v712
    %v714 = vpop.f32.mrb[0].mxu0
    %715 = vdwg.mxu0
    %716 = vrot.lane.b32.xlu0 %v154, 112
    %v717 = vpop.permute.xlu0 %716
    %718 = vrot.lane.b32.xlu0 %v154, 80
    %v719 = vpop.permute.xlu0 %718
    %v721 = vsel %vm158, %v717, 0
    %v724 = vsel %vm158, %v719, 0
    %726 = vmatprep.subr.bf16.mxu0 0
    %727 = vmatpush1.bf16.xpose.msra.mxu0 %v724
    %728 = vmatprep.subr.bf16.mxu0 0
    %729 = vmatpush1.bf16.xpose.msra.mxu0 0
    %730 = vmatprep.subr.bf16.mxu0 0
    %731 = vmatpush1.bf16.xpose.msra.mxu0 0
    %732 = vmatprep.subr.bf16.mxu0 0
    %733 = vmatpush1.bf16.xpose.msra.mxu0 0
    %734 = vmatprep.subr.bf16.mxu0 0
    %735 = vmatpush1.bf16.xpose.msra.mxu0 0
    %736 = vmatprep.subr.bf16.mxu0 0
    %737 = vmatpush1.bf16.xpose.msra.mxu0 0
    %738 = vmatprep.subr.bf16.mxu0 0
    %739 = vmatpush1.bf16.xpose.msra.mxu0 0
    %740 = vmatprep.subr.bf16.mxu0 0
    %741 = vmatpush1.bf16.xpose.msra.mxu0 0
    %742 = vmatprep.subr.bf16.mxu0 0
    %743 = vmatpush1.bf16.xpose.msra.mxu0 0
    %744 = vmatprep.subr.bf16.mxu0 0
    %745 = vmatpush1.bf16.xpose.msra.mxu0 0
    %746 = vmatprep.subr.bf16.mxu0 0
    %747 = vmatpush1.bf16.xpose.msra.mxu0 0
    %748 = vmatprep.subr.bf16.mxu0 0
    %749 = vmatpush1.bf16.xpose.msra.mxu0 0
    %750 = vmatprep.subr.bf16.mxu0 0
    %751 = vmatpush1.bf16.xpose.msra.mxu0 0
    %752 = vmatprep.subr.bf16.mxu0 0
    %753 = vmatpush1.bf16.xpose.msra.mxu0 0
    %754 = vmatprep.subr.bf16.mxu0 0
    %755 = vmatpush1.bf16.xpose.msra.mxu0 0
    %756 = vmatprep.subr.bf16.mxu0 0
    %757 = vmatpush1.bf16.xpose.msra.mxu0 0
    %758 = vmatprep.mubr.bf16.mxu0 0
    %759 = vmatmul.mubr.bf16.gmra.mrb[0].mxu0 %v721
    %v760 = vpop.f32.mrb[0].mxu0
    %v761 = vadd.f32 0.0, %v760
    %v762 = vpop.f32.mrb[0].mxu0
    %v763 = vpop.f32.mrb[0].mxu0
    %v764 = vpop.f32.mrb[0].mxu0
    %765 = vdwg.mxu0
    %766 = vrot.lane.b32.xlu0 %v155, 112
    %v767 = vpop.permute.xlu0 %766
    %768 = vrot.lane.b32.xlu0 %v155, 80
    %v769 = vpop.permute.xlu0 %768
    %v771 = vsel %vm158, %v767, 0
    %v774 = vsel %vm158, %v769, 0
    %776 = vmatprep.subr.bf16.mxu0 0
    %777 = vmatpush1.bf16.xpose.msra.mxu0 %v774
    %778 = vmatprep.subr.bf16.mxu0 0
    %779 = vmatpush1.bf16.xpose.msra.mxu0 0
    %780 = vmatprep.subr.bf16.mxu0 0
    %781 = vmatpush1.bf16.xpose.msra.mxu0 0
    %782 = vmatprep.subr.bf16.mxu0 0
    %783 = vmatpush1.bf16.xpose.msra.mxu0 0
    %784 = vmatprep.subr.bf16.mxu0 0
    %785 = vmatpush1.bf16.xpose.msra.mxu0 0
    %786 = vmatprep.subr.bf16.mxu0 0
    %787 = vmatpush1.bf16.xpose.msra.mxu0 0
    %788 = vmatprep.subr.bf16.mxu0 0
    %789 = vmatpush1.bf16.xpose.msra.mxu0 0
    %790 = vmatprep.subr.bf16.mxu0 0
    %791 = vmatpush1.bf16.xpose.msra.mxu0 0
    %792 = vmatprep.subr.bf16.mxu0 0
    %793 = vmatpush1.bf16.xpose.msra.mxu0 0
    %794 = vmatprep.subr.bf16.mxu0 0
    %795 = vmatpush1.bf16.xpose.msra.mxu0 0
    %796 = vmatprep.subr.bf16.mxu0 0
    %797 = vmatpush1.bf16.xpose.msra.mxu0 0
    %798 = vmatprep.subr.bf16.mxu0 0
    %799 = vmatpush1.bf16.xpose.msra.mxu0 0
    %800 = vmatprep.subr.bf16.mxu0 0
    %801 = vmatpush1.bf16.xpose.msra.mxu0 0
    %802 = vmatprep.subr.bf16.mxu0 0
    %803 = vmatpush1.bf16.xpose.msra.mxu0 0
    %804 = vmatprep.subr.bf16.mxu0 0
    %805 = vmatpush1.bf16.xpose.msra.mxu0 0
    %806 = vmatprep.subr.bf16.mxu0 0
    %807 = vmatpush1.bf16.xpose.msra.mxu0 0
    %808 = vmatprep.mubr.bf16.mxu0 0
    %809 = vmatmul.mubr.bf16.gmra.mrb[0].mxu0 %v771
    %v810 = vpop.f32.mrb[0].mxu0
    %v811 = vadd.f32 0.0, %v810
    %v812 = vpop.f32.mrb[0].mxu0
    %v813 = vpop.f32.mrb[0].mxu0
    %v814 = vpop.f32.mrb[0].mxu0
    %815 = vdwg.mxu0
    %v816 = vmul.f32 %v761, 0.35355338
    %v817 = vmul.f32 %v811, 0.35355338
    %v818 = vadd.f32 %v816, %v260
    %v819 = vadd.f32 %v817, %v264
    %v820 = vsel %vm158, %v818, -inf
    %821 = vmax.xlane.f32.xlu0 %v820
    %v822 = vpop.xlane.xlu0 %821
    %v823 = vsel %vm158, %v819, -inf
    %824 = vmax.xlane.f32.xlu0 %v823
    %v825 = vpop.xlane.xlu0 %824
    %v826 = vsub.f32 %v818, %v822
    %v827 = vsub.f32 %v819, %v825
    %v828 = vmul.f32 %v826, 1.442695
    %v829 = vpow.pop %v828
    %v830 = vmul.f32 %v827, 1.442695
    %v831 = vpow.pop %v830
    %v832 = vsel %vm158, %v829, 0.0
    %833 = vadd.xlane.f32.xlu0 %v832
    %v834 = vpop.xlane.xlu0 %833
    %v835 = vsel %vm158, %v831, 0.0
    %836 = vadd.xlane.f32.xlu0 %v835
    %v837 = vpop.xlane.xlu0 %836
    %v838 = vrcp.pop %v834
    %v839 = vrcp.pop %v837
    %v840 = vmul.f32 %v829, %v838
    %v841 = vmul.f32 %v831, %v839
    %v842 = vpack.c.bf16 %v840, %v840
    %v843 = vpack.c.bf16 %v841, %v841
    %844 = vrot.lane.b32.xlu0 %v154, 48
    %v845 = vpop.permute.xlu0 %844
    %v847 = vsel %vm158, %v842, 0
    %v850 = vsel %vm298, %v845, 0
    %852 = vmatprep.subr.bf16.mxu0 0
    %853 = vmatpush1.bf16.msra.mxu0 %v850
    %854 = vmatprep.subr.bf16.mxu0 0
    %855 = vmatpush1.bf16.msra.mxu0 0
    %856 = vmatprep.subr.bf16.mxu0 0
    %857 = vmatpush1.bf16.msra.mxu0 0
    %858 = vmatprep.subr.bf16.mxu0 0
    %859 = vmatpush1.bf16.msra.mxu0 0
    %860 = vmatprep.subr.bf16.mxu0 0
    %861 = vmatpush1.bf16.msra.mxu0 0
    %862 = vmatprep.subr.bf16.mxu0 0
    %863 = vmatpush1.bf16.msra.mxu0 0
    %864 = vmatprep.subr.bf16.mxu0 0
    %865 = vmatpush1.bf16.msra.mxu0 0
    %866 = vmatprep.subr.bf16.mxu0 0
    %867 = vmatpush1.bf16.msra.mxu0 0
    %868 = vmatprep.subr.bf16.mxu0 0
    %869 = vmatpush1.bf16.msra.mxu0 0
    %870 = vmatprep.subr.bf16.mxu0 0
    %871 = vmatpush1.bf16.msra.mxu0 0
    %872 = vmatprep.subr.bf16.mxu0 0
    %873 = vmatpush1.bf16.msra.mxu0 0
    %874 = vmatprep.subr.bf16.mxu0 0
    %875 = vmatpush1.bf16.msra.mxu0 0
    %876 = vmatprep.subr.bf16.mxu0 0
    %877 = vmatpush1.bf16.msra.mxu0 0
    %878 = vmatprep.subr.bf16.mxu0 0
    %879 = vmatpush1.bf16.msra.mxu0 0
    %880 = vmatprep.subr.bf16.mxu0 0
    %881 = vmatpush1.bf16.msra.mxu0 0
    %882 = vmatprep.subr.bf16.mxu0 0
    %883 = vmatpush1.bf16.msra.mxu0 0
    %884 = vmatprep.mubr.bf16.mxu0 0
    %885 = vmatmul.mubr.bf16.gmra.mrb[0].mxu0 %v847
    %v886 = vpop.f32.mrb[0].mxu0
    %v887 = vadd.f32 0.0, %v886
    %v888 = vpop.f32.mrb[0].mxu0
    %v889 = vpop.f32.mrb[0].mxu0
    %v890 = vpop.f32.mrb[0].mxu0
    %891 = vdwg.mxu0
    %892 = vrot.lane.b32.xlu0 %v155, 48
    %v893 = vpop.permute.xlu0 %892
    %v895 = vsel %vm158, %v843, 0
    %v898 = vsel %vm298, %v893, 0
    %900 = vmatprep.subr.bf16.mxu0 0
    %901 = vmatpush1.bf16.msra.mxu0 %v898
    %902 = vmatprep.subr.bf16.mxu0 0
    %903 = vmatpush1.bf16.msra.mxu0 0
    %904 = vmatprep.subr.bf16.mxu0 0
    %905 = vmatpush1.bf16.msra.mxu0 0
    %906 = vmatprep.subr.bf16.mxu0 0
    %907 = vmatpush1.bf16.msra.mxu0 0
    %908 = vmatprep.subr.bf16.mxu0 0
    %909 = vmatpush1.bf16.msra.mxu0 0
    %910 = vmatprep.subr.bf16.mxu0 0
    %911 = vmatpush1.bf16.msra.mxu0 0
    %912 = vmatprep.subr.bf16.mxu0 0
    %913 = vmatpush1.bf16.msra.mxu0 0
    %914 = vmatprep.subr.bf16.mxu0 0
    %915 = vmatpush1.bf16.msra.mxu0 0
    %916 = vmatprep.subr.bf16.mxu0 0
    %917 = vmatpush1.bf16.msra.mxu0 0
    %918 = vmatprep.subr.bf16.mxu0 0
    %919 = vmatpush1.bf16.msra.mxu0 0
    %920 = vmatprep.subr.bf16.mxu0 0
    %921 = vmatpush1.bf16.msra.mxu0 0
    %922 = vmatprep.subr.bf16.mxu0 0
    %923 = vmatpush1.bf16.msra.mxu0 0
    %924 = vmatprep.subr.bf16.mxu0 0
    %925 = vmatpush1.bf16.msra.mxu0 0
    %926 = vmatprep.subr.bf16.mxu0 0
    %927 = vmatpush1.bf16.msra.mxu0 0
    %928 = vmatprep.subr.bf16.mxu0 0
    %929 = vmatpush1.bf16.msra.mxu0 0
    %930 = vmatprep.subr.bf16.mxu0 0
    %931 = vmatpush1.bf16.msra.mxu0 0
    %932 = vmatprep.mubr.bf16.mxu0 0
    %933 = vmatmul.mubr.bf16.gmra.mrb[0].mxu0 %v895
    %v934 = vpop.f32.mrb[0].mxu0
    %v935 = vadd.f32 0.0, %v934
    %v936 = vpop.f32.mrb[0].mxu0
    %v937 = vpop.f32.mrb[0].mxu0
    %v938 = vpop.f32.mrb[0].mxu0
    %939 = vdwg.mxu0
    %v940 = vpack.c.bf16 %v935, %v887
    %v941 = vpack.c.b16 %v100, %v100
    %942 = vrot.lane.b32.xlu0 %v941, 32
    %v943 = vpop.permute.xlu0 %942
    %v945 = vsel %vm158, %v940, 0
    %v948 = vsel %vm298, %v943, 0
    %950 = vmatprep.subr.bf16.mxu0 0
    %951 = vmatpush1.bf16.msra.mxu0 %v948
    %952 = vmatprep.subr.bf16.mxu0 0
    %953 = vmatpush1.bf16.msra.mxu0 0
    %954 = vmatprep.subr.bf16.mxu0 0
    %955 = vmatpush1.bf16.msra.mxu0 0
    %956 = vmatprep.subr.bf16.mxu0 0
    %957 = vmatpush1.bf16.msra.mxu0 0
    %958 = vmatprep.subr.bf16.mxu0 0
    %959 = vmatpush1.bf16.msra.mxu0 0
    %960 = vmatprep.subr.bf16.mxu0 0
    %961 = vmatpush1.bf16.msra.mxu0 0
    %962 = vmatprep.subr.bf16.mxu0 0
    %963 = vmatpush1.bf16.msra.mxu0 0
    %964 = vmatprep.subr.bf16.mxu0 0
    %965 = vmatpush1.bf16.msra.mxu0 0
    %966 = vmatprep.subr.bf16.mxu0 0
    %967 = vmatpush1.bf16.msra.mxu0 0
    %968 = vmatprep.subr.bf16.mxu0 0
    %969 = vmatpush1.bf16.msra.mxu0 0
    %970 = vmatprep.subr.bf16.mxu0 0
    %971 = vmatpush1.bf16.msra.mxu0 0
    %972 = vmatprep.subr.bf16.mxu0 0
    %973 = vmatpush1.bf16.msra.mxu0 0
    %974 = vmatprep.subr.bf16.mxu0 0
    %975 = vmatpush1.bf16.msra.mxu0 0
    %976 = vmatprep.subr.bf16.mxu0 0
    %977 = vmatpush1.bf16.msra.mxu0 0
    %978 = vmatprep.subr.bf16.mxu0 0
    %979 = vmatpush1.bf16.msra.mxu0 0
    %980 = vmatprep.subr.bf16.mxu0 0
    %981 = vmatpush1.bf16.msra.mxu0 0
    %982 = vmatprep.mubr.bf16.mxu0 0
    %983 = vmatmul.mubr.bf16.gmra.mrb[0].mxu0 %v945
    %v984 = vpop.f32.mrb[0].mxu0
    %v985 = vadd.f32 0.0, %v984
    %v986 = vpop.f32.mrb[0].mxu0
    %v987 = vpop.f32.mrb[0].mxu0
    %v988 = vadd.f32 0.0, %v987
    %v989 = vpop.f32.mrb[0].mxu0
    %990 = vdwg.mxu0
    %v991 = vadd.f32 %v710, %v985
    %v992 = vadd.f32 %v713, %v988
    %993 = vrot.lane.b32.xlu0 %v154, 104
    %v994 = vpop.permute.xlu0 %993
    %995 = vrot.lane.b32.xlu0 %v154, 72
    %v996 = vpop.permute.xlu0 %995
    %v998 = vsel %vm158, %v994, 0
    %v1001 = vsel %vm158, %v996, 0
    %1003 = vmatprep.subr.bf16.mxu0 0
    %1004 = vmatpush1.bf16.xpose.msra.mxu0 %v1001
    %1005 = vmatprep.subr.bf16.mxu0 0
    %1006 = vmatpush1.bf16.xpose.msra.mxu0 0
    %1007 = vmatprep.subr.bf16.mxu0 0
    %1008 = vmatpush1.bf16.xpose.msra.mxu0 0
    %1009 = vmatprep.subr.bf16.mxu0 0
    %1010 = vmatpush1.bf16.xpose.msra.mxu0 0
    %1011 = vmatprep.subr.bf16.mxu0 0
    %1012 = vmatpush1.bf16.xpose.msra.mxu0 0
    %1013 = vmatprep.subr.bf16.mxu0 0
    %1014 = vmatpush1.bf16.xpose.msra.mxu0 0
    %1015 = vmatprep.subr.bf16.mxu0 0
    %1016 = vmatpush1.bf16.xpose.msra.mxu0 0
    %1017 = vmatprep.subr.bf16.mxu0 0
    %1018 = vmatpush1.bf16.xpose.msra.mxu0 0
    %1019 = vmatprep.subr.bf16.mxu0 0
    %1020 = vmatpush1.bf16.xpose.msra.mxu0 0
    %1021 = vmatprep.subr.bf16.mxu0 0
    %1022 = vmatpush1.bf16.xpose.msra.mxu0 0
    %1023 = vmatprep.subr.bf16.mxu0 0
    %1024 = vmatpush1.bf16.xpose.msra.mxu0 0
    %1025 = vmatprep.subr.bf16.mxu0 0
    %1026 = vmatpush1.bf16.xpose.msra.mxu0 0
    %1027 = vmatprep.subr.bf16.mxu0 0
    %1028 = vmatpush1.bf16.xpose.msra.mxu0 0
    %1029 = vmatprep.subr.bf16.mxu0 0
    %1030 = vmatpush1.bf16.xpose.msra.mxu0 0
    %1031 = vmatprep.subr.bf16.mxu0 0
    %1032 = vmatpush1.bf16.xpose.msra.mxu0 0
    %1033 = vmatprep.subr.bf16.mxu0 0
    %1034 = vmatpush1.bf16.xpose.msra.mxu0 0
    %1035 = vmatprep.mubr.bf16.mxu0 0
    %1036 = vmatmul.mubr.bf16.gmra.mrb[0].mxu0 %v998
    %v1037 = vpop.f32.mrb[0].mxu0
    %v1038 = vadd.f32 0.0, %v1037
    %v1039 = vpop.f32.mrb[0].mxu0
    %v1040 = vpop.f32.mrb[0].mxu0
    %v1041 = vpop.f32.mrb[0].mxu0
    %1042 = vdwg.mxu0
    %1043 = vrot.lane.b32.xlu0 %v155, 104
    %v1044 = vpop.permute.xlu0 %1043
    %1045 = vrot.lane.b32.xlu0 %v155, 72
    %v1046 = vpop.permute.xlu0 %1045
    %v1048 = vsel %vm158, %v1044, 0
    %v1051 = vsel %vm158, %v1046, 0
    %1053 = vmatprep.subr.bf16.mxu0 0
    %1054 = vmatpush1.bf16.xpose.msra.mxu0 %v1051
    %1055 = vmatprep.subr.bf16.mxu0 0
    %1056 = vmatpush1.bf16.xpose.msra.mxu0 0
    %1057 = vmatprep.subr.bf16.mxu0 0
    %1058 = vmatpush1.bf16.xpose.msra.mxu0 0
    %1059 = vmatprep.subr.bf16.mxu0 0
    %1060 = vmatpush1.bf16.xpose.msra.mxu0 0
    %1061 = vmatprep.subr.bf16.mxu0 0
    %1062 = vmatpush1.bf16.xpose.msra.mxu0 0
    %1063 = vmatprep.subr.bf16.mxu0 0
    %1064 = vmatpush1.bf16.xpose.msra.mxu0 0
    %1065 = vmatprep.subr.bf16.mxu0 0
    %1066 = vmatpush1.bf16.xpose.msra.mxu0 0
    %1067 = vmatprep.subr.bf16.mxu0 0
    %1068 = vmatpush1.bf16.xpose.msra.mxu0 0
    %1069 = vmatprep.subr.bf16.mxu0 0
    %1070 = vmatpush1.bf16.xpose.msra.mxu0 0
    %1071 = vmatprep.subr.bf16.mxu0 0
    %1072 = vmatpush1.bf16.xpose.msra.mxu0 0
    %1073 = vmatprep.subr.bf16.mxu0 0
    %1074 = vmatpush1.bf16.xpose.msra.mxu0 0
    %1075 = vmatprep.subr.bf16.mxu0 0
    %1076 = vmatpush1.bf16.xpose.msra.mxu0 0
    %1077 = vmatprep.subr.bf16.mxu0 0
    %1078 = vmatpush1.bf16.xpose.msra.mxu0 0
    %1079 = vmatprep.subr.bf16.mxu0 0
    %1080 = vmatpush1.bf16.xpose.msra.mxu0 0
    %1081 = vmatprep.subr.bf16.mxu0 0
    %1082 = vmatpush1.bf16.xpose.msra.mxu0 0
    %1083 = vmatprep.subr.bf16.mxu0 0
    %1084 = vmatpush1.bf16.xpose.msra.mxu0 0
    %1085 = vmatprep.mubr.bf16.mxu0 0
    %1086 = vmatmul.mubr.bf16.gmra.mrb[0].mxu0 %v1048
    %v1087 = vpop.f32.mrb[0].mxu0
    %v1088 = vadd.f32 0.0, %v1087
    %v1089 = vpop.f32.mrb[0].mxu0
    %v1090 = vpop.f32.mrb[0].mxu0
    %v1091 = vpop.f32.mrb[0].mxu0
    %1092 = vdwg.mxu0
    %v1093 = vmul.f32 %v1038, 0.35355338
    %v1094 = vmul.f32 %v1088, 0.35355338
    %v1095 = vadd.f32 %v1093, %v260
    %v1096 = vadd.f32 %v1094, %v264
    %v1097 = vsel %vm158, %v1095, -inf
    %1098 = vmax.xlane.f32.xlu0 %v1097
    %v1099 = vpop.xlane.xlu0 %1098
    %v1100 = vsel %vm158, %v1096, -inf
    %1101 = vmax.xlane.f32.xlu0 %v1100
    %v1102 = vpop.xlane.xlu0 %1101
    %v1103 = vsub.f32 %v1095, %v1099
    %v1104 = vsub.f32 %v1096, %v1102
    %v1105 = vmul.f32 %v1103, 1.442695
    %v1106 = vpow.pop %v1105
    %v1107 = vmul.f32 %v1104, 1.442695
    %v1108 = vpow.pop %v1107
    %v1109 = vsel %vm158, %v1106, 0.0
    %1110 = vadd.xlane.f32.xlu0 %v1109
    %v1111 = vpop.xlane.xlu0 %1110
    %v1112 = vsel %vm158, %v1108, 0.0
    %1113 = vadd.xlane.f32.xlu0 %v1112
    %v1114 = vpop.xlane.xlu0 %1113
    %v1115 = vrcp.pop %v1111
    %v1116 = vrcp.pop %v1114
    %v1117 = vmul.f32 %v1106, %v1115
    %v1118 = vmul.f32 %v1108, %v1116
    %v1119 = vpack.c.bf16 %v1117, %v1117
    %v1120 = vpack.c.bf16 %v1118, %v1118
    %1121 = vrot.lane.b32.xlu0 %v154, 40
    %v1122 = vpop.permute.xlu0 %1121
    %v1124 = vsel %vm158, %v1119, 0
    %v1127 = vsel %vm298, %v1122, 0
    %1129 = vmatprep.subr.bf16.mxu0 0
    %1130 = vmatpush1.bf16.msra.mxu0 %v1127
    %1131 = vmatprep.subr.bf16.mxu0 0
    %1132 = vmatpush1.bf16.msra.mxu0 0
    %1133 = vmatprep.subr.bf16.mxu0 0
    %1134 = vmatpush1.bf16.msra.mxu0 0
    %1135 = vmatprep.subr.bf16.mxu0 0
    %1136 = vmatpush1.bf16.msra.mxu0 0
    %1137 = vmatprep.subr.bf16.mxu0 0
    %1138 = vmatpush1.bf16.msra.mxu0 0
    %1139 = vmatprep.subr.bf16.mxu0 0
    %1140 = vmatpush1.bf16.msra.mxu0 0
    %1141 = vmatprep.subr.bf16.mxu0 0
    %1142 = vmatpush1.bf16.msra.mxu0 0
    %1143 = vmatprep.subr.bf16.mxu0 0
    %1144 = vmatpush1.bf16.msra.mxu0 0
    %1145 = vmatprep.subr.bf16.mxu0 0
    %1146 = vmatpush1.bf16.msra.mxu0 0
    %1147 = vmatprep.subr.bf16.mxu0 0
    %1148 = vmatpush1.bf16.msra.mxu0 0
    %1149 = vmatprep.subr.bf16.mxu0 0
    %1150 = vmatpush1.bf16.msra.mxu0 0
    %1151 = vmatprep.subr.bf16.mxu0 0
    %1152 = vmatpush1.bf16.msra.mxu0 0
    %1153 = vmatprep.subr.bf16.mxu0 0
    %1154 = vmatpush1.bf16.msra.mxu0 0
    %1155 = vmatprep.subr.bf16.mxu0 0
    %1156 = vmatpush1.bf16.msra.mxu0 0
    %1157 = vmatprep.subr.bf16.mxu0 0
    %1158 = vmatpush1.bf16.msra.mxu0 0
    %1159 = vmatprep.subr.bf16.mxu0 0
    %1160 = vmatpush1.bf16.msra.mxu0 0
    %1161 = vmatprep.mubr.bf16.mxu0 0
    %1162 = vmatmul.mubr.bf16.gmra.mrb[0].mxu0 %v1124
    %v1163 = vpop.f32.mrb[0].mxu0
    %v1164 = vadd.f32 0.0, %v1163
    %v1165 = vpop.f32.mrb[0].mxu0
    %v1166 = vpop.f32.mrb[0].mxu0
    %v1167 = vpop.f32.mrb[0].mxu0
    %1168 = vdwg.mxu0
    %1169 = vrot.lane.b32.xlu0 %v155, 40
    %v1170 = vpop.permute.xlu0 %1169
    %v1172 = vsel %vm158, %v1120, 0
    %v1175 = vsel %vm298, %v1170, 0
    %1177 = vmatprep.subr.bf16.mxu0 0
    %1178 = vmatpush1.bf16.msra.mxu0 %v1175
    %1179 = vmatprep.subr.bf16.mxu0 0
    %1180 = vmatpush1.bf16.msra.mxu0 0
    %1181 = vmatprep.subr.bf16.mxu0 0
    %1182 = vmatpush1.bf16.msra.mxu0 0
    %1183 = vmatprep.subr.bf16.mxu0 0
    %1184 = vmatpush1.bf16.msra.mxu0 0
    %1185 = vmatprep.subr.bf16.mxu0 0
    %1186 = vmatpush1.bf16.msra.mxu0 0
    %1187 = vmatprep.subr.bf16.mxu0 0
    %1188 = vmatpush1.bf16.msra.mxu0 0
    %1189 = vmatprep.subr.bf16.mxu0 0
    %1190 = vmatpush1.bf16.msra.mxu0 0
    %1191 = vmatprep.subr.bf16.mxu0 0
    %1192 = vmatpush1.bf16.msra.mxu0 0
    %1193 = vmatprep.subr.bf16.mxu0 0
    %1194 = vmatpush1.bf16.msra.mxu0 0
    %1195 = vmatprep.subr.bf16.mxu0 0
    %1196 = vmatpush1.bf16.msra.mxu0 0
    %1197 = vmatprep.subr.bf16.mxu0 0
    %1198 = vmatpush1.bf16.msra.mxu0 0
    %1199 = vmatprep.subr.bf16.mxu0 0
    %1200 = vmatpush1.bf16.msra.mxu0 0
    %1201 = vmatprep.subr.bf16.mxu0 0
    %1202 = vmatpush1.bf16.msra.mxu0 0
    %1203 = vmatprep.subr.bf16.mxu0 0
    %1204 = vmatpush1.bf16.msra.mxu0 0
    %1205 = vmatprep.subr.bf16.mxu0 0
    %1206 = vmatpush1.bf16.msra.mxu0 0
    %1207 = vmatprep.subr.bf16.mxu0 0
    %1208 = vmatpush1.bf16.msra.mxu0 0
    %1209 = vmatprep.mubr.bf16.mxu0 0
    %1210 = vmatmul.mubr.bf16.gmra.mrb[0].mxu0 %v1172
    %v1211 = vpop.f32.mrb[0].mxu0
    %v1212 = vadd.f32 0.0, %v1211
    %v1213 = vpop.f32.mrb[0].mxu0
    %v1214 = vpop.f32.mrb[0].mxu0
    %v1215 = vpop.f32.mrb[0].mxu0
    %1216 = vdwg.mxu0
    %v1217 = vpack.c.bf16 %v1212, %v1164
    %v1218 = vpack.c.b16 %v101, %v101
    %1219 = vrot.lane.b32.xlu0 %v1218, 32
    %v1220 = vpop.permute.xlu0 %1219
    %v1222 = vsel %vm158, %v1217, 0
    %v1225 = vsel %vm298, %v1220, 0
    %1227 = vmatprep.subr.bf16.mxu0 0
    %1228 = vmatpush1.bf16.msra.mxu0 %v1225
    %1229 = vmatprep.subr.bf16.mxu0 0
    %1230 = vmatpush1.bf16.msra.mxu0 0
    %1231 = vmatprep.subr.bf16.mxu0 0
    %1232 = vmatpush1.bf16.msra.mxu0 0
    %1233 = vmatprep.subr.bf16.mxu0 0
    %1234 = vmatpush1.bf16.msra.mxu0 0
    %1235 = vmatprep.subr.bf16.mxu0 0
    %1236 = vmatpush1.bf16.msra.mxu0 0
    %1237 = vmatprep.subr.bf16.mxu0 0
    %1238 = vmatpush1.bf16.msra.mxu0 0
    %1239 = vmatprep.subr.bf16.mxu0 0
    %1240 = vmatpush1.bf16.msra.mxu0 0
    %1241 = vmatprep.subr.bf16.mxu0 0
    %1242 = vmatpush1.bf16.msra.mxu0 0
    %1243 = vmatprep.subr.bf16.mxu0 0
    %1244 = vmatpush1.bf16.msra.mxu0 0
    %1245 = vmatprep.subr.bf16.mxu0 0
    %1246 = vmatpush1.bf16.msra.mxu0 0
    %1247 = vmatprep.subr.bf16.mxu0 0
    %1248 = vmatpush1.bf16.msra.mxu0 0
    %1249 = vmatprep.subr.bf16.mxu0 0
    %1250 = vmatpush1.bf16.msra.mxu0 0
    %1251 = vmatprep.subr.bf16.mxu0 0
    %1252 = vmatpush1.bf16.msra.mxu0 0
    %1253 = vmatprep.subr.bf16.mxu0 0
    %1254 = vmatpush1.bf16.msra.mxu0 0
    %1255 = vmatprep.subr.bf16.mxu0 0
    %1256 = vmatpush1.bf16.msra.mxu0 0
    %1257 = vmatprep.subr.bf16.mxu0 0
    %1258 = vmatpush1.bf16.msra.mxu0 0
    %1259 = vmatprep.mubr.bf16.mxu0 0
    %1260 = vmatmul.mubr.bf16.gmra.mrb[0].mxu0 %v1222
    %v1261 = vpop.f32.mrb[0].mxu0
    %v1262 = vadd.f32 0.0, %v1261
    %v1263 = vpop.f32.mrb[0].mxu0
    %v1264 = vpop.f32.mrb[0].mxu0
    %v1265 = vadd.f32 0.0, %v1264
    %v1266 = vpop.f32.mrb[0].mxu0
    %1267 = vdwg.mxu0
    %v1268 = vadd.f32 %v991, %v1262
    %v1269 = vadd.f32 %v992, %v1265
    %v1270 = vlaneseq
    %v1271 = vshrl.u32 %v1270, 7
    %v1272 = vsub.s32 1, %v1271
    %v1273 = vrot.slane %v88, %v1272
    %v1274 = vadd.f32 %v1268, %v1273
    %v1275 = vadd.f32 %v1269, %v1273
    %v1276 = vadd.f32 %v1274, %v72
    %v1277 = vadd.f32 %v1275, %v73
    %v1278 = vsel %vm34, %v1276, 0.0
    %1279 = vadd.xlane.f32.xlu0 %v1278
    %v1280 = vpop.xlane.xlu0 %1279
    %v1281 = vsel %vm34, %v1277, 0.0
    %1282 = vadd.xlane.f32.xlu0 %v1281
    %v1283 = vpop.xlane.xlu0 %1282
    %v1284 = vmul.f32 %v1280, %v41
    %v1285 = vmul.f32 %v1283, %v41
    %v1286 = vsub.f32 %v1276, %v1284
    %v1287 = vsub.f32 %v1277, %v1285
    %v1288 = vmul.f32 %v1286, %v1286
    %v1289 = vmul.f32 %v1287, %v1287
    %v1290 = vsel %vm34, %v1288, 0.0
    %1291 = vadd.xlane.f32.xlu0 %v1290
    %v1292 = vpop.xlane.xlu0 %1291
    %v1293 = vsel %vm34, %v1289, 0.0
    %1294 = vadd.xlane.f32.xlu0 %v1293
    %v1295 = vpop.xlane.xlu0 %1294
    %v1296 = vmul.f32 %v1292, %v41
    %v1297 = vmul.f32 %v1295, %v41
    %v1298 = vadd.f32 %v1296, 1e-12
    %v1299 = vadd.f32 %v1297, 1e-12
    %v1300 = vrsqrt.pop %v1298
    %v1301 = vrsqrt.pop %v1299
    %v1302 = vmul.f32 %v1286, %v1300
    %v1303 = vmul.f32 %v1287, %v1301
    %v1304 = vlaneseq
    %v1305 = vshrl.u32 %v1304, 7
    %v1306 = vsub.s32 2, %v1305
    %v1307 = vrot.slane %v88, %v1306
    %v1308 = vmul.f32 %v1302, %v1307
    %v1309 = vmul.f32 %v1303, %v1307
    %v1310 = vlaneseq
    %v1311 = vshrl.u32 %v1310, 7
    %v1312 = vsub.s32 3, %v1311
    %v1313 = vrot.slane %v88, %v1312
    %v1314 = vadd.f32 %v1308, %v1313
    %v1315 = vadd.f32 %v1309, %v1313
    %v1316 = vpack.c.bf16 %v1315, %v1314
    %v1317 = vlaneseq
    %v1318 = vshrl.u32 %v1317, 7
    %v1319 = vsub.s32 4, %v1318
    %v1320 = vrot.slane %v88, %v1319
    %v1321 = vunpack.c.h.b16 %v76
    %v1322 = vunpack.c.h.b16 %v77
    %v1323 = vunpack.c.h.b16 %v78
    %v1324 = vunpack.c.h.b16 %v79
    %v1325 = vpack.c.b16 %v1322, %v1321
    %v1326 = vpack.c.b16 %v1324, %v1323
    %v1330 = vsel %vm34, %v1316, 0
    %1332 = vmatprep.subr.bf16.mxu0 0
    %1333 = vmatpush1.bf16.msra.mxu0 %v1325
    %1334 = vmatprep.subr.bf16.mxu0 0
    %1335 = vmatpush1.bf16.msra.mxu0 %v1326
    %1336 = vmatprep.subr.bf16.mxu0 0
    %1337 = vmatpush1.bf16.msra.mxu0 0
    %1338 = vmatprep.subr.bf16.mxu0 0
    %1339 = vmatpush1.bf16.msra.mxu0 0
    %1340 = vmatprep.subr.bf16.mxu0 0
    %1341 = vmatpush1.bf16.msra.mxu0 0
    %1342 = vmatprep.subr.bf16.mxu0 0
    %1343 = vmatpush1.bf16.msra.mxu0 0
    %1344 = vmatprep.subr.bf16.mxu0 0
    %1345 = vmatpush1.bf16.msra.mxu0 0
    %1346 = vmatprep.subr.bf16.mxu0 0
    %1347 = vmatpush1.bf16.msra.mxu0 0
    %1348 = vmatprep.subr.bf16.mxu0 0
    %1349 = vmatpush1.bf16.msra.mxu0 0
    %1350 = vmatprep.subr.bf16.mxu0 0
    %1351 = vmatpush1.bf16.msra.mxu0 0
    %1352 = vmatprep.subr.bf16.mxu0 0
    %1353 = vmatpush1.bf16.msra.mxu0 0
    %1354 = vmatprep.subr.bf16.mxu0 0
    %1355 = vmatpush1.bf16.msra.mxu0 0
    %1356 = vmatprep.subr.bf16.mxu0 0
    %1357 = vmatpush1.bf16.msra.mxu0 0
    %1358 = vmatprep.subr.bf16.mxu0 0
    %1359 = vmatpush1.bf16.msra.mxu0 0
    %1360 = vmatprep.subr.bf16.mxu0 0
    %1361 = vmatpush1.bf16.msra.mxu0 0
    %1362 = vmatprep.subr.bf16.mxu0 0
    %1363 = vmatpush1.bf16.msra.mxu0 0
    %1364 = vmatprep.mubr.bf16.mxu0 0
    %1365 = vmatmul.mubr.bf16.gmra.mrb[0].mxu0 %v1330
    %v1366 = vpop.f32.mrb[0].mxu0
    %v1367 = vadd.f32 %v1320, %v1366
    %v1368 = vpop.f32.mrb[0].mxu0
    %v1369 = vpop.f32.mrb[0].mxu0
    %v1370 = vadd.f32 %v1320, %v1369
    %v1371 = vpop.f32.mrb[0].mxu0
    %1372 = vdwg.mxu0
    %v1373 = vmul.f32 %v1367, 0.5
    %v1374 = vmul.f32 %v1370, 0.5
    %v1375 = vmul.f32 %v1367, 0.044715
    %v1376 = vmul.f32 %v1370, 0.044715
    %v1377 = vmul.f32 %v1375, %v1367
    %v1378 = vmul.f32 %v1376, %v1370
    %v1379 = vmul.f32 %v1377, %v1367
    %v1380 = vmul.f32 %v1378, %v1370
    %v1381 = vadd.f32 %v1367, %v1379
    %v1382 = vadd.f32 %v1370, %v1380
    %v1383 = vmul.f32 %v1381, 0.7978846
    %v1384 = vmul.f32 %v1382, 0.7978846
    %v1385 = vtanh.pop %v1383
    %v1386 = vtanh.pop %v1384
    %v1387 = vadd.f32 %v1385, 1.0
    %v1388 = vadd.f32 %v1386, 1.0
    %v1389 = vmul.f32 %v1373, %v1387
    %v1390 = vmul.f32 %v1374, %v1388
    %v1391 = vpack.c.bf16 %v1390, %v1389
    %v1392 = vlaneseq
    %v1393 = vshrl.u32 %v1392, 7
    %v1394 = vsub.s32 5, %v1393
    %v1395 = vrot.slane %v88, %v1394
    %v1404 = vunpack.c.l.b16 %v80
    %v1405 = vunpack.c.l.b16 %v81
    %v1406 = vunpack.c.l.b16 %v82
    %v1407 = vunpack.c.l.b16 %v83
    %v1408 = vunpack.c.l.b16 %v84
    %v1409 = vunpack.c.l.b16 %v85
    %v1410 = vunpack.c.l.b16 %v86
    %v1411 = vunpack.c.l.b16 %v87
    %v1412 = vpack.c.b16 %v1405, %v1404
    %v1413 = vpack.c.b16 %v1407, %v1406
    %v1414 = vpack.c.b16 %v1409, %v1408
    %v1415 = vpack.c.b16 %v1411, %v1410
    %vm1420 = vcmask 523264
    %v1422 = vsel %vm1420, %v1391, 0
    %1424 = vmatprep.subr.bf16.mxu0 0
    %1425 = vmatpush1.bf16.msra.mxu0 %v1412
    %1426 = vmatprep.subr.bf16.mxu0 0
    %1427 = vmatpush1.bf16.msra.mxu0 %v1413
    %1428 = vmatprep.subr.bf16.mxu0 0
    %1429 = vmatpush1.bf16.msra.mxu0 %v1414
    %1430 = vmatprep.subr.bf16.mxu0 0
    %1431 = vmatpush1.bf16.msra.mxu0 %v1415
    %1432 = vmatprep.subr.bf16.mxu0 0
    %1433 = vmatpush1.bf16.msra.mxu0 0
    %1434 = vmatprep.subr.bf16.mxu0 0
    %1435 = vmatpush1.bf16.msra.mxu0 0
    %1436 = vmatprep.subr.bf16.mxu0 0
    %1437 = vmatpush1.bf16.msra.mxu0 0
    %1438 = vmatprep.subr.bf16.mxu0 0
    %1439 = vmatpush1.bf16.msra.mxu0 0
    %1440 = vmatprep.subr.bf16.mxu0 0
    %1441 = vmatpush1.bf16.msra.mxu0 0
    %1442 = vmatprep.subr.bf16.mxu0 0
    %1443 = vmatpush1.bf16.msra.mxu0 0
    %1444 = vmatprep.subr.bf16.mxu0 0
    %1445 = vmatpush1.bf16.msra.mxu0 0
    %1446 = vmatprep.subr.bf16.mxu0 0
    %1447 = vmatpush1.bf16.msra.mxu0 0
    %1448 = vmatprep.subr.bf16.mxu0 0
    %1449 = vmatpush1.bf16.msra.mxu0 0
    %1450 = vmatprep.subr.bf16.mxu0 0
    %1451 = vmatpush1.bf16.msra.mxu0 0
    %1452 = vmatprep.subr.bf16.mxu0 0
    %1453 = vmatpush1.bf16.msra.mxu0 0
    %1454 = vmatprep.subr.bf16.mxu0 0
    %1455 = vmatpush1.bf16.msra.mxu0 0
    %1456 = vmatprep.mubr.bf16.mxu0 0
    %1457 = vmatmul.mubr.bf16.gmra.mrb[0].mxu0 %v1422
    %v1458 = vpop.f32.mrb[0].mxu0
    %v1459 = vadd.f32 %v1395, %v1458
    %v1460 = vpop.f32.mrb[0].mxu0
    %v1461 = vpop.f32.mrb[0].mxu0
    %v1462 = vadd.f32 %v1395, %v1461
    %v1463 = vpop.f32.mrb[0].mxu0
    %1464 = vdwg.mxu0
    %v1465 = vadd.f32 %v1459, %v1314
    %v1466 = vadd.f32 %v1462, %v1315
    %v1467 = vsel %vm34, %v1465, 0.0
    %1468 = vadd.xlane.f32.xlu0 %v1467
    %v1469 = vpop.xlane.xlu0 %1468
    %v1470 = vsel %vm34, %v1466, 0.0
    %1471 = vadd.xlane.f32.xlu0 %v1470
    %v1472 = vpop.xlane.xlu0 %1471
    %v1473 = vmul.f32 %v1469, %v41
    %v1474 = vmul.f32 %v1472, %v41
    %v1475 = vsub.f32 %v1465, %v1473
    %v1476 = vsub.f32 %v1466, %v1474
    %v1477 = vmul.f32 %v1475, %v1475
    %v1478 = vmul.f32 %v1476, %v1476
    %v1479 = vsel %vm34, %v1477, 0.0
    %1480 = vadd.xlane.f32.xlu0 %v1479
    %v1481 = vpop.xlane.xlu0 %1480
    %v1482 = vsel %vm34, %v1478, 0.0
    %1483 = vadd.xlane.f32.xlu0 %v1482
    %v1484 = vpop.xlane.xlu0 %1483
    %v1485 = vmul.f32 %v1481, %v41
    %v1486 = vmul.f32 %v1484, %v41
    %v1487 = vadd.f32 %v1485, 1e-12
    %v1488 = vadd.f32 %v1486, 1e-12
    %v1489 = vrsqrt.pop %v1487
    %v1490 = vrsqrt.pop %v1488
    %v1491 = vmul.f32 %v1475, %v1489
    %v1492 = vmul.f32 %v1476, %v1490
    %v1493 = vlaneseq
    %v1494 = vshrl.u32 %v1493, 7
    %v1495 = vsub.s32 6, %v1494
    %v1496 = vrot.slane %v88, %v1495
    %v1497 = vmul.f32 %v1491, %v1496
    %v1498 = vmul.f32 %v1492, %v1496
    %v1499 = vlaneseq
    %v1500 = vshrl.u32 %v1499, 7
    %v1501 = vsub.s32 7, %v1500
    %v1502 = vrot.slane %v88, %v1501
    %v1503 = vadd.f32 %v1497, %v1502
    %v1504 = vadd.f32 %v1498, %v1502
    %s1505 = scalar_lea.vmem %s4, 32
    %v1506 = vld [vmem:[%s1505] sm:$0xff]
    %v1507 = vld [vmem:[%s1505 + $0x8] sm:$0xff]
    %v1508 = vld [vmem:[%s1505 + $0x10] sm:$0xff]
    %v1509 = vld [vmem:[%s1505 + $0x18] sm:$0xff]
    %s1510 = scalar_lea.vmem %s5, 32
    %v1511 = vld [vmem:[%s1510] sm:$0xf]
    %v1512 = vld [vmem:[%s1510 + $0x4] sm:$0xf]
    %v1513 = vld [vmem:[%s1510 + $0x8] sm:$0xf]
    %v1514 = vld [vmem:[%s1510 + $0xc] sm:$0xf]
    %v1515 = vld [vmem:[%s1510 + $0x10] sm:$0xf]
    %v1516 = vld [vmem:[%s1510 + $0x14] sm:$0xf]
    %v1517 = vld [vmem:[%s1510 + $0x18] sm:$0xf]
    %v1518 = vld [vmem:[%s1510 + $0x1c] sm:$0xf]
    %s1519 = scalar_lea.vmem %s3, 8
    %v1520 = vld [vmem:[%s1519] sm:$0xff]
    %v1521 = vpack.c.bf16 %v1504, %v1503
    %v1522 = vlaneseq
    %v1523 = vshrl.u32 %v1522, 7
    %v1524 = vsub.s32 0, %v1523
    %v1525 = vrot.slane %v1520, %v1524
    %v1530 = vunpack.c.l.b16 %v1506
    %v1531 = vunpack.c.l.b16 %v1507
    %v1532 = vunpack.c.l.b16 %v1508
    %v1533 = vunpack.c.l.b16 %v1509
    %v1534 = vpack.c.b16 %v1531, %v1530
    %v1535 = vpack.c.b16 %v1533, %v1532
    %v1539 = vsel %vm34, %v1521, 0
    %1541 = vmatprep.subr.bf16.mxu0 0
    %1542 = vmatpush1.bf16.msra.mxu0 %v1534
    %1543 = vmatprep.subr.bf16.mxu0 0
    %1544 = vmatpush1.bf16.msra.mxu0 %v1535
    %1545 = vmatprep.subr.bf16.mxu0 0
    %1546 = vmatpush1.bf16.msra.mxu0 0
    %1547 = vmatprep.subr.bf16.mxu0 0
    %1548 = vmatpush1.bf16.msra.mxu0 0
    %1549 = vmatprep.subr.bf16.mxu0 0
    %1550 = vmatpush1.bf16.msra.mxu0 0
    %1551 = vmatprep.subr.bf16.mxu0 0
    %1552 = vmatpush1.bf16.msra.mxu0 0
    %1553 = vmatprep.subr.bf16.mxu0 0
    %1554 = vmatpush1.bf16.msra.mxu0 0
    %1555 = vmatprep.subr.bf16.mxu0 0
    %1556 = vmatpush1.bf16.msra.mxu0 0
    %1557 = vmatprep.subr.bf16.mxu0 0
    %1558 = vmatpush1.bf16.msra.mxu0 0
    %1559 = vmatprep.subr.bf16.mxu0 0
    %1560 = vmatpush1.bf16.msra.mxu0 0
    %1561 = vmatprep.subr.bf16.mxu0 0
    %1562 = vmatpush1.bf16.msra.mxu0 0
    %1563 = vmatprep.subr.bf16.mxu0 0
    %1564 = vmatpush1.bf16.msra.mxu0 0
    %1565 = vmatprep.subr.bf16.mxu0 0
    %1566 = vmatpush1.bf16.msra.mxu0 0
    %1567 = vmatprep.subr.bf16.mxu0 0
    %1568 = vmatpush1.bf16.msra.mxu0 0
    %1569 = vmatprep.subr.bf16.mxu0 0
    %1570 = vmatpush1.bf16.msra.mxu0 0
    %1571 = vmatprep.subr.bf16.mxu0 0
    %1572 = vmatpush1.bf16.msra.mxu0 0
    %1573 = vmatprep.mubr.bf16.mxu0 0
    %1574 = vmatmul.mubr.bf16.gmra.mrb[0].mxu0 %v1539
    %v1575 = vpop.f32.mrb[0].mxu0
    %v1576 = vadd.f32 %v1525, %v1575
    %v1577 = vpop.f32.mrb[0].mxu0
    %v1578 = vpop.f32.mrb[0].mxu0
    %v1579 = vadd.f32 %v1525, %v1578
    %v1580 = vpop.f32.mrb[0].mxu0
    %1581 = vdwg.mxu0
    %v1582 = vpack.c.bf16 %v1579, %v1576
    %v1584 = vunpack.c.l.b16 %v1582
    %v1585 = vunpack.c.h.b16 %v1582
    %v1586 = vpack.c.b16 %v1584, %v1584
    %v1587 = vpack.c.b16 %v1585, %v1585
    %1588 = vrot.lane.b32.xlu0 %v1586, 96
    %v1589 = vpop.permute.xlu0 %1588
    %v1591 = vsel %vm158, %v1586, 0
    %v1594 = vsel %vm158, %v1589, 0
    %1596 = vmatprep.subr.bf16.mxu0 0
    %1597 = vmatpush1.bf16.xpose.msra.mxu0 %v1594
    %1598 = vmatprep.subr.bf16.mxu0 0
    %1599 = vmatpush1.bf16.xpose.msra.mxu0 0
    %1600 = vmatprep.subr.bf16.mxu0 0
    %1601 = vmatpush1.bf16.xpose.msra.mxu0 0
    %1602 = vmatprep.subr.bf16.mxu0 0
    %1603 = vmatpush1.bf16.xpose.msra.mxu0 0
    %1604 = vmatprep.subr.bf16.mxu0 0
    %1605 = vmatpush1.bf16.xpose.msra.mxu0 0
    %1606 = vmatprep.subr.bf16.mxu0 0
    %1607 = vmatpush1.bf16.xpose.msra.mxu0 0
    %1608 = vmatprep.subr.bf16.mxu0 0
    %1609 = vmatpush1.bf16.xpose.msra.mxu0 0
    %1610 = vmatprep.subr.bf16.mxu0 0
    %1611 = vmatpush1.bf16.xpose.msra.mxu0 0
    %1612 = vmatprep.subr.bf16.mxu0 0
    %1613 = vmatpush1.bf16.xpose.msra.mxu0 0
    %1614 = vmatprep.subr.bf16.mxu0 0
    %1615 = vmatpush1.bf16.xpose.msra.mxu0 0
    %1616 = vmatprep.subr.bf16.mxu0 0
    %1617 = vmatpush1.bf16.xpose.msra.mxu0 0
    %1618 = vmatprep.subr.bf16.mxu0 0
    %1619 = vmatpush1.bf16.xpose.msra.mxu0 0
    %1620 = vmatprep.subr.bf16.mxu0 0
    %1621 = vmatpush1.bf16.xpose.msra.mxu0 0
    %1622 = vmatprep.subr.bf16.mxu0 0
    %1623 = vmatpush1.bf16.xpose.msra.mxu0 0
    %1624 = vmatprep.subr.bf16.mxu0 0
    %1625 = vmatpush1.bf16.xpose.msra.mxu0 0
    %1626 = vmatprep.subr.bf16.mxu0 0
    %1627 = vmatpush1.bf16.xpose.msra.mxu0 0
    %1628 = vmatprep.mubr.bf16.mxu0 0
    %1629 = vmatmul.mubr.bf16.gmra.mrb[0].mxu0 %v1591
    %v1630 = vpop.f32.mrb[0].mxu0
    %v1631 = vadd.f32 0.0, %v1630
    %v1632 = vpop.f32.mrb[0].mxu0
    %v1633 = vpop.f32.mrb[0].mxu0
    %v1634 = vpop.f32.mrb[0].mxu0
    %1635 = vdwg.mxu0
    %1636 = vrot.lane.b32.xlu0 %v1587, 96
    %v1637 = vpop.permute.xlu0 %1636
    %v1639 = vsel %vm158, %v1587, 0
    %v1642 = vsel %vm158, %v1637, 0
    %1644 = vmatprep.subr.bf16.mxu0 0
    %1645 = vmatpush1.bf16.xpose.msra.mxu0 %v1642
    %1646 = vmatprep.subr.bf16.mxu0 0
    %1647 = vmatpush1.bf16.xpose.msra.mxu0 0
    %1648 = vmatprep.subr.bf16.mxu0 0
    %1649 = vmatpush1.bf16.xpose.msra.mxu0 0
    %1650 = vmatprep.subr.bf16.mxu0 0
    %1651 = vmatpush1.bf16.xpose.msra.mxu0 0
    %1652 = vmatprep.subr.bf16.mxu0 0
    %1653 = vmatpush1.bf16.xpose.msra.mxu0 0
    %1654 = vmatprep.subr.bf16.mxu0 0
    %1655 = vmatpush1.bf16.xpose.msra.mxu0 0
    %1656 = vmatprep.subr.bf16.mxu0 0
    %1657 = vmatpush1.bf16.xpose.msra.mxu0 0
    %1658 = vmatprep.subr.bf16.mxu0 0
    %1659 = vmatpush1.bf16.xpose.msra.mxu0 0
    %1660 = vmatprep.subr.bf16.mxu0 0
    %1661 = vmatpush1.bf16.xpose.msra.mxu0 0
    %1662 = vmatprep.subr.bf16.mxu0 0
    %1663 = vmatpush1.bf16.xpose.msra.mxu0 0
    %1664 = vmatprep.subr.bf16.mxu0 0
    %1665 = vmatpush1.bf16.xpose.msra.mxu0 0
    %1666 = vmatprep.subr.bf16.mxu0 0
    %1667 = vmatpush1.bf16.xpose.msra.mxu0 0
    %1668 = vmatprep.subr.bf16.mxu0 0
    %1669 = vmatpush1.bf16.xpose.msra.mxu0 0
    %1670 = vmatprep.subr.bf16.mxu0 0
    %1671 = vmatpush1.bf16.xpose.msra.mxu0 0
    %1672 = vmatprep.subr.bf16.mxu0 0
    %1673 = vmatpush1.bf16.xpose.msra.mxu0 0
    %1674 = vmatprep.subr.bf16.mxu0 0
    %1675 = vmatpush1.bf16.xpose.msra.mxu0 0
    %1676 = vmatprep.mubr.bf16.mxu0 0
    %1677 = vmatmul.mubr.bf16.gmra.mrb[0].mxu0 %v1639
    %v1678 = vpop.f32.mrb[0].mxu0
    %v1679 = vadd.f32 0.0, %v1678
    %v1680 = vpop.f32.mrb[0].mxu0
    %v1681 = vpop.f32.mrb[0].mxu0
    %v1682 = vpop.f32.mrb[0].mxu0
    %1683 = vdwg.mxu0
    %v1684 = vmul.f32 %v1631, 0.35355338
    %v1685 = vmul.f32 %v1679, 0.35355338
    %v1686 = vadd.f32 %v1684, %v260
    %v1687 = vadd.f32 %v1685, %v264
    %v1688 = vsel %vm158, %v1686, -inf
    %1689 = vmax.xlane.f32.xlu0 %v1688
    %v1690 = vpop.xlane.xlu0 %1689
    %v1691 = vsel %vm158, %v1687, -inf
    %1692 = vmax.xlane.f32.xlu0 %v1691
    %v1693 = vpop.xlane.xlu0 %1692
    %v1694 = vsub.f32 %v1686, %v1690
    %v1695 = vsub.f32 %v1687, %v1693
    %v1696 = vmul.f32 %v1694, 1.442695
    %v1697 = vpow.pop %v1696
    %v1698 = vmul.f32 %v1695, 1.442695
    %v1699 = vpow.pop %v1698
    %v1700 = vsel %vm158, %v1697, 0.0
    %1701 = vadd.xlane.f32.xlu0 %v1700
    %v1702 = vpop.xlane.xlu0 %1701
    %v1703 = vsel %vm158, %v1699, 0.0
    %1704 = vadd.xlane.f32.xlu0 %v1703
    %v1705 = vpop.xlane.xlu0 %1704
    %v1706 = vrcp.pop %v1702
    %v1707 = vrcp.pop %v1705
    %v1708 = vmul.f32 %v1697, %v1706
    %v1709 = vmul.f32 %v1699, %v1707
    %v1710 = vpack.c.bf16 %v1708, %v1708
    %v1711 = vpack.c.bf16 %v1709, %v1709
    %1712 = vrot.lane.b32.xlu0 %v1586, 64
    %v1713 = vpop.permute.xlu0 %1712
    %v1715 = vsel %vm158, %v1710, 0
    %v1718 = vsel %vm298, %v1713, 0
    %1720 = vmatprep.subr.bf16.mxu0 0
    %1721 = vmatpush1.bf16.msra.mxu0 %v1718
    %1722 = vmatprep.subr.bf16.mxu0 0
    %1723 = vmatpush1.bf16.msra.mxu0 0
    %1724 = vmatprep.subr.bf16.mxu0 0
    %1725 = vmatpush1.bf16.msra.mxu0 0
    %1726 = vmatprep.subr.bf16.mxu0 0
    %1727 = vmatpush1.bf16.msra.mxu0 0
    %1728 = vmatprep.subr.bf16.mxu0 0
    %1729 = vmatpush1.bf16.msra.mxu0 0
    %1730 = vmatprep.subr.bf16.mxu0 0
    %1731 = vmatpush1.bf16.msra.mxu0 0
    %1732 = vmatprep.subr.bf16.mxu0 0
    %1733 = vmatpush1.bf16.msra.mxu0 0
    %1734 = vmatprep.subr.bf16.mxu0 0
    %1735 = vmatpush1.bf16.msra.mxu0 0
    %1736 = vmatprep.subr.bf16.mxu0 0
    %1737 = vmatpush1.bf16.msra.mxu0 0
    %1738 = vmatprep.subr.bf16.mxu0 0
    %1739 = vmatpush1.bf16.msra.mxu0 0
    %1740 = vmatprep.subr.bf16.mxu0 0
    %1741 = vmatpush1.bf16.msra.mxu0 0
    %1742 = vmatprep.subr.bf16.mxu0 0
    %1743 = vmatpush1.bf16.msra.mxu0 0
    %1744 = vmatprep.subr.bf16.mxu0 0
    %1745 = vmatpush1.bf16.msra.mxu0 0
    %1746 = vmatprep.subr.bf16.mxu0 0
    %1747 = vmatpush1.bf16.msra.mxu0 0
    %1748 = vmatprep.subr.bf16.mxu0 0
    %1749 = vmatpush1.bf16.msra.mxu0 0
    %1750 = vmatprep.subr.bf16.mxu0 0
    %1751 = vmatpush1.bf16.msra.mxu0 0
    %1752 = vmatprep.mubr.bf16.mxu0 0
    %1753 = vmatmul.mubr.bf16.gmra.mrb[0].mxu0 %v1715
    %v1754 = vpop.f32.mrb[0].mxu0
    %v1755 = vadd.f32 0.0, %v1754
    %v1756 = vpop.f32.mrb[0].mxu0
    %v1757 = vpop.f32.mrb[0].mxu0
    %v1758 = vpop.f32.mrb[0].mxu0
    %1759 = vdwg.mxu0
    %1760 = vrot.lane.b32.xlu0 %v1587, 64
    %v1761 = vpop.permute.xlu0 %1760
    %v1763 = vsel %vm158, %v1711, 0
    %v1766 = vsel %vm298, %v1761, 0
    %1768 = vmatprep.subr.bf16.mxu0 0
    %1769 = vmatpush1.bf16.msra.mxu0 %v1766
    %1770 = vmatprep.subr.bf16.mxu0 0
    %1771 = vmatpush1.bf16.msra.mxu0 0
    %1772 = vmatprep.subr.bf16.mxu0 0
    %1773 = vmatpush1.bf16.msra.mxu0 0
    %1774 = vmatprep.subr.bf16.mxu0 0
    %1775 = vmatpush1.bf16.msra.mxu0 0
    %1776 = vmatprep.subr.bf16.mxu0 0
    %1777 = vmatpush1.bf16.msra.mxu0 0
    %1778 = vmatprep.subr.bf16.mxu0 0
    %1779 = vmatpush1.bf16.msra.mxu0 0
    %1780 = vmatprep.subr.bf16.mxu0 0
    %1781 = vmatpush1.bf16.msra.mxu0 0
    %1782 = vmatprep.subr.bf16.mxu0 0
    %1783 = vmatpush1.bf16.msra.mxu0 0
    %1784 = vmatprep.subr.bf16.mxu0 0
    %1785 = vmatpush1.bf16.msra.mxu0 0
    %1786 = vmatprep.subr.bf16.mxu0 0
    %1787 = vmatpush1.bf16.msra.mxu0 0
    %1788 = vmatprep.subr.bf16.mxu0 0
    %1789 = vmatpush1.bf16.msra.mxu0 0
    %1790 = vmatprep.subr.bf16.mxu0 0
    %1791 = vmatpush1.bf16.msra.mxu0 0
    %1792 = vmatprep.subr.bf16.mxu0 0
    %1793 = vmatpush1.bf16.msra.mxu0 0
    %1794 = vmatprep.subr.bf16.mxu0 0
    %1795 = vmatpush1.bf16.msra.mxu0 0
    %1796 = vmatprep.subr.bf16.mxu0 0
    %1797 = vmatpush1.bf16.msra.mxu0 0
    %1798 = vmatprep.subr.bf16.mxu0 0
    %1799 = vmatpush1.bf16.msra.mxu0 0
    %1800 = vmatprep.mubr.bf16.mxu0 0
    %1801 = vmatmul.mubr.bf16.gmra.mrb[0].mxu0 %v1763
    %v1802 = vpop.f32.mrb[0].mxu0
    %v1803 = vadd.f32 0.0, %v1802
    %v1804 = vpop.f32.mrb[0].mxu0
    %v1805 = vpop.f32.mrb[0].mxu0
    %v1806 = vpop.f32.mrb[0].mxu0
    %1807 = vdwg.mxu0
    %v1808 = vpack.c.bf16 %v1803, %v1755
    %1809 = vrot.lane.b32.xlu0 %v1586, 120
    %v1810 = vpop.permute.xlu0 %1809
    %1811 = vrot.lane.b32.xlu0 %v1586, 88
    %v1812 = vpop.permute.xlu0 %1811
    %v1814 = vsel %vm158, %v1810, 0
    %v1817 = vsel %vm158, %v1812, 0
    %1819 = vmatprep.subr.bf16.mxu0 0
    %1820 = vmatpush1.bf16.xpose.msra.mxu0 %v1817
    %1821 = vmatprep.subr.bf16.mxu0 0
    %1822 = vmatpush1.bf16.xpose.msra.mxu0 0
    %1823 = vmatprep.subr.bf16.mxu0 0
    %1824 = vmatpush1.bf16.xpose.msra.mxu0 0
    %1825 = vmatprep.subr.bf16.mxu0 0
    %1826 = vmatpush1.bf16.xpose.msra.mxu0 0
    %1827 = vmatprep.subr.bf16.mxu0 0
    %1828 = vmatpush1.bf16.xpose.msra.mxu0 0
    %1829 = vmatprep.subr.bf16.mxu0 0
    %1830 = vmatpush1.bf16.xpose.msra.mxu0 0
    %1831 = vmatprep.subr.bf16.mxu0 0
    %1832 = vmatpush1.bf16.xpose.msra.mxu0 0
    %1833 = vmatprep.subr.bf16.mxu0 0
    %1834 = vmatpush1.bf16.xpose.msra.mxu0 0
    %1835 = vmatprep.subr.bf16.mxu0 0
    %1836 = vmatpush1.bf16.xpose.msra.mxu0 0
    %1837 = vmatprep.subr.bf16.mxu0 0
    %1838 = vmatpush1.bf16.xpose.msra.mxu0 0
    %1839 = vmatprep.subr.bf16.mxu0 0
    %1840 = vmatpush1.bf16.xpose.msra.mxu0 0
    %1841 = vmatprep.subr.bf16.mxu0 0
    %1842 = vmatpush1.bf16.xpose.msra.mxu0 0
    %1843 = vmatprep.subr.bf16.mxu0 0
    %1844 = vmatpush1.bf16.xpose.msra.mxu0 0
    %1845 = vmatprep.subr.bf16.mxu0 0
    %1846 = vmatpush1.bf16.xpose.msra.mxu0 0
    %1847 = vmatprep.subr.bf16.mxu0 0
    %1848 = vmatpush1.bf16.xpose.msra.mxu0 0
    %1849 = vmatprep.subr.bf16.mxu0 0
    %1850 = vmatpush1.bf16.xpose.msra.mxu0 0
    %1851 = vmatprep.mubr.bf16.mxu0 0
    %1852 = vmatmul.mubr.bf16.gmra.mrb[0].mxu0 %v1814
    %v1853 = vpop.f32.mrb[0].mxu0
    %v1854 = vadd.f32 0.0, %v1853
    %v1855 = vpop.f32.mrb[0].mxu0
    %v1856 = vpop.f32.mrb[0].mxu0
    %v1857 = vpop.f32.mrb[0].mxu0
    %1858 = vdwg.mxu0
    %1859 = vrot.lane.b32.xlu0 %v1587, 120
    %v1860 = vpop.permute.xlu0 %1859
    %1861 = vrot.lane.b32.xlu0 %v1587, 88
    %v1862 = vpop.permute.xlu0 %1861
    %v1864 = vsel %vm158, %v1860, 0
    %v1867 = vsel %vm158, %v1862, 0
    %1869 = vmatprep.subr.bf16.mxu0 0
    %1870 = vmatpush1.bf16.xpose.msra.mxu0 %v1867
    %1871 = vmatprep.subr.bf16.mxu0 0
    %1872 = vmatpush1.bf16.xpose.msra.mxu0 0
    %1873 = vmatprep.subr.bf16.mxu0 0
    %1874 = vmatpush1.bf16.xpose.msra.mxu0 0
    %1875 = vmatprep.subr.bf16.mxu0 0
    %1876 = vmatpush1.bf16.xpose.msra.mxu0 0
    %1877 = vmatprep.subr.bf16.mxu0 0
    %1878 = vmatpush1.bf16.xpose.msra.mxu0 0
    %1879 = vmatprep.subr.bf16.mxu0 0
    %1880 = vmatpush1.bf16.xpose.msra.mxu0 0
    %1881 = vmatprep.subr.bf16.mxu0 0
    %1882 = vmatpush1.bf16.xpose.msra.mxu0 0
    %1883 = vmatprep.subr.bf16.mxu0 0
    %1884 = vmatpush1.bf16.xpose.msra.mxu0 0
    %1885 = vmatprep.subr.bf16.mxu0 0
    %1886 = vmatpush1.bf16.xpose.msra.mxu0 0
    %1887 = vmatprep.subr.bf16.mxu0 0
    %1888 = vmatpush1.bf16.xpose.msra.mxu0 0
    %1889 = vmatprep.subr.bf16.mxu0 0
    %1890 = vmatpush1.bf16.xpose.msra.mxu0 0
    %1891 = vmatprep.subr.bf16.mxu0 0
    %1892 = vmatpush1.bf16.xpose.msra.mxu0 0
    %1893 = vmatprep.subr.bf16.mxu0 0
    %1894 = vmatpush1.bf16.xpose.msra.mxu0 0
    %1895 = vmatprep.subr.bf16.mxu0 0
    %1896 = vmatpush1.bf16.xpose.msra.mxu0 0
    %1897 = vmatprep.subr.bf16.mxu0 0
    %1898 = vmatpush1.bf16.xpose.msra.mxu0 0
    %1899 = vmatprep.subr.bf16.mxu0 0
    %1900 = vmatpush1.bf16.xpose.msra.mxu0 0
    %1901 = vmatprep.mubr.bf16.mxu0 0
    %1902 = vmatmul.mubr.bf16.gmra.mrb[0].mxu0 %v1864
    %v1903 = vpop.f32.mrb[0].mxu0
    %v1904 = vadd.f32 0.0, %v1903
    %v1905 = vpop.f32.mrb[0].mxu0
    %v1906 = vpop.f32.mrb[0].mxu0
    %v1907 = vpop.f32.mrb[0].mxu0
    %1908 = vdwg.mxu0
    %v1909 = vmul.f32 %v1854, 0.35355338
    %v1910 = vmul.f32 %v1904, 0.35355338
    %v1911 = vadd.f32 %v1909, %v260
    %v1912 = vadd.f32 %v1910, %v264
    %v1913 = vsel %vm158, %v1911, -inf
    %1914 = vmax.xlane.f32.xlu0 %v1913
    %v1915 = vpop.xlane.xlu0 %1914
    %v1916 = vsel %vm158, %v1912, -inf
    %1917 = vmax.xlane.f32.xlu0 %v1916
    %v1918 = vpop.xlane.xlu0 %1917
    %v1919 = vsub.f32 %v1911, %v1915
    %v1920 = vsub.f32 %v1912, %v1918
    %v1921 = vmul.f32 %v1919, 1.442695
    %v1922 = vpow.pop %v1921
    %v1923 = vmul.f32 %v1920, 1.442695
    %v1924 = vpow.pop %v1923
    %v1925 = vsel %vm158, %v1922, 0.0
    %1926 = vadd.xlane.f32.xlu0 %v1925
    %v1927 = vpop.xlane.xlu0 %1926
    %v1928 = vsel %vm158, %v1924, 0.0
    %1929 = vadd.xlane.f32.xlu0 %v1928
    %v1930 = vpop.xlane.xlu0 %1929
    %v1931 = vrcp.pop %v1927
    %v1932 = vrcp.pop %v1930
    %v1933 = vmul.f32 %v1922, %v1931
    %v1934 = vmul.f32 %v1924, %v1932
    %v1935 = vpack.c.bf16 %v1933, %v1933
    %v1936 = vpack.c.bf16 %v1934, %v1934
    %1937 = vrot.lane.b32.xlu0 %v1586, 56
    %v1938 = vpop.permute.xlu0 %1937
    %v1940 = vsel %vm158, %v1935, 0
    %v1943 = vsel %vm298, %v1938, 0
    %1945 = vmatprep.subr.bf16.mxu0 0
    %1946 = vmatpush1.bf16.msra.mxu0 %v1943
    %1947 = vmatprep.subr.bf16.mxu0 0
    %1948 = vmatpush1.bf16.msra.mxu0 0
    %1949 = vmatprep.subr.bf16.mxu0 0
    %1950 = vmatpush1.bf16.msra.mxu0 0
    %1951 = vmatprep.subr.bf16.mxu0 0
    %1952 = vmatpush1.bf16.msra.mxu0 0
    %1953 = vmatprep.subr.bf16.mxu0 0
    %1954 = vmatpush1.bf16.msra.mxu0 0
    %1955 = vmatprep.subr.bf16.mxu0 0
    %1956 = vmatpush1.bf16.msra.mxu0 0
    %1957 = vmatprep.subr.bf16.mxu0 0
    %1958 = vmatpush1.bf16.msra.mxu0 0
    %1959 = vmatprep.subr.bf16.mxu0 0
    %1960 = vmatpush1.bf16.msra.mxu0 0
    %1961 = vmatprep.subr.bf16.mxu0 0
    %1962 = vmatpush1.bf16.msra.mxu0 0
    %1963 = vmatprep.subr.bf16.mxu0 0
    %1964 = vmatpush1.bf16.msra.mxu0 0
    %1965 = vmatprep.subr.bf16.mxu0 0
    %1966 = vmatpush1.bf16.msra.mxu0 0
    %1967 = vmatprep.subr.bf16.mxu0 0
    %1968 = vmatpush1.bf16.msra.mxu0 0
    %1969 = vmatprep.subr.bf16.mxu0 0
    %1970 = vmatpush1.bf16.msra.mxu0 0
    %1971 = vmatprep.subr.bf16.mxu0 0
    %1972 = vmatpush1.bf16.msra.mxu0 0
    %1973 = vmatprep.subr.bf16.mxu0 0
    %1974 = vmatpush1.bf16.msra.mxu0 0
    %1975 = vmatprep.subr.bf16.mxu0 0
    %1976 = vmatpush1.bf16.msra.mxu0 0
    %1977 = vmatprep.mubr.bf16.mxu0 0
    %1978 = vmatmul.mubr.bf16.gmra.mrb[0].mxu0 %v1940
    %v1979 = vpop.f32.mrb[0].mxu0
    %v1980 = vadd.f32 0.0, %v1979
    %v1981 = vpop.f32.mrb[0].mxu0
    %v1982 = vpop.f32.mrb[0].mxu0
    %v1983 = vpop.f32.mrb[0].mxu0
    %1984 = vdwg.mxu0
    %1985 = vrot.lane.b32.xlu0 %v1587, 56
    %v1986 = vpop.permute.xlu0 %1985
    %v1988 = vsel %vm158, %v1936, 0
    %v1991 = vsel %vm298, %v1986, 0
    %1993 = vmatprep.subr.bf16.mxu0 0
    %1994 = vmatpush1.bf16.msra.mxu0 %v1991
    %1995 = vmatprep.subr.bf16.mxu0 0
    %1996 = vmatpush1.bf16.msra.mxu0 0
    %1997 = vmatprep.subr.bf16.mxu0 0
    %1998 = vmatpush1.bf16.msra.mxu0 0
    %1999 = vmatprep.subr.bf16.mxu0 0
    %2000 = vmatpush1.bf16.msra.mxu0 0
    %2001 = vmatprep.subr.bf16.mxu0 0
    %2002 = vmatpush1.bf16.msra.mxu0 0
    %2003 = vmatprep.subr.bf16.mxu0 0
    %2004 = vmatpush1.bf16.msra.mxu0 0
    %2005 = vmatprep.subr.bf16.mxu0 0
    %2006 = vmatpush1.bf16.msra.mxu0 0
    %2007 = vmatprep.subr.bf16.mxu0 0
    %2008 = vmatpush1.bf16.msra.mxu0 0
    %2009 = vmatprep.subr.bf16.mxu0 0
    %2010 = vmatpush1.bf16.msra.mxu0 0
    %2011 = vmatprep.subr.bf16.mxu0 0
    %2012 = vmatpush1.bf16.msra.mxu0 0
    %2013 = vmatprep.subr.bf16.mxu0 0
    %2014 = vmatpush1.bf16.msra.mxu0 0
    %2015 = vmatprep.subr.bf16.mxu0 0
    %2016 = vmatpush1.bf16.msra.mxu0 0
    %2017 = vmatprep.subr.bf16.mxu0 0
    %2018 = vmatpush1.bf16.msra.mxu0 0
    %2019 = vmatprep.subr.bf16.mxu0 0
    %2020 = vmatpush1.bf16.msra.mxu0 0
    %2021 = vmatprep.subr.bf16.mxu0 0
    %2022 = vmatpush1.bf16.msra.mxu0 0
    %2023 = vmatprep.subr.bf16.mxu0 0
    %2024 = vmatpush1.bf16.msra.mxu0 0
    %2025 = vmatprep.mubr.bf16.mxu0 0
    %2026 = vmatmul.mubr.bf16.gmra.mrb[0].mxu0 %v1988
    %v2027 = vpop.f32.mrb[0].mxu0
    %v2028 = vadd.f32 0.0, %v2027
    %v2029 = vpop.f32.mrb[0].mxu0
    %v2030 = vpop.f32.mrb[0].mxu0
    %v2031 = vpop.f32.mrb[0].mxu0
    %2032 = vdwg.mxu0
    %v2033 = vpack.c.bf16 %v2028, %v1980
    %v2034 = vpack.c.b16 %v1531, %v1531
    %2035 = vrot.lane.b32.xlu0 %v2034, 32
    %v2036 = vpop.permute.xlu0 %2035
    %v2038 = vsel %vm158, %v2033, 0
    %v2041 = vsel %vm298, %v2036, 0
    %2043 = vmatprep.subr.bf16.mxu0 0
    %2044 = vmatpush1.bf16.msra.mxu0 %v2041
    %2045 = vmatprep.subr.bf16.mxu0 0
    %2046 = vmatpush1.bf16.msra.mxu0 0
    %2047 = vmatprep.subr.bf16.mxu0 0
    %2048 = vmatpush1.bf16.msra.mxu0 0
    %2049 = vmatprep.subr.bf16.mxu0 0
    %2050 = vmatpush1.bf16.msra.mxu0 0
    %2051 = vmatprep.subr.bf16.mxu0 0
    %2052 = vmatpush1.bf16.msra.mxu0 0
    %2053 = vmatprep.subr.bf16.mxu0 0
    %2054 = vmatpush1.bf16.msra.mxu0 0
    %2055 = vmatprep.subr.bf16.mxu0 0
    %2056 = vmatpush1.bf16.msra.mxu0 0
    %2057 = vmatprep.subr.bf16.mxu0 0
    %2058 = vmatpush1.bf16.msra.mxu0 0
    %2059 = vmatprep.subr.bf16.mxu0 0
    %2060 = vmatpush1.bf16.msra.mxu0 0
    %2061 = vmatprep.subr.bf16.mxu0 0
    %2062 = vmatpush1.bf16.msra.mxu0 0
    %2063 = vmatprep.subr.bf16.mxu0 0
    %2064 = vmatpush1.bf16.msra.mxu0 0
    %2065 = vmatprep.subr.bf16.mxu0 0
    %2066 = vmatpush1.bf16.msra.mxu0 0
    %2067 = vmatprep.subr.bf16.mxu0 0
    %2068 = vmatpush1.bf16.msra.mxu0 0
    %2069 = vmatprep.subr.bf16.mxu0 0
    %2070 = vmatpush1.bf16.msra.mxu0 0
    %2071 = vmatprep.subr.bf16.mxu0 0
    %2072 = vmatpush1.bf16.msra.mxu0 0
    %2073 = vmatprep.subr.bf16.mxu0 0
    %2074 = vmatpush1.bf16.msra.mxu0 0
    %2075 = vmatprep.mubr.bf16.mxu0 0
    %2076 = vmatmul.mubr.bf16.gmra.mrb[0].mxu0 %v2038
    %v2077 = vpop.f32.mrb[0].mxu0
    %v2078 = vadd.f32 0.0, %v2077
    %v2079 = vpop.f32.mrb[0].mxu0
    %v2080 = vpop.f32.mrb[0].mxu0
    %v2081 = vadd.f32 0.0, %v2080
    %v2082 = vpop.f32.mrb[0].mxu0
    %2083 = vdwg.mxu0
    %v2084 = vpack.c.b16 %v1530, %v1530
    %2085 = vrot.lane.b32.xlu0 %v2084, 32
    %v2086 = vpop.permute.xlu0 %2085
    %v2088 = vsel %vm158, %v1808, 0
    %v2091 = vsel %vm298, %v2086, 0
    %2093 = vmatprep.subr.bf16.mxu0 0
    %2094 = vmatpush1.bf16.msra.mxu0 %v2091
    %2095 = vmatprep.subr.bf16.mxu0 0
    %2096 = vmatpush1.bf16.msra.mxu0 0
    %2097 = vmatprep.subr.bf16.mxu0 0
    %2098 = vmatpush1.bf16.msra.mxu0 0
    %2099 = vmatprep.subr.bf16.mxu0 0
    %2100 = vmatpush1.bf16.msra.mxu0 0
    %2101 = vmatprep.subr.bf16.mxu0 0
    %2102 = vmatpush1.bf16.msra.mxu0 0
    %2103 = vmatprep.subr.bf16.mxu0 0
    %2104 = vmatpush1.bf16.msra.mxu0 0
    %2105 = vmatprep.subr.bf16.mxu0 0
    %2106 = vmatpush1.bf16.msra.mxu0 0
    %2107 = vmatprep.subr.bf16.mxu0 0
    %2108 = vmatpush1.bf16.msra.mxu0 0
    %2109 = vmatprep.subr.bf16.mxu0 0
    %2110 = vmatpush1.bf16.msra.mxu0 0
    %2111 = vmatprep.subr.bf16.mxu0 0
    %2112 = vmatpush1.bf16.msra.mxu0 0
    %2113 = vmatprep.subr.bf16.mxu0 0
    %2114 = vmatpush1.bf16.msra.mxu0 0
    %2115 = vmatprep.subr.bf16.mxu0 0
    %2116 = vmatpush1.bf16.msra.mxu0 0
    %2117 = vmatprep.subr.bf16.mxu0 0
    %2118 = vmatpush1.bf16.msra.mxu0 0
    %2119 = vmatprep.subr.bf16.mxu0 0
    %2120 = vmatpush1.bf16.msra.mxu0 0
    %2121 = vmatprep.subr.bf16.mxu0 0
    %2122 = vmatpush1.bf16.msra.mxu0 0
    %2123 = vmatprep.subr.bf16.mxu0 0
    %2124 = vmatpush1.bf16.msra.mxu0 0
    %2125 = vmatprep.mubr.bf16.mxu0 0
    %2126 = vmatmul.mubr.bf16.gmra.mrb[0].mxu0 %v2088
    %v2127 = vpop.f32.mrb[0].mxu0
    %v2128 = vadd.f32 %v2078, %v2127
    %v2129 = vpop.f32.mrb[0].mxu0
    %v2130 = vpop.f32.mrb[0].mxu0
    %v2131 = vadd.f32 %v2081, %v2130
    %v2132 = vpop.f32.mrb[0].mxu0
    %2133 = vdwg.mxu0
    %2134 = vrot.lane.b32.xlu0 %v1586, 112
    %v2135 = vpop.permute.xlu0 %2134
    %2136 = vrot.lane.b32.xlu0 %v1586, 80
    %v2137 = vpop.permute.xlu0 %2136
    %v2139 = vsel %vm158, %v2135, 0
    %v2142 = vsel %vm158, %v2137, 0
    %2144 = vmatprep.subr.bf16.mxu0 0
    %2145 = vmatpush1.bf16.xpose.msra.mxu0 %v2142
    %2146 = vmatprep.subr.bf16.mxu0 0
    %2147 = vmatpush1.bf16.xpose.msra.mxu0 0
    %2148 = vmatprep.subr.bf16.mxu0 0
    %2149 = vmatpush1.bf16.xpose.msra.mxu0 0
    %2150 = vmatprep.subr.bf16.mxu0 0
    %2151 = vmatpush1.bf16.xpose.msra.mxu0 0
    %2152 = vmatprep.subr.bf16.mxu0 0
    %2153 = vmatpush1.bf16.xpose.msra.mxu0 0
    %2154 = vmatprep.subr.bf16.mxu0 0
    %2155 = vmatpush1.bf16.xpose.msra.mxu0 0
    %2156 = vmatprep.subr.bf16.mxu0 0
    %2157 = vmatpush1.bf16.xpose.msra.mxu0 0
    %2158 = vmatprep.subr.bf16.mxu0 0
    %2159 = vmatpush1.bf16.xpose.msra.mxu0 0
    %2160 = vmatprep.subr.bf16.mxu0 0
    %2161 = vmatpush1.bf16.xpose.msra.mxu0 0
    %2162 = vmatprep.subr.bf16.mxu0 0
    %2163 = vmatpush1.bf16.xpose.msra.mxu0 0
    %2164 = vmatprep.subr.bf16.mxu0 0
    %2165 = vmatpush1.bf16.xpose.msra.mxu0 0
    %2166 = vmatprep.subr.bf16.mxu0 0
    %2167 = vmatpush1.bf16.xpose.msra.mxu0 0
    %2168 = vmatprep.subr.bf16.mxu0 0
    %2169 = vmatpush1.bf16.xpose.msra.mxu0 0
    %2170 = vmatprep.subr.bf16.mxu0 0
    %2171 = vmatpush1.bf16.xpose.msra.mxu0 0
    %2172 = vmatprep.subr.bf16.mxu0 0
    %2173 = vmatpush1.bf16.xpose.msra.mxu0 0
    %2174 = vmatprep.subr.bf16.mxu0 0
    %2175 = vmatpush1.bf16.xpose.msra.mxu0 0
    %2176 = vmatprep.mubr.bf16.mxu0 0
    %2177 = vmatmul.mubr.bf16.gmra.mrb[0].mxu0 %v2139
    %v2178 = vpop.f32.mrb[0].mxu0
    %v2179 = vadd.f32 0.0, %v2178
    %v2180 = vpop.f32.mrb[0].mxu0
    %v2181 = vpop.f32.mrb[0].mxu0
    %v2182 = vpop.f32.mrb[0].mxu0
    %2183 = vdwg.mxu0
    %2184 = vrot.lane.b32.xlu0 %v1587, 112
    %v2185 = vpop.permute.xlu0 %2184
    %2186 = vrot.lane.b32.xlu0 %v1587, 80
    %v2187 = vpop.permute.xlu0 %2186
    %v2189 = vsel %vm158, %v2185, 0
    %v2192 = vsel %vm158, %v2187, 0
    %2194 = vmatprep.subr.bf16.mxu0 0
    %2195 = vmatpush1.bf16.xpose.msra.mxu0 %v2192
    %2196 = vmatprep.subr.bf16.mxu0 0
    %2197 = vmatpush1.bf16.xpose.msra.mxu0 0
    %2198 = vmatprep.subr.bf16.mxu0 0
    %2199 = vmatpush1.bf16.xpose.msra.mxu0 0
    %2200 = vmatprep.subr.bf16.mxu0 0
    %2201 = vmatpush1.bf16.xpose.msra.mxu0 0
    %2202 = vmatprep.subr.bf16.mxu0 0
    %2203 = vmatpush1.bf16.xpose.msra.mxu0 0
    %2204 = vmatprep.subr.bf16.mxu0 0
    %2205 = vmatpush1.bf16.xpose.msra.mxu0 0
    %2206 = vmatprep.subr.bf16.mxu0 0
    %2207 = vmatpush1.bf16.xpose.msra.mxu0 0
    %2208 = vmatprep.subr.bf16.mxu0 0
    %2209 = vmatpush1.bf16.xpose.msra.mxu0 0
    %2210 = vmatprep.subr.bf16.mxu0 0
    %2211 = vmatpush1.bf16.xpose.msra.mxu0 0
    %2212 = vmatprep.subr.bf16.mxu0 0
    %2213 = vmatpush1.bf16.xpose.msra.mxu0 0
    %2214 = vmatprep.subr.bf16.mxu0 0
    %2215 = vmatpush1.bf16.xpose.msra.mxu0 0
    %2216 = vmatprep.subr.bf16.mxu0 0
    %2217 = vmatpush1.bf16.xpose.msra.mxu0 0
    %2218 = vmatprep.subr.bf16.mxu0 0
    %2219 = vmatpush1.bf16.xpose.msra.mxu0 0
    %2220 = vmatprep.subr.bf16.mxu0 0
    %2221 = vmatpush1.bf16.xpose.msra.mxu0 0
    %2222 = vmatprep.subr.bf16.mxu0 0
    %2223 = vmatpush1.bf16.xpose.msra.mxu0 0
    %2224 = vmatprep.subr.bf16.mxu0 0
    %2225 = vmatpush1.bf16.xpose.msra.mxu0 0
    %2226 = vmatprep.mubr.bf16.mxu0 0
    %2227 = vmatmul.mubr.bf16.gmra.mrb[0].mxu0 %v2189
    %v2228 = vpop.f32.mrb[0].mxu0
    %v2229 = vadd.f32 0.0, %v2228
    %v2230 = vpop.f32.mrb[0].mxu0
    %v2231 = vpop.f32.mrb[0].mxu0
    %v2232 = vpop.f32.mrb[0].mxu0
    %2233 = vdwg.mxu0
    %v2234 = vmul.f32 %v2179, 0.35355338
    %v2235 = vmul.f32 %v2229, 0.35355338
    %v2236 = vadd.f32 %v2234, %v260
    %v2237 = vadd.f32 %v2235, %v264
    %v2238 = vsel %vm158, %v2236, -inf
    %2239 = vmax.xlane.f32.xlu0 %v2238
    %v2240 = vpop.xlane.xlu0 %2239
    %v2241 = vsel %vm158, %v2237, -inf
    %2242 = vmax.xlane.f32.xlu0 %v2241
    %v2243 = vpop.xlane.xlu0 %2242
    %v2244 = vsub.f32 %v2236, %v2240
    %v2245 = vsub.f32 %v2237, %v2243
    %v2246 = vmul.f32 %v2244, 1.442695
    %v2247 = vpow.pop %v2246
    %v2248 = vmul.f32 %v2245, 1.442695
    %v2249 = vpow.pop %v2248
    %v2250 = vsel %vm158, %v2247, 0.0
    %2251 = vadd.xlane.f32.xlu0 %v2250
    %v2252 = vpop.xlane.xlu0 %2251
    %v2253 = vsel %vm158, %v2249, 0.0
    %2254 = vadd.xlane.f32.xlu0 %v2253
    %v2255 = vpop.xlane.xlu0 %2254
    %v2256 = vrcp.pop %v2252
    %v2257 = vrcp.pop %v2255
    %v2258 = vmul.f32 %v2247, %v2256
    %v2259 = vmul.f32 %v2249, %v2257
    %v2260 = vpack.c.bf16 %v2258, %v2258
    %v2261 = vpack.c.bf16 %v2259, %v2259
    %2262 = vrot.lane.b32.xlu0 %v1586, 48
    %v2263 = vpop.permute.xlu0 %2262
    %v2265 = vsel %vm158, %v2260, 0
    %v2268 = vsel %vm298, %v2263, 0
    %2270 = vmatprep.subr.bf16.mxu0 0
    %2271 = vmatpush1.bf16.msra.mxu0 %v2268
    %2272 = vmatprep.subr.bf16.mxu0 0
    %2273 = vmatpush1.bf16.msra.mxu0 0
    %2274 = vmatprep.subr.bf16.mxu0 0
    %2275 = vmatpush1.bf16.msra.mxu0 0
    %2276 = vmatprep.subr.bf16.mxu0 0
    %2277 = vmatpush1.bf16.msra.mxu0 0
    %2278 = vmatprep.subr.bf16.mxu0 0
    %2279 = vmatpush1.bf16.msra.mxu0 0
    %2280 = vmatprep.subr.bf16.mxu0 0
    %2281 = vmatpush1.bf16.msra.mxu0 0
    %2282 = vmatprep.subr.bf16.mxu0 0
    %2283 = vmatpush1.bf16.msra.mxu0 0
    %2284 = vmatprep.subr.bf16.mxu0 0
    %2285 = vmatpush1.bf16.msra.mxu0 0
    %2286 = vmatprep.subr.bf16.mxu0 0
    %2287 = vmatpush1.bf16.msra.mxu0 0
    %2288 = vmatprep.subr.bf16.mxu0 0
    %2289 = vmatpush1.bf16.msra.mxu0 0
    %2290 = vmatprep.subr.bf16.mxu0 0
    %2291 = vmatpush1.bf16.msra.mxu0 0
    %2292 = vmatprep.subr.bf16.mxu0 0
    %2293 = vmatpush1.bf16.msra.mxu0 0
    %2294 = vmatprep.subr.bf16.mxu0 0
    %2295 = vmatpush1.bf16.msra.mxu0 0
    %2296 = vmatprep.subr.bf16.mxu0 0
    %2297 = vmatpush1.bf16.msra.mxu0 0
    %2298 = vmatprep.subr.bf16.mxu0 0
    %2299 = vmatpush1.bf16.msra.mxu0 0
    %2300 = vmatprep.subr.bf16.mxu0 0
    %2301 = vmatpush1.bf16.msra.mxu0 0
    %2302 = vmatprep.mubr.bf16.mxu0 0
    %2303 = vmatmul.mubr.bf16.gmra.mrb[0].mxu0 %v2265
    %v2304 = vpop.f32.mrb[0].mxu0
    %v2305 = vadd.f32 0.0, %v2304
    %v2306 = vpop.f32.mrb[0].mxu0
    %v2307 = vpop.f32.mrb[0].mxu0
    %v2308 = vpop.f32.mrb[0].mxu0
    %2309 = vdwg.mxu0
    %2310 = vrot.lane.b32.xlu0 %v1587, 48
    %v2311 = vpop.permute.xlu0 %2310
    %v2313 = vsel %vm158, %v2261, 0
    %v2316 = vsel %vm298, %v2311, 0
    %2318 = vmatprep.subr.bf16.mxu0 0
    %2319 = vmatpush1.bf16.msra.mxu0 %v2316
    %2320 = vmatprep.subr.bf16.mxu0 0
    %2321 = vmatpush1.bf16.msra.mxu0 0
    %2322 = vmatprep.subr.bf16.mxu0 0
    %2323 = vmatpush1.bf16.msra.mxu0 0
    %2324 = vmatprep.subr.bf16.mxu0 0
    %2325 = vmatpush1.bf16.msra.mxu0 0
    %2326 = vmatprep.subr.bf16.mxu0 0
    %2327 = vmatpush1.bf16.msra.mxu0 0
    %2328 = vmatprep.subr.bf16.mxu0 0
    %2329 = vmatpush1.bf16.msra.mxu0 0
    %2330 = vmatprep.subr.bf16.mxu0 0
    %2331 = vmatpush1.bf16.msra.mxu0 0
    %2332 = vmatprep.subr.bf16.mxu0 0
    %2333 = vmatpush1.bf16.msra.mxu0 0
    %2334 = vmatprep.subr.bf16.mxu0 0
    %2335 = vmatpush1.bf16.msra.mxu0 0
    %2336 = vmatprep.subr.bf16.mxu0 0
    %2337 = vmatpush1.bf16.msra.mxu0 0
    %2338 = vmatprep.subr.bf16.mxu0 0
    %2339 = vmatpush1.bf16.msra.mxu0 0
    %2340 = vmatprep.subr.bf16.mxu0 0
    %2341 = vmatpush1.bf16.msra.mxu0 0
    %2342 = vmatprep.subr.bf16.mxu0 0
    %2343 = vmatpush1.bf16.msra.mxu0 0
    %2344 = vmatprep.subr.bf16.mxu0 0
    %2345 = vmatpush1.bf16.msra.mxu0 0
    %2346 = vmatprep.subr.bf16.mxu0 0
    %2347 = vmatpush1.bf16.msra.mxu0 0
    %2348 = vmatprep.subr.bf16.mxu0 0
    %2349 = vmatpush1.bf16.msra.mxu0 0
    %2350 = vmatprep.mubr.bf16.mxu0 0
    %2351 = vmatmul.mubr.bf16.gmra.mrb[0].mxu0 %v2313
    %v2352 = vpop.f32.mrb[0].mxu0
    %v2353 = vadd.f32 0.0, %v2352
    %v2354 = vpop.f32.mrb[0].mxu0
    %v2355 = vpop.f32.mrb[0].mxu0
    %v2356 = vpop.f32.mrb[0].mxu0
    %2357 = vdwg.mxu0
    %v2358 = vpack.c.bf16 %v2353, %v2305
    %v2359 = vpack.c.b16 %v1532, %v1532
    %2360 = vrot.lane.b32.xlu0 %v2359, 32
    %v2361 = vpop.permute.xlu0 %2360
    %v2363 = vsel %vm158, %v2358, 0
    %v2366 = vsel %vm298, %v2361, 0
    %2368 = vmatprep.subr.bf16.mxu0 0
    %2369 = vmatpush1.bf16.msra.mxu0 %v2366
    %2370 = vmatprep.subr.bf16.mxu0 0
    %2371 = vmatpush1.bf16.msra.mxu0 0
    %2372 = vmatprep.subr.bf16.mxu0 0
    %2373 = vmatpush1.bf16.msra.mxu0 0
    %2374 = vmatprep.subr.bf16.mxu0 0
    %2375 = vmatpush1.bf16.msra.mxu0 0
    %2376 = vmatprep.subr.bf16.mxu0 0
    %2377 = vmatpush1.bf16.msra.mxu0 0
    %2378 = vmatprep.subr.bf16.mxu0 0
    %2379 = vmatpush1.bf16.msra.mxu0 0
    %2380 = vmatprep.subr.bf16.mxu0 0
    %2381 = vmatpush1.bf16.msra.mxu0 0
    %2382 = vmatprep.subr.bf16.mxu0 0
    %2383 = vmatpush1.bf16.msra.mxu0 0
    %2384 = vmatprep.subr.bf16.mxu0 0
    %2385 = vmatpush1.bf16.msra.mxu0 0
    %2386 = vmatprep.subr.bf16.mxu0 0
    %2387 = vmatpush1.bf16.msra.mxu0 0
    %2388 = vmatprep.subr.bf16.mxu0 0
    %2389 = vmatpush1.bf16.msra.mxu0 0
    %2390 = vmatprep.subr.bf16.mxu0 0
    %2391 = vmatpush1.bf16.msra.mxu0 0
    %2392 = vmatprep.subr.bf16.mxu0 0
    %2393 = vmatpush1.bf16.msra.mxu0 0
    %2394 = vmatprep.subr.bf16.mxu0 0
    %2395 = vmatpush1.bf16.msra.mxu0 0
    %2396 = vmatprep.subr.bf16.mxu0 0
    %2397 = vmatpush1.bf16.msra.mxu0 0
    %2398 = vmatprep.subr.bf16.mxu0 0
    %2399 = vmatpush1.bf16.msra.mxu0 0
    %2400 = vmatprep.mubr.bf16.mxu0 0
    %2401 = vmatmul.mubr.bf16.gmra.mrb[0].mxu0 %v2363
    %v2402 = vpop.f32.mrb[0].mxu0
    %v2403 = vadd.f32 0.0, %v2402
    %v2404 = vpop.f32.mrb[0].mxu0
    %v2405 = vpop.f32.mrb[0].mxu0
    %v2406 = vadd.f32 0.0, %v2405
    %v2407 = vpop.f32.mrb[0].mxu0
    %2408 = vdwg.mxu0
    %v2409 = vadd.f32 %v2128, %v2403
    %v2410 = vadd.f32 %v2131, %v2406
    %2411 = vrot.lane.b32.xlu0 %v1586, 104
    %v2412 = vpop.permute.xlu0 %2411
    %2413 = vrot.lane.b32.xlu0 %v1586, 72
    %v2414 = vpop.permute.xlu0 %2413
    %v2416 = vsel %vm158, %v2412, 0
    %v2419 = vsel %vm158, %v2414, 0
    %2421 = vmatprep.subr.bf16.mxu0 0
    %2422 = vmatpush1.bf16.xpose.msra.mxu0 %v2419
    %2423 = vmatprep.subr.bf16.mxu0 0
    %2424 = vmatpush1.bf16.xpose.msra.mxu0 0
    %2425 = vmatprep.subr.bf16.mxu0 0
    %2426 = vmatpush1.bf16.xpose.msra.mxu0 0
    %2427 = vmatprep.subr.bf16.mxu0 0
    %2428 = vmatpush1.bf16.xpose.msra.mxu0 0
    %2429 = vmatprep.subr.bf16.mxu0 0
    %2430 = vmatpush1.bf16.xpose.msra.mxu0 0
    %2431 = vmatprep.subr.bf16.mxu0 0
    %2432 = vmatpush1.bf16.xpose.msra.mxu0 0
    %2433 = vmatprep.subr.bf16.mxu0 0
    %2434 = vmatpush1.bf16.xpose.msra.mxu0 0
    %2435 = vmatprep.subr.bf16.mxu0 0
    %2436 = vmatpush1.bf16.xpose.msra.mxu0 0
    %2437 = vmatprep.subr.bf16.mxu0 0
    %2438 = vmatpush1.bf16.xpose.msra.mxu0 0
    %2439 = vmatprep.subr.bf16.mxu0 0
    %2440 = vmatpush1.bf16.xpose.msra.mxu0 0
    %2441 = vmatprep.subr.bf16.mxu0 0
    %2442 = vmatpush1.bf16.xpose.msra.mxu0 0
    %2443 = vmatprep.subr.bf16.mxu0 0
    %2444 = vmatpush1.bf16.xpose.msra.mxu0 0
    %2445 = vmatprep.subr.bf16.mxu0 0
    %2446 = vmatpush1.bf16.xpose.msra.mxu0 0
    %2447 = vmatprep.subr.bf16.mxu0 0
    %2448 = vmatpush1.bf16.xpose.msra.mxu0 0
    %2449 = vmatprep.subr.bf16.mxu0 0
    %2450 = vmatpush1.bf16.xpose.msra.mxu0 0
    %2451 = vmatprep.subr.bf16.mxu0 0
    %2452 = vmatpush1.bf16.xpose.msra.mxu0 0
    %2453 = vmatprep.mubr.bf16.mxu0 0
    %2454 = vmatmul.mubr.bf16.gmra.mrb[0].mxu0 %v2416
    %v2455 = vpop.f32.mrb[0].mxu0
    %v2456 = vadd.f32 0.0, %v2455
    %v2457 = vpop.f32.mrb[0].mxu0
    %v2458 = vpop.f32.mrb[0].mxu0
    %v2459 = vpop.f32.mrb[0].mxu0
    %2460 = vdwg.mxu0
    %2461 = vrot.lane.b32.xlu0 %v1587, 104
    %v2462 = vpop.permute.xlu0 %2461
    %2463 = vrot.lane.b32.xlu0 %v1587, 72
    %v2464 = vpop.permute.xlu0 %2463
    %v2466 = vsel %vm158, %v2462, 0
    %v2469 = vsel %vm158, %v2464, 0
    %2471 = vmatprep.subr.bf16.mxu0 0
    %2472 = vmatpush1.bf16.xpose.msra.mxu0 %v2469
    %2473 = vmatprep.subr.bf16.mxu0 0
    %2474 = vmatpush1.bf16.xpose.msra.mxu0 0
    %2475 = vmatprep.subr.bf16.mxu0 0
    %2476 = vmatpush1.bf16.xpose.msra.mxu0 0
    %2477 = vmatprep.subr.bf16.mxu0 0
    %2478 = vmatpush1.bf16.xpose.msra.mxu0 0
    %2479 = vmatprep.subr.bf16.mxu0 0
    %2480 = vmatpush1.bf16.xpose.msra.mxu0 0
    %2481 = vmatprep.subr.bf16.mxu0 0
    %2482 = vmatpush1.bf16.xpose.msra.mxu0 0
    %2483 = vmatprep.subr.bf16.mxu0 0
    %2484 = vmatpush1.bf16.xpose.msra.mxu0 0
    %2485 = vmatprep.subr.bf16.mxu0 0
    %2486 = vmatpush1.bf16.xpose.msra.mxu0 0
    %2487 = vmatprep.subr.bf16.mxu0 0
    %2488 = vmatpush1.bf16.xpose.msra.mxu0 0
    %2489 = vmatprep.subr.bf16.mxu0 0
    %2490 = vmatpush1.bf16.xpose.msra.mxu0 0
    %2491 = vmatprep.subr.bf16.mxu0 0
    %2492 = vmatpush1.bf16.xpose.msra.mxu0 0
    %2493 = vmatprep.subr.bf16.mxu0 0
    %2494 = vmatpush1.bf16.xpose.msra.mxu0 0
    %2495 = vmatprep.subr.bf16.mxu0 0
    %2496 = vmatpush1.bf16.xpose.msra.mxu0 0
    %2497 = vmatprep.subr.bf16.mxu0 0
    %2498 = vmatpush1.bf16.xpose.msra.mxu0 0
    %2499 = vmatprep.subr.bf16.mxu0 0
    %2500 = vmatpush1.bf16.xpose.msra.mxu0 0
    %2501 = vmatprep.subr.bf16.mxu0 0
    %2502 = vmatpush1.bf16.xpose.msra.mxu0 0
    %2503 = vmatprep.mubr.bf16.mxu0 0
    %2504 = vmatmul.mubr.bf16.gmra.mrb[0].mxu0 %v2466
    %v2505 = vpop.f32.mrb[0].mxu0
    %v2506 = vadd.f32 0.0, %v2505
    %v2507 = vpop.f32.mrb[0].mxu0
    %v2508 = vpop.f32.mrb[0].mxu0
    %v2509 = vpop.f32.mrb[0].mxu0
    %2510 = vdwg.mxu0
    %v2511 = vmul.f32 %v2456, 0.35355338
    %v2512 = vmul.f32 %v2506, 0.35355338
    %v2513 = vadd.f32 %v2511, %v260
    %v2514 = vadd.f32 %v2512, %v264
    %v2515 = vsel %vm158, %v2513, -inf
    %2516 = vmax.xlane.f32.xlu0 %v2515
    %v2517 = vpop.xlane.xlu0 %2516
    %v2518 = vsel %vm158, %v2514, -inf
    %2519 = vmax.xlane.f32.xlu0 %v2518
    %v2520 = vpop.xlane.xlu0 %2519
    %v2521 = vsub.f32 %v2513, %v2517
    %v2522 = vsub.f32 %v2514, %v2520
    %v2523 = vmul.f32 %v2521, 1.442695
    %v2524 = vpow.pop %v2523
    %v2525 = vmul.f32 %v2522, 1.442695
    %v2526 = vpow.pop %v2525
    %v2527 = vsel %vm158, %v2524, 0.0
    %2528 = vadd.xlane.f32.xlu0 %v2527
    %v2529 = vpop.xlane.xlu0 %2528
    %v2530 = vsel %vm158, %v2526, 0.0
    %2531 = vadd.xlane.f32.xlu0 %v2530
    %v2532 = vpop.xlane.xlu0 %2531
    %v2533 = vrcp.pop %v2529
    %v2534 = vrcp.pop %v2532
    %v2535 = vmul.f32 %v2524, %v2533
    %v2536 = vmul.f32 %v2526, %v2534
    %v2537 = vpack.c.bf16 %v2535, %v2535
    %v2538 = vpack.c.bf16 %v2536, %v2536
    %2539 = vrot.lane.b32.xlu0 %v1586, 40
    %v2540 = vpop.permute.xlu0 %2539
    %v2542 = vsel %vm158, %v2537, 0
    %v2545 = vsel %vm298, %v2540, 0
    %2547 = vmatprep.subr.bf16.mxu0 0
    %2548 = vmatpush1.bf16.msra.mxu0 %v2545
    %2549 = vmatprep.subr.bf16.mxu0 0
    %2550 = vmatpush1.bf16.msra.mxu0 0
    %2551 = vmatprep.subr.bf16.mxu0 0
    %2552 = vmatpush1.bf16.msra.mxu0 0
    %2553 = vmatprep.subr.bf16.mxu0 0
    %2554 = vmatpush1.bf16.msra.mxu0 0
    %2555 = vmatprep.subr.bf16.mxu0 0
    %2556 = vmatpush1.bf16.msra.mxu0 0
    %2557 = vmatprep.subr.bf16.mxu0 0
    %2558 = vmatpush1.bf16.msra.mxu0 0
    %2559 = vmatprep.subr.bf16.mxu0 0
    %2560 = vmatpush1.bf16.msra.mxu0 0
    %2561 = vmatprep.subr.bf16.mxu0 0
    %2562 = vmatpush1.bf16.msra.mxu0 0
    %2563 = vmatprep.subr.bf16.mxu0 0
    %2564 = vmatpush1.bf16.msra.mxu0 0
    %2565 = vmatprep.subr.bf16.mxu0 0
    %2566 = vmatpush1.bf16.msra.mxu0 0
    %2567 = vmatprep.subr.bf16.mxu0 0
    %2568 = vmatpush1.bf16.msra.mxu0 0
    %2569 = vmatprep.subr.bf16.mxu0 0
    %2570 = vmatpush1.bf16.msra.mxu0 0
    %2571 = vmatprep.subr.bf16.mxu0 0
    %2572 = vmatpush1.bf16.msra.mxu0 0
    %2573 = vmatprep.subr.bf16.mxu0 0
    %2574 = vmatpush1.bf16.msra.mxu0 0
    %2575 = vmatprep.subr.bf16.mxu0 0
    %2576 = vmatpush1.bf16.msra.mxu0 0
    %2577 = vmatprep.subr.bf16.mxu0 0
    %2578 = vmatpush1.bf16.msra.mxu0 0
    %2579 = vmatprep.mubr.bf16.mxu0 0
    %2580 = vmatmul.mubr.bf16.gmra.mrb[0].mxu0 %v2542
    %v2581 = vpop.f32.mrb[0].mxu0
    %v2582 = vadd.f32 0.0, %v2581
    %v2583 = vpop.f32.mrb[0].mxu0
    %v2584 = vpop.f32.mrb[0].mxu0
    %v2585 = vpop.f32.mrb[0].mxu0
    %2586 = vdwg.mxu0
    %2587 = vrot.lane.b32.xlu0 %v1587, 40
    %v2588 = vpop.permute.xlu0 %2587
    %v2590 = vsel %vm158, %v2538, 0
    %v2593 = vsel %vm298, %v2588, 0
    %2595 = vmatprep.subr.bf16.mxu0 0
    %2596 = vmatpush1.bf16.msra.mxu0 %v2593
    %2597 = vmatprep.subr.bf16.mxu0 0
    %2598 = vmatpush1.bf16.msra.mxu0 0
    %2599 = vmatprep.subr.bf16.mxu0 0
    %2600 = vmatpush1.bf16.msra.mxu0 0
    %2601 = vmatprep.subr.bf16.mxu0 0
    %2602 = vmatpush1.bf16.msra.mxu0 0
    %2603 = vmatprep.subr.bf16.mxu0 0
    %2604 = vmatpush1.bf16.msra.mxu0 0
    %2605 = vmatprep.subr.bf16.mxu0 0
    %2606 = vmatpush1.bf16.msra.mxu0 0
    %2607 = vmatprep.subr.bf16.mxu0 0
    %2608 = vmatpush1.bf16.msra.mxu0 0
    %2609 = vmatprep.subr.bf16.mxu0 0
    %2610 = vmatpush1.bf16.msra.mxu0 0
    %2611 = vmatprep.subr.bf16.mxu0 0
    %2612 = vmatpush1.bf16.msra.mxu0 0
    %2613 = vmatprep.subr.bf16.mxu0 0
    %2614 = vmatpush1.bf16.msra.mxu0 0
    %2615 = vmatprep.subr.bf16.mxu0 0
    %2616 = vmatpush1.bf16.msra.mxu0 0
    %2617 = vmatprep.subr.bf16.mxu0 0
    %2618 = vmatpush1.bf16.msra.mxu0 0
    %2619 = vmatprep.subr.bf16.mxu0 0
    %2620 = vmatpush1.bf16.msra.mxu0 0
    %2621 = vmatprep.subr.bf16.mxu0 0
    %2622 = vmatpush1.bf16.msra.mxu0 0
    %2623 = vmatprep.subr.bf16.mxu0 0
    %2624 = vmatpush1.bf16.msra.mxu0 0
    %2625 = vmatprep.subr.bf16.mxu0 0
    %2626 = vmatpush1.bf16.msra.mxu0 0
    %2627 = vmatprep.mubr.bf16.mxu0 0
    %2628 = vmatmul.mubr.bf16.gmra.mrb[0].mxu0 %v2590
    %v2629 = vpop.f32.mrb[0].mxu0
    %v2630 = vadd.f32 0.0, %v2629
    %v2631 = vpop.f32.mrb[0].mxu0
    %v2632 = vpop.f32.mrb[0].mxu0
    %v2633 = vpop.f32.mrb[0].mxu0
    %2634 = vdwg.mxu0
    %v2635 = vpack.c.bf16 %v2630, %v2582
    %v2636 = vpack.c.b16 %v1533, %v1533
    %2637 = vrot.lane.b32.xlu0 %v2636, 32
    %v2638 = vpop.permute.xlu0 %2637
    %v2640 = vsel %vm158, %v2635, 0
    %v2643 = vsel %vm298, %v2638, 0
    %2645 = vmatprep.subr.bf16.mxu0 0
    %2646 = vmatpush1.bf16.msra.mxu0 %v2643
    %2647 = vmatprep.subr.bf16.mxu0 0
    %2648 = vmatpush1.bf16.msra.mxu0 0
    %2649 = vmatprep.subr.bf16.mxu0 0
    %2650 = vmatpush1.bf16.msra.mxu0 0
    %2651 = vmatprep.subr.bf16.mxu0 0
    %2652 = vmatpush1.bf16.msra.mxu0 0
    %2653 = vmatprep.subr.bf16.mxu0 0
    %2654 = vmatpush1.bf16.msra.mxu0 0
    %2655 = vmatprep.subr.bf16.mxu0 0
    %2656 = vmatpush1.bf16.msra.mxu0 0
    %2657 = vmatprep.subr.bf16.mxu0 0
    %2658 = vmatpush1.bf16.msra.mxu0 0
    %2659 = vmatprep.subr.bf16.mxu0 0
    %2660 = vmatpush1.bf16.msra.mxu0 0
    %2661 = vmatprep.subr.bf16.mxu0 0
    %2662 = vmatpush1.bf16.msra.mxu0 0
    %2663 = vmatprep.subr.bf16.mxu0 0
    %2664 = vmatpush1.bf16.msra.mxu0 0
    %2665 = vmatprep.subr.bf16.mxu0 0
    %2666 = vmatpush1.bf16.msra.mxu0 0
    %2667 = vmatprep.subr.bf16.mxu0 0
    %2668 = vmatpush1.bf16.msra.mxu0 0
    %2669 = vmatprep.subr.bf16.mxu0 0
    %2670 = vmatpush1.bf16.msra.mxu0 0
    %2671 = vmatprep.subr.bf16.mxu0 0
    %2672 = vmatpush1.bf16.msra.mxu0 0
    %2673 = vmatprep.subr.bf16.mxu0 0
    %2674 = vmatpush1.bf16.msra.mxu0 0
    %2675 = vmatprep.subr.bf16.mxu0 0
    %2676 = vmatpush1.bf16.msra.mxu0 0
    %2677 = vmatprep.mubr.bf16.mxu0 0
    %2678 = vmatmul.mubr.bf16.gmra.mrb[0].mxu0 %v2640
    %v2679 = vpop.f32.mrb[0].mxu0
    %v2680 = vadd.f32 0.0, %v2679
    %v2681 = vpop.f32.mrb[0].mxu0
    %v2682 = vpop.f32.mrb[0].mxu0
    %v2683 = vadd.f32 0.0, %v2682
    %v2684 = vpop.f32.mrb[0].mxu0
    %2685 = vdwg.mxu0
    %v2686 = vadd.f32 %v2409, %v2680
    %v2687 = vadd.f32 %v2410, %v2683
    %v2688 = vlaneseq
    %v2689 = vshrl.u32 %v2688, 7
    %v2690 = vsub.s32 1, %v2689
    %v2691 = vrot.slane %v1520, %v2690
    %v2692 = vadd.f32 %v2686, %v2691
    %v2693 = vadd.f32 %v2687, %v2691
    %v2694 = vadd.f32 %v2692, %v1503
    %v2695 = vadd.f32 %v2693, %v1504
    %v2696 = vsel %vm34, %v2694, 0.0
    %2697 = vadd.xlane.f32.xlu0 %v2696
    %v2698 = vpop.xlane.xlu0 %2697
    %v2699 = vsel %vm34, %v2695, 0.0
    %2700 = vadd.xlane.f32.xlu0 %v2699
    %v2701 = vpop.xlane.xlu0 %2700
    %v2702 = vmul.f32 %v2698, %v41
    %v2703 = vmul.f32 %v2701, %v41
    %v2704 = vsub.f32 %v2694, %v2702
    %v2705 = vsub.f32 %v2695, %v2703
    %v2706 = vmul.f32 %v2704, %v2704
    %v2707 = vmul.f32 %v2705, %v2705
    %v2708 = vsel %vm34, %v2706, 0.0
    %2709 = vadd.xlane.f32.xlu0 %v2708
    %v2710 = vpop.xlane.xlu0 %2709
    %v2711 = vsel %vm34, %v2707, 0.0
    %2712 = vadd.xlane.f32.xlu0 %v2711
    %v2713 = vpop.xlane.xlu0 %2712
    %v2714 = vmul.f32 %v2710, %v41
    %v2715 = vmul.f32 %v2713, %v41
    %v2716 = vadd.f32 %v2714, 1e-12
    %v2717 = vadd.f32 %v2715, 1e-12
    %v2718 = vrsqrt.pop %v2716
    %v2719 = vrsqrt.pop %v2717
    %v2720 = vmul.f32 %v2704, %v2718
    %v2721 = vmul.f32 %v2705, %v2719
    %v2722 = vlaneseq
    %v2723 = vshrl.u32 %v2722, 7
    %v2724 = vsub.s32 2, %v2723
    %v2725 = vrot.slane %v1520, %v2724
    %v2726 = vmul.f32 %v2720, %v2725
    %v2727 = vmul.f32 %v2721, %v2725
    %v2728 = vlaneseq
    %v2729 = vshrl.u32 %v2728, 7
    %v2730 = vsub.s32 3, %v2729
    %v2731 = vrot.slane %v1520, %v2730
    %v2732 = vadd.f32 %v2726, %v2731
    %v2733 = vadd.f32 %v2727, %v2731
    %v2734 = vpack.c.bf16 %v2733, %v2732
    %v2735 = vlaneseq
    %v2736 = vshrl.u32 %v2735, 7
    %v2737 = vsub.s32 4, %v2736
    %v2738 = vrot.slane %v1520, %v2737
    %v2739 = vunpack.c.h.b16 %v1506
    %v2740 = vunpack.c.h.b16 %v1507
    %v2741 = vunpack.c.h.b16 %v1508
    %v2742 = vunpack.c.h.b16 %v1509
    %v2743 = vpack.c.b16 %v2740, %v2739
    %v2744 = vpack.c.b16 %v2742, %v2741
    %v2748 = vsel %vm34, %v2734, 0
    %2750 = vmatprep.subr.bf16.mxu0 0
    %2751 = vmatpush1.bf16.msra.mxu0 %v2743
    %2752 = vmatprep.subr.bf16.mxu0 0
    %2753 = vmatpush1.bf16.msra.mxu0 %v2744
    %2754 = vmatprep.subr.bf16.mxu0 0
    %2755 = vmatpush1.bf16.msra.mxu0 0
    %2756 = vmatprep.subr.bf16.mxu0 0
    %2757 = vmatpush1.bf16.msra.mxu0 0
    %2758 = vmatprep.subr.bf16.mxu0 0
    %2759 = vmatpush1.bf16.msra.mxu0 0
    %2760 = vmatprep.subr.bf16.mxu0 0
    %2761 = vmatpush1.bf16.msra.mxu0 0
    %2762 = vmatprep.subr.bf16.mxu0 0
    %2763 = vmatpush1.bf16.msra.mxu0 0
    %2764 = vmatprep.subr.bf16.mxu0 0
    %2765 = vmatpush1.bf16.msra.mxu0 0
    %2766 = vmatprep.subr.bf16.mxu0 0
    %2767 = vmatpush1.bf16.msra.mxu0 0
    %2768 = vmatprep.subr.bf16.mxu0 0
    %2769 = vmatpush1.bf16.msra.mxu0 0
    %2770 = vmatprep.subr.bf16.mxu0 0
    %2771 = vmatpush1.bf16.msra.mxu0 0
    %2772 = vmatprep.subr.bf16.mxu0 0
    %2773 = vmatpush1.bf16.msra.mxu0 0
    %2774 = vmatprep.subr.bf16.mxu0 0
    %2775 = vmatpush1.bf16.msra.mxu0 0
    %2776 = vmatprep.subr.bf16.mxu0 0
    %2777 = vmatpush1.bf16.msra.mxu0 0
    %2778 = vmatprep.subr.bf16.mxu0 0
    %2779 = vmatpush1.bf16.msra.mxu0 0
    %2780 = vmatprep.subr.bf16.mxu0 0
    %2781 = vmatpush1.bf16.msra.mxu0 0
    %2782 = vmatprep.mubr.bf16.mxu0 0
    %2783 = vmatmul.mubr.bf16.gmra.mrb[0].mxu0 %v2748
    %v2784 = vpop.f32.mrb[0].mxu0
    %v2785 = vadd.f32 %v2738, %v2784
    %v2786 = vpop.f32.mrb[0].mxu0
    %v2787 = vpop.f32.mrb[0].mxu0
    %v2788 = vadd.f32 %v2738, %v2787
    %v2789 = vpop.f32.mrb[0].mxu0
    %2790 = vdwg.mxu0
    %v2791 = vmul.f32 %v2785, 0.5
    %v2792 = vmul.f32 %v2788, 0.5
    %v2793 = vmul.f32 %v2785, 0.044715
    %v2794 = vmul.f32 %v2788, 0.044715
    %v2795 = vmul.f32 %v2793, %v2785
    %v2796 = vmul.f32 %v2794, %v2788
    %v2797 = vmul.f32 %v2795, %v2785
    %v2798 = vmul.f32 %v2796, %v2788
    %v2799 = vadd.f32 %v2785, %v2797
    %v2800 = vadd.f32 %v2788, %v2798
    %v2801 = vmul.f32 %v2799, 0.7978846
    %v2802 = vmul.f32 %v2800, 0.7978846
    %v2803 = vtanh.pop %v2801
    %v2804 = vtanh.pop %v2802
    %v2805 = vadd.f32 %v2803, 1.0
    %v2806 = vadd.f32 %v2804, 1.0
    %v2807 = vmul.f32 %v2791, %v2805
    %v2808 = vmul.f32 %v2792, %v2806
    %v2809 = vpack.c.bf16 %v2808, %v2807
    %v2810 = vlaneseq
    %v2811 = vshrl.u32 %v2810, 7
    %v2812 = vsub.s32 5, %v2811
    %v2813 = vrot.slane %v1520, %v2812
    %v2822 = vunpack.c.l.b16 %v1511
    %v2823 = vunpack.c.l.b16 %v1512
    %v2824 = vunpack.c.l.b16 %v1513
    %v2825 = vunpack.c.l.b16 %v1514
    %v2826 = vunpack.c.l.b16 %v1515
    %v2827 = vunpack.c.l.b16 %v1516
    %v2828 = vunpack.c.l.b16 %v1517
    %v2829 = vunpack.c.l.b16 %v1518
    %v2830 = vpack.c.b16 %v2823, %v2822
    %v2831 = vpack.c.b16 %v2825, %v2824
    %v2832 = vpack.c.b16 %v2827, %v2826
    %v2833 = vpack.c.b16 %v2829, %v2828
    %v2839 = vsel %vm1420, %v2809, 0
    %2841 = vmatprep.subr.bf16.mxu0 0
    %2842 = vmatpush1.bf16.msra.mxu0 %v2830
    %2843 = vmatprep.subr.bf16.mxu0 0
    %2844 = vmatpush1.bf16.msra.mxu0 %v2831
    %2845 = vmatprep.subr.bf16.mxu0 0
    %2846 = vmatpush1.bf16.msra.mxu0 %v2832
    %2847 = vmatprep.subr.bf16.mxu0 0
    %2848 = vmatpush1.bf16.msra.mxu0 %v2833
    %2849 = vmatprep.subr.bf16.mxu0 0
    %2850 = vmatpush1.bf16.msra.mxu0 0
    %2851 = vmatprep.subr.bf16.mxu0 0
    %2852 = vmatpush1.bf16.msra.mxu0 0
    %2853 = vmatprep.subr.bf16.mxu0 0
    %2854 = vmatpush1.bf16.msra.mxu0 0
    %2855 = vmatprep.subr.bf16.mxu0 0
    %2856 = vmatpush1.bf16.msra.mxu0 0
    %2857 = vmatprep.subr.bf16.mxu0 0
    %2858 = vmatpush1.bf16.msra.mxu0 0
    %2859 = vmatprep.subr.bf16.mxu0 0
    %2860 = vmatpush1.bf16.msra.mxu0 0
    %2861 = vmatprep.subr.bf16.mxu0 0
    %2862 = vmatpush1.bf16.msra.mxu0 0
    %2863 = vmatprep.subr.bf16.mxu0 0
    %2864 = vmatpush1.bf16.msra.mxu0 0
    %2865 = vmatprep.subr.bf16.mxu0 0
    %2866 = vmatpush1.bf16.msra.mxu0 0
    %2867 = vmatprep.subr.bf16.mxu0 0
    %2868 = vmatpush1.bf16.msra.mxu0 0
    %2869 = vmatprep.subr.bf16.mxu0 0
    %2870 = vmatpush1.bf16.msra.mxu0 0
    %2871 = vmatprep.subr.bf16.mxu0 0
    %2872 = vmatpush1.bf16.msra.mxu0 0
    %2873 = vmatprep.mubr.bf16.mxu0 0
    %2874 = vmatmul.mubr.bf16.gmra.mrb[0].mxu0 %v2839
    %v2875 = vpop.f32.mrb[0].mxu0
    %v2876 = vadd.f32 %v2813, %v2875
    %v2877 = vpop.f32.mrb[0].mxu0
    %v2878 = vpop.f32.mrb[0].mxu0
    %v2879 = vadd.f32 %v2813, %v2878
    %v2880 = vpop.f32.mrb[0].mxu0
    %2881 = vdwg.mxu0
    %v2882 = vadd.f32 %v2876, %v2732
    %v2883 = vadd.f32 %v2879, %v2733
    %v2884 = vsel %vm34, %v2882, 0.0
    %2885 = vadd.xlane.f32.xlu0 %v2884
    %v2886 = vpop.xlane.xlu0 %2885
    %v2887 = vsel %vm34, %v2883, 0.0
    %2888 = vadd.xlane.f32.xlu0 %v2887
    %v2889 = vpop.xlane.xlu0 %2888
    %v2890 = vmul.f32 %v2886, %v41
    %v2891 = vmul.f32 %v2889, %v41
    %v2892 = vsub.f32 %v2882, %v2890
    %v2893 = vsub.f32 %v2883, %v2891
    %v2894 = vmul.f32 %v2892, %v2892
    %v2895 = vmul.f32 %v2893, %v2893
    %v2896 = vsel %vm34, %v2894, 0.0
    %2897 = vadd.xlane.f32.xlu0 %v2896
    %v2898 = vpop.xlane.xlu0 %2897
    %v2899 = vsel %vm34, %v2895, 0.0
    %2900 = vadd.xlane.f32.xlu0 %v2899
    %v2901 = vpop.xlane.xlu0 %2900
    %v2902 = vmul.f32 %v2898, %v41
    %v2903 = vmul.f32 %v2901, %v41
    %v2904 = vadd.f32 %v2902, 1e-12
    %v2905 = vadd.f32 %v2903, 1e-12
    %v2906 = vrsqrt.pop %v2904
    %v2907 = vrsqrt.pop %v2905
    %v2908 = vmul.f32 %v2892, %v2906
    %v2909 = vmul.f32 %v2893, %v2907
    %v2910 = vlaneseq
    %v2911 = vshrl.u32 %v2910, 7
    %v2912 = vsub.s32 6, %v2911
    %v2913 = vrot.slane %v1520, %v2912
    %v2914 = vmul.f32 %v2908, %v2913
    %v2915 = vmul.f32 %v2909, %v2913
    %v2916 = vlaneseq
    %v2917 = vshrl.u32 %v2916, 7
    %v2918 = vsub.s32 7, %v2917
    %v2919 = vrot.slane %v1520, %v2918
    %v2920 = vadd.f32 %v2914, %v2919
    %v2921 = vadd.f32 %v2915, %v2919
    %2922 = vst.msk [vmem:[#allocation2] sm:$0xff] %vm34, %v2920
    %2923 = vst.msk [vmem:[#allocation2 + $0x8] sm:$0xff] %vm34, %v2921
    %v2925 = vrot.slane %v2921, 7
    %vm2927 = vcmask 1040384
    %v2928 = vsel %vm2927, %v2920, %v2925
    %v2929 = vpack.c.bf16 %v2928, %v2928
    %v2930 = vld [vmem:[%s6] sm:$0xf]
    %v2931 = vld [vmem:[%s6 + $0x4] sm:$0xf]
    %v2932 = vld [vmem:[%s6 + $0x8] sm:$0xf]
    %v2933 = vld [vmem:[%s6 + $0xc] sm:$0xf]
    %v2934 = vlaneseq
    %v2935 = vshrl.u32 %v2934, 7
    %v2936 = vsub.s32 2, %v2935
    %v2937 = vrot.slane %v31, %v2936
    %v2942 = vunpack.c.l.b16 %v2930
    %v2943 = vunpack.c.l.b16 %v2931
    %v2944 = vunpack.c.l.b16 %v2932
    %v2945 = vunpack.c.l.b16 %v2933
    %v2946 = vpack.c.b16 %v2943, %v2942
    %v2947 = vpack.c.b16 %v2945, %v2944
    %v2951 = vsel %vm34, %v2929, 0
    %2953 = vmatprep.subr.bf16.mxu0 0
    %2954 = vmatpush1.bf16.msra.mxu0 %v2946
    %2955 = vmatprep.subr.bf16.mxu0 0
    %2956 = vmatpush1.bf16.msra.mxu0 %v2947
    %2957 = vmatprep.subr.bf16.mxu0 0
    %2958 = vmatpush1.bf16.msra.mxu0 0
    %2959 = vmatprep.subr.bf16.mxu0 0
    %2960 = vmatpush1.bf16.msra.mxu0 0
    %2961 = vmatprep.subr.bf16.mxu0 0
    %2962 = vmatpush1.bf16.msra.mxu0 0
    %2963 = vmatprep.subr.bf16.mxu0 0
    %2964 = vmatpush1.bf16.msra.mxu0 0
    %2965 = vmatprep.subr.bf16.mxu0 0
    %2966 = vmatpush1.bf16.msra.mxu0 0
    %2967 = vmatprep.subr.bf16.mxu0 0
    %2968 = vmatpush1.bf16.msra.mxu0 0
    %2969 = vmatprep.subr.bf16.mxu0 0
    %2970 = vmatpush1.bf16.msra.mxu0 0
    %2971 = vmatprep.subr.bf16.mxu0 0
    %2972 = vmatpush1.bf16.msra.mxu0 0
    %2973 = vmatprep.subr.bf16.mxu0 0
    %2974 = vmatpush1.bf16.msra.mxu0 0
    %2975 = vmatprep.subr.bf16.mxu0 0
    %2976 = vmatpush1.bf16.msra.mxu0 0
    %2977 = vmatprep.subr.bf16.mxu0 0
    %2978 = vmatpush1.bf16.msra.mxu0 0
    %2979 = vmatprep.subr.bf16.mxu0 0
    %2980 = vmatpush1.bf16.msra.mxu0 0
    %2981 = vmatprep.subr.bf16.mxu0 0
    %2982 = vmatpush1.bf16.msra.mxu0 0
    %2983 = vmatprep.subr.bf16.mxu0 0
    %2984 = vmatpush1.bf16.msra.mxu0 0
    %2985 = vmatprep.mubr.bf16.mxu0 0
    %2986 = vmatmul.mubr.bf16.gmra.mrb[0].mxu0 %v2951
    %v2987 = vpop.f32.mrb[0].mxu0
    %v2988 = vadd.f32 %v2937, %v2987
    %v2989 = vpop.f32.mrb[0].mxu0
    %v2990 = vpop.f32.mrb[0].mxu0
    %v2991 = vpop.f32.mrb[0].mxu0
    %2992 = vdwg.mxu0
    %v2993 = vtanh.pop %v2988
    %vm2994 = vcmask 254976
    %2995 = vst.msk [vmem:[#allocation4] sm:$0x3] %vm2994, %v2993
    // Predicated region
    $region30: #{bert_encoder_forward.1} parent=1 // pred_check
      _
    $region31: #{bert_encoder_forward.1} parent=1 // pred_check_branch
      %2997 = sbr.rel (0) target = $region33
    $region32: #{bert_encoder_forward.1} parent=1 // pred_region
      %s2999 = ssub.s32 256, 256
      %3000 = vsyncadd [#allocation3], %s2999
      %s3001 = sshll.u32 [#allocation2], 4
      %s3002 = int_to_ptr.vmem [resolvable:$true] %s3001
      %3007 = dma.vmem_to_hbm [thread:$0]  %s3002, 256, %s7, [#allocation3], 128, 128, 8
    $region33: #{bert_encoder_forward.1} parent=1 // pred_fallthru
      _
    // Predicated region
    $region34: #{bert_encoder_forward.1} parent=1 // pred_check
      _
    $region35: #{bert_encoder_forward.1} parent=1 // pred_check_branch
      %3009 = sbr.rel (0) target = $region37
    $region36: #{bert_encoder_forward.1} parent=1 // pred_region
      %s3011 = ssub.s32 32, 32
      %3012 = vsyncadd [#allocation5], %s3011
      %s3014 = sshll.u32 [#allocation4], 4
      %s3015 = int_to_ptr.vmem [resolvable:$true] %s3014
      %3017 = dma.vmem_to_hbm [thread:$0]  %s3015, 32, %s8, [#allocation5]
    $region37: #{bert_encoder_forward.1} parent=1 // pred_fallthru
      _
    // Predicated region
    $region38: #{bert_encoder_forward.1} parent=1 // pred_check
      _
    $region39: #{bert_encoder_forward.1} parent=1 // pred_check_branch
      %3019 = sbr.rel (0) target = $region41
    $region40: #{bert_encoder_forward.1} parent=1 // pred_region
      %3020 = dma.done [#allocation3], 256
    $region41: #{bert_encoder_forward.1} parent=1 // pred_fallthru
      _
    // Predicated region
    $region42: #{bert_encoder_forward.1} parent=1 // pred_check
      _
    $region43: #{bert_encoder_forward.1} parent=1 // pred_check_branch
      %3022 = sbr.rel (0) target = $region45
    $region44: #{bert_encoder_forward.1} parent=1 // pred_region
      %3023 = dma.done [#allocation5], 32
    $region45: #{bert_encoder_forward.1} parent=1 // pred_fallthru
      _
    %3024 = vsyncpa [#allocation3], 1
    %3025 = vsyncpa [#allocation5], 1

</llo_original>
